<compile_context>
chip_gen: v7x
topology: tpu7x:2x2x1
jax: 0.10.0
libtpu: 0.0.40
codegen_flags: <defaults>
</compile_context>

<pallas_src>
import functools

import jax
import jax.numpy as jnp
from jax.experimental import pallas as pl
from jax.experimental.pallas import tpu as pltpu


def _round_up(x, m):
    return (x + m - 1) // m * m


# --------------------------- fused DoubleConv kernel -------------------------
#
# Flat-tap addressing: with the padded image flattened to rows of length S,
# the tap (kh, kw) needed for "extended" output row m (m = h*S + w; the S - W
# extra columns per row are junk and masked to zero) lives at flat row
# m + kh*S + kw -- a constant offset per tap.  Every tap is therefore just a
# contiguous row-slice of the same VMEM buffer, and the 9 slices concatenated
# along K give a single im2col matmul per conv.

def _double_conv_kernel(x_ref, w1_ref, s1_ref, b1_ref, w2_ref, s2_ref, b2_ref,
                        mask_ref, o_ref, y_ref, *, row_stride):
    """Fused (3x3 conv pad=1 no-bias -> ReLU -> BN affine) x 2, one image.

    x_ref:    (1, L, cin)    bf16  conv1 input, zero-padded + flattened
    w1_ref:   (9*cin, c1)    bf16  conv1 weights, taps folded into K
    s1_ref:   (1, c1)        f32   BN1 scale = gamma / sqrt(var + eps)
    b1_ref:   (1, c1)        f32   BN1 shift = beta - mean * scale
    w2_ref:   (9*c1, TC)     bf16  conv2 weights (TC-wide cout tile)
    s2_ref:   (1, TC)        f32   BN2 scale (zero on padded channels)
    b2_ref:   (1, TC)        f32   BN2 shift (zero on padded channels)
    mask_ref: (m_ext, 1)     f32   1.0 on real columns, 0.0 on junk columns
    o_ref:    (1, m_ext, TC) f32   extended output rows
    y_ref:    (L, c1)        f32   VMEM scratch: conv2's padded flat input
    """
    S = row_stride
    m_ext = o_ref.shape[1]

    def conv3x3(flat_f32, w_ref):
        # im2col-in-VMEM: 9 shifted slices concatenated along K, one MXU dot,
        # one bf16 downcast of the LHS (not one per tap).
        taps = [flat_f32[kh * S + kw: kh * S + kw + m_ext, :]
                for kh in range(3) for kw in range(3)]
        lhs = jnp.concatenate(taps, axis=1).astype(jnp.bfloat16)
        return jnp.dot(lhs, w_ref[...], preferred_element_type=jnp.float32)

    # ---- conv1 -> ReLU -> BN1 (order 'crb'); junk columns zeroed so they
    #      double as conv2's zero padding. ----
    xf = x_ref[0].astype(jnp.float32)                # single upcast of bf16 in
    h = conv3x3(xf, w1_ref)
    h = (jnp.maximum(h, 0.0) * s1_ref[...] + b1_ref[...]) * mask_ref[...]

    # ---- stage as conv2's zero-padded flattened input (VMEM only) ----
    y_ref[...] = jnp.zeros(y_ref.shape, y_ref.dtype)  # zero halo + guard rows
    y_ref[S + 1: S + 1 + m_ext, :] = h

    # ---- conv2 -> ReLU -> BN2 ----
    z = conv3x3(y_ref[...], w2_ref)
    z = jnp.maximum(z, 0.0) * s2_ref[...] + b2_ref[...]
    o_ref[0] = z.astype(o_ref.dtype)


def double_conv_nhwc(x, w1, bn1, w2, bn2, *, eps=1e-5):
    """Fused DoubleConv_2d (encoder path, order='crb', inference-mode BN).

    x:  (N, H, W, cin) f32, channels-last (already pooled).
    w1: (3, 3, cin, c1)   w2: (3, 3, c1, cout)   (HWIO)
    Returns (N, H, W, cout) f32.
    """
    N, H, W, cin = x.shape
    assert w1.shape[:3] == (3, 3, cin)
    c1 = w1.shape[-1]
    assert w2.shape[:3] == (3, 3, c1)
    cout = w2.shape[-1]

    # Lane-dense output tiling; 256-wide cout tiles when they divide evenly
    # (256-wide MXU on v6e/v7x), else 128.  Padded channels are exactly zero.
    cout_pad = _round_up(cout, 128)
    tc = 256 if cout_pad % 256 == 0 else 128   # TODO(synk): keep 128 on v5e
    n_ct = cout_pad // tc

    # Row stride rounded to a sublane multiple: kh*S tap offsets are aligned
    # and m_ext is always divisible by 8.  Extra columns are zero and masked.
    S = _round_up(W + 2, 8)
    m_ext = H * S                         # extended rows (S - W junk cols/row)
    L = _round_up((H + 2) * S + 2, 8)     # +2 guard: last tap stays in bounds

    # ---- activation prep: one fused pad + flatten + bf16 cast pass ----
    xp = jnp.pad(x, ((0, 0), (1, 1), (1, S - W - 1), (0, 0)))
    xflat = jnp.pad(xp.reshape(N, (H + 2) * S, cin),
                    ((0, 0), (0, L - (H + 2) * S), (0, 0))).astype(jnp.bfloat16)

    # ---- parameter prep (tiny, once per call) ----
    w1f = w1.reshape(9 * cin, c1).astype(jnp.bfloat16)
    w2f = jnp.zeros((9 * c1, cout_pad), jnp.float32)
    w2f = w2f.at[:, :cout].set(w2.reshape(9 * c1, cout).astype(jnp.float32))
    w2f = w2f.astype(jnp.bfloat16)

    def bn_affine(bn, c, c_pad):
        sc = (bn["gamma"] / jnp.sqrt(bn["var"] + eps)).astype(jnp.float32)
        sh = (bn["beta"] - bn["mean"] * sc).astype(jnp.float32)
        scale = jnp.zeros((1, c_pad), jnp.float32).at[0, :c].set(sc)
        shift = jnp.zeros((1, c_pad), jnp.float32).at[0, :c].set(sh)
        return scale, shift

    s1, b1 = bn_affine(bn1, c1, c1)
    s2, b2 = bn_affine(bn2, cout, cout_pad)

    # Junk-column mask: 1.0 where (m mod S) < W (real output columns).
    mask = ((jnp.arange(m_ext, dtype=jnp.int32) % S) < W)
    mask = mask.astype(jnp.float32).reshape(m_ext, 1)

    # ---- VMEM budget (generation-aware cap) and cost estimate ----
    x_bytes = L * cin * 2
    w_bytes = 9 * cin * c1 * 2 + 9 * c1 * tc * 2
    o_bytes = m_ext * tc * 4
    y_bytes = L * c1 * 4
    tmp_bytes = m_ext * (9 * cin * 6 + 9 * c1 * 6 + c1 * 4 + tc * 4)
    est = 2 * (x_bytes + w_bytes + o_bytes + 4 * tc * 4 + m_ext * 4) \
        + y_bytes + tmp_bytes
    try:
        vmem_cap = pltpu.get_tpu_info().vmem_capacity_bytes
    except Exception:                      # pragma: no cover
        vmem_cap = 64 << 20                # v7x floor
    vmem_limit = int(min(max(est + (4 << 20), 16 << 20), int(0.75 * vmem_cap)))

    flops = 2 * N * n_ct * m_ext * 9 * (cin * c1 + c1 * tc)
    bytes_accessed = int(N * x_bytes + w_bytes + N * n_ct * o_bytes
                         + m_ext * 4 + 4 * (c1 + cout_pad) * 4)

    out = pl.pallas_call(
        functools.partial(_double_conv_kernel, row_stride=S),
        out_shape=jax.ShapeDtypeStruct((N, m_ext, cout_pad), jnp.float32),
        grid=(N, n_ct),
        in_specs=[
            pl.BlockSpec((1, L, cin), lambda n, j: (n, 0, 0)),
            pl.BlockSpec((9 * cin, c1), lambda n, j: (0, 0)),
            pl.BlockSpec((1, c1), lambda n, j: (0, 0)),
            pl.BlockSpec((1, c1), lambda n, j: (0, 0)),
            pl.BlockSpec((9 * c1, tc), lambda n, j: (0, j)),
            pl.BlockSpec((1, tc), lambda n, j: (0, j)),
            pl.BlockSpec((1, tc), lambda n, j: (0, j)),
            pl.BlockSpec((m_ext, 1), lambda n, j: (0, 0)),
        ],
        out_specs=pl.BlockSpec((1, m_ext, tc), lambda n, j: (n, 0, j)),
        scratch_shapes=[pltpu.VMEM((L, c1), jnp.float32)],
        compiler_params=pltpu.CompilerParams(
            dimension_semantics=("parallel", "parallel"),
            vmem_limit_bytes=vmem_limit),
        cost_estimate=pl.CostEstimate(
            flops=flops, transcendentals=0, bytes_accessed=bytes_accessed),
    )(xflat, w1f, s1, b1, w2f, s2, b2, mask)

    # Single output glue pass: drop junk columns + padded channels; XLA fuses
    # this with the caller's NCHW transpose.
    return out.reshape(N, H, S, cout_pad)[:, :, :W, :cout]


# ------------------------------ Encoder_2d ----------------------------------

def _pool2x2_nhwc(x, pool_type="max"):
    """MaxPool2d/AvgPool2d(kernel=2, stride=2) — cheap bandwidth-bound glue."""
    N, H, W, C = x.shape
    h2, w2 = H // 2, W // 2
    xr = x[:, :h2 * 2, :w2 * 2, :].reshape(N, h2, 2, w2, 2, C)
    return xr.max(axis=(2, 4)) if pool_type == "max" else xr.mean(axis=(2, 4))


def init_encoder_params(key, in_channels, out_channels):
    """DoubleConv_2d(encoder=True, order='crb'): conv(bias=False)+ReLU+BN x2."""
    c1_in = in_channels
    c1_out = out_channels // 2
    if c1_out < in_channels:
        c1_out = in_channels
    c2_in, c2_out = c1_out, out_channels

    k1, k2, k3, k4 = jax.random.split(key, 4)

    def bn_params(c, k):
        kg, kb, km, kv = jax.random.split(k, 4)
        return {
            "gamma": 1.0 + 0.1 * jax.random.normal(kg, (c,), jnp.float32),
            "beta": 0.1 * jax.random.normal(kb, (c,), jnp.float32),
            "mean": 0.1 * jax.random.normal(km, (c,), jnp.float32),
            "var": jnp.abs(1.0 + 0.1 * jax.random.normal(kv, (c,), jnp.float32)),
        }

    return {
        "w1": 0.1 * jax.random.normal(k1, (3, 3, c1_in, c1_out), jnp.float32),
        "bn1": bn_params(c1_out, k2),
        "w2": 0.1 * jax.random.normal(k3, (3, 3, c2_in, c2_out), jnp.float32),
        "bn2": bn_params(c2_out, k4),
    }


def encoder2d_forward_nhwc(params, x, *, apply_pooling=True, pool_type="max"):
    """Channels-last core: pool(2,2) -> fused (conv3x3 + ReLU + BN) x 2."""
    if apply_pooling:
        x = _pool2x2_nhwc(x, pool_type)
    return double_conv_nhwc(x, params["w1"], params["bn1"],
                            params["w2"], params["bn2"])


def encoder2d_forward(params, x_nchw, *, apply_pooling=True, pool_type="max"):
    """PyTorch-convention wrapper: NCHW in / NCHW out; one transpose pair at
    the module boundary (keep a full model channels-last to drop it)."""
    x = jnp.transpose(x_nchw, (0, 2, 3, 1))
    y = encoder2d_forward_nhwc(params, x, apply_pooling=apply_pooling,
                               pool_type=pool_type)
    return jnp.transpose(y, (0, 3, 1, 2))


# ------------------------- pure-JAX reference (f32) -------------------------

def _encoder2d_reference(params, x_nchw, *, eps=1e-5, pool_type="max"):
    x = jnp.transpose(x_nchw, (0, 2, 3, 1))
    x = _pool2x2_nhwc(x, pool_type)

    def single(x, w, bn):
        y = jax.lax.conv_general_dilated(
            x, w, window_strides=(1, 1), padding="SAME",
            dimension_numbers=("NHWC", "HWIO", "NHWC"))
        y = jnp.maximum(y, 0.0)
        sc = bn["gamma"] / jnp.sqrt(bn["var"] + eps)
        return y * sc + (bn["beta"] - bn["mean"] * sc)

    x = single(x, params["w1"], params["bn1"])
    x = single(x, params["w2"], params["bn2"])
    return jnp.transpose(x, (0, 3, 1, 2))


# ---------------------------------- main -------------------------------------

if __name__ == "__main__":
    key = jax.random.PRNGKey(0)
    kx, kp = jax.random.split(key)

    N, in_channels, H, W = 2, 8, 32, 32
    out_channels = 32                       # conv1: 8 -> 16, conv2: 16 -> 32

    x = jax.random.normal(kx, (N, in_channels, H, W), jnp.float32)
    params = init_encoder_params(kp, in_channels, out_channels)

    out = jax.jit(encoder2d_forward)(params, x)
    out = jax.block_until_ready(out)

    assert out.shape == (N, out_channels, H // 2, W // 2), out.shape
    assert bool(jnp.all(jnp.isfinite(out)))

    # bf16 MXU operands give a small, bounded deviation vs the f32 reference.
    ref = jax.block_until_ready(jax.jit(_encoder2d_reference)(params, x))
    err = float(jnp.max(jnp.abs(out - ref)))
    assert err < 1e-1, f"max abs err vs reference = {err}"

    print("KERNEL_OK")
</pallas_src>

<mosaic_0001>
module attributes {stable_mosaic.version = 11 : i64} {
  func.func @_double_conv_kernel(%arg0: i32, %arg1: i32, %arg2: memref<1x440x8xbf16, #tpu.memory_space<vmem>>, %arg3: memref<72x16xbf16, #tpu.memory_space<vmem>>, %arg4: memref<1x16xf32, #tpu.memory_space<vmem>>, %arg5: memref<1x16xf32, #tpu.memory_space<vmem>>, %arg6: memref<144x128xbf16, #tpu.memory_space<vmem>>, %arg7: memref<1x128xf32, #tpu.memory_space<vmem>>, %arg8: memref<1x128xf32, #tpu.memory_space<vmem>>, %arg9: memref<384x1xf32, #tpu.memory_space<vmem>>, %arg10: memref<1x384x128xf32, #tpu.memory_space<vmem>>, %arg11: memref<440x16xf32, #tpu.memory_space<vmem>>) attributes {dimension_semantics = [#tpu.dimension_semantics<parallel>, #tpu.dimension_semantics<parallel>], iteration_bounds = array<i64: 2, 1>, scalar_prefetch = 0 : i64, scratch_operands = 1 : i64, tpu.core_type = #tpu.core_type<tc>, window_params = [{transform_indices = @transform_0, window_bounds = array<i64: 1, 440, 8>}, {pipeline_mode = #tpu.pipeline_mode<synchronous>, transform_indices = @transform_1, window_bounds = array<i64: 72, 16>}, {pipeline_mode = #tpu.pipeline_mode<synchronous>, transform_indices = @transform_2, window_bounds = array<i64: 1, 16>}, {pipeline_mode = #tpu.pipeline_mode<synchronous>, transform_indices = @transform_3, window_bounds = array<i64: 1, 16>}, {transform_indices = @transform_4, window_bounds = array<i64: 144, 128>}, {transform_indices = @transform_5, window_bounds = array<i64: 1, 128>}, {transform_indices = @transform_6, window_bounds = array<i64: 1, 128>}, {pipeline_mode = #tpu.pipeline_mode<synchronous>, transform_indices = @transform_7, window_bounds = array<i64: 384, 1>}, {transform_indices = @transform_8, window_bounds = array<i64: 1, 384, 128>}]} {
    %c0 = arith.constant 0 : index
    %c0_0 = arith.constant 0 : index
    %c0_1 = arith.constant 0 : index
    %0 = vector.load %arg2[%c0, %c0_0, %c0_1] : memref<1x440x8xbf16, #tpu.memory_space<vmem>>, vector<1x440x8xbf16>
    %1 = vector.shape_cast %0 : vector<1x440x8xbf16> to vector<440x8xbf16>
    %2 = arith.extf %1 : vector<440x8xbf16> to vector<440x8xf32>
    %3 = vector.extract_strided_slice %2 {offsets = [0, 0], sizes = [384, 8], strides = [1, 1]} : vector<440x8xf32> to vector<384x8xf32>
    %4 = vector.extract_strided_slice %2 {offsets = [1, 0], sizes = [384, 8], strides = [1, 1]} : vector<440x8xf32> to vector<384x8xf32>
    %5 = vector.extract_strided_slice %2 {offsets = [2, 0], sizes = [384, 8], strides = [1, 1]} : vector<440x8xf32> to vector<384x8xf32>
    %6 = vector.extract_strided_slice %2 {offsets = [24, 0], sizes = [384, 8], strides = [1, 1]} : vector<440x8xf32> to vector<384x8xf32>
    %7 = vector.extract_strided_slice %2 {offsets = [25, 0], sizes = [384, 8], strides = [1, 1]} : vector<440x8xf32> to vector<384x8xf32>
    %8 = vector.extract_strided_slice %2 {offsets = [26, 0], sizes = [384, 8], strides = [1, 1]} : vector<440x8xf32> to vector<384x8xf32>
    %9 = vector.extract_strided_slice %2 {offsets = [48, 0], sizes = [384, 8], strides = [1, 1]} : vector<440x8xf32> to vector<384x8xf32>
    %10 = vector.extract_strided_slice %2 {offsets = [49, 0], sizes = [384, 8], strides = [1, 1]} : vector<440x8xf32> to vector<384x8xf32>
    %11 = vector.extract_strided_slice %2 {offsets = [50, 0], sizes = [384, 8], strides = [1, 1]} : vector<440x8xf32> to vector<384x8xf32>
    %12 = tpu.concatenate %3, %4, %5, %6, %7, %8, %9, %10, %11 in 1 : vector<384x8xf32>, vector<384x8xf32>, vector<384x8xf32>, vector<384x8xf32>, vector<384x8xf32>, vector<384x8xf32>, vector<384x8xf32>, vector<384x8xf32>, vector<384x8xf32> -> vector<384x72xf32>
    %13 = arith.truncf %12 : vector<384x72xf32> to vector<384x72xbf16>
    %c0_2 = arith.constant 0 : index
    %c0_3 = arith.constant 0 : index
    %14 = vector.load %arg3[%c0_2, %c0_3] : memref<72x16xbf16, #tpu.memory_space<vmem>>, vector<72x16xbf16>
    %cst = arith.constant dense<0.000000e+00> : vector<384x16xf32>
    %15 = tpu.matmul %13, %14, %cst {dimension_numbers = #tpu.dot_dimension_numbers<[1], [0], [0], [1], [0, 0, 1, 1], [], []>} : vector<384x72xbf16>, vector<72x16xbf16>, vector<384x16xf32> -> vector<384x16xf32>
    %cst_4 = arith.constant 0.000000e+00 : f32
    %16 = vector.broadcast %cst_4 : f32 to vector<384x16xf32>
    %17 = arith.maximumf %15, %16 : vector<384x16xf32>
    %c0_5 = arith.constant 0 : index
    %c0_6 = arith.constant 0 : index
    %18 = vector.load %arg4[%c0_5, %c0_6] : memref<1x16xf32, #tpu.memory_space<vmem>>, vector<1x16xf32>
    %19 = vector.broadcast %18 : vector<1x16xf32> to vector<384x16xf32>
    %20 = arith.mulf %17, %19 : vector<384x16xf32>
    %c0_7 = arith.constant 0 : index
    %c0_8 = arith.constant 0 : index
    %21 = vector.load %arg5[%c0_7, %c0_8] : memref<1x16xf32, #tpu.memory_space<vmem>>, vector<1x16xf32>
    %22 = vector.broadcast %21 : vector<1x16xf32> to vector<384x16xf32>
    %23 = arith.addf %20, %22 : vector<384x16xf32>
    %c0_9 = arith.constant 0 : index
    %c0_10 = arith.constant 0 : index
    %24 = vector.load %arg9[%c0_9, %c0_10] : memref<384x1xf32, #tpu.memory_space<vmem>>, vector<384x1xf32>
    %25 = vector.broadcast %24 : vector<384x1xf32> to vector<384x16xf32>
    %26 = arith.mulf %23, %25 : vector<384x16xf32>
    %cst_11 = arith.constant 0.000000e+00 : f32
    %27 = vector.broadcast %cst_11 : f32 to vector<440x16xf32>
    %c0_12 = arith.constant 0 : index
    %c0_13 = arith.constant 0 : index
    %28 = vector.load %arg11[%c0_12, %c0_13] : memref<440x16xf32, #tpu.memory_space<vmem>>, vector<440x16xf32>
    tpu.vector_store %arg11[%c0_12, %c0_13], %27 {strides = array<i32>} : memref<440x16xf32, #tpu.memory_space<vmem>>, vector<440x16xf32>,
    %c25 = arith.constant 25 : index
    %c0_14 = arith.constant 0 : index
    %29 = vector.load %arg11[%c25, %c0_14] : memref<440x16xf32, #tpu.memory_space<vmem>>, vector<384x16xf32>
    tpu.vector_store %arg11[%c25, %c0_14], %26 {strides = array<i32>} : memref<440x16xf32, #tpu.memory_space<vmem>>, vector<384x16xf32>,
    %c0_15 = arith.constant 0 : index
    %c0_16 = arith.constant 0 : index
    %30 = vector.load %arg11[%c0_15, %c0_16] : memref<440x16xf32, #tpu.memory_space<vmem>>, vector<440x16xf32>
    %31 = vector.extract_strided_slice %30 {offsets = [0, 0], sizes = [384, 16], strides = [1, 1]} : vector<440x16xf32> to vector<384x16xf32>
    %32 = vector.extract_strided_slice %30 {offsets = [1, 0], sizes = [384, 16], strides = [1, 1]} : vector<440x16xf32> to vector<384x16xf32>
    %33 = vector.extract_strided_slice %30 {offsets = [2, 0], sizes = [384, 16], strides = [1, 1]} : vector<440x16xf32> to vector<384x16xf32>
    %34 = vector.extract_strided_slice %30 {offsets = [24, 0], sizes = [384, 16], strides = [1, 1]} : vector<440x16xf32> to vector<384x16xf32>
    %35 = vector.extract_strided_slice %30 {offsets = [25, 0], sizes = [384, 16], strides = [1, 1]} : vector<440x16xf32> to vector<384x16xf32>
    %36 = vector.extract_strided_slice %30 {offsets = [26, 0], sizes = [384, 16], strides = [1, 1]} : vector<440x16xf32> to vector<384x16xf32>
    %37 = vector.extract_strided_slice %30 {offsets = [48, 0], sizes = [384, 16], strides = [1, 1]} : vector<440x16xf32> to vector<384x16xf32>
    %38 = vector.extract_strided_slice %30 {offsets = [49, 0], sizes = [384, 16], strides = [1, 1]} : vector<440x16xf32> to vector<384x16xf32>
    %39 = vector.extract_strided_slice %30 {offsets = [50, 0], sizes = [384, 16], strides = [1, 1]} : vector<440x16xf32> to vector<384x16xf32>
    %40 = tpu.concatenate %31, %32, %33, %34, %35, %36, %37, %38, %39 in 1 : vector<384x16xf32>, vector<384x16xf32>, vector<384x16xf32>, vector<384x16xf32>, vector<384x16xf32>, vector<384x16xf32>, vector<384x16xf32>, vector<384x16xf32>, vector<384x16xf32> -> vector<384x144xf32>
    %41 = arith.truncf %40 : vector<384x144xf32> to vector<384x144xbf16>
    %c0_17 = arith.constant 0 : index
    %c0_18 = arith.constant 0 : index
    %42 = vector.load %arg6[%c0_17, %c0_18] : memref<144x128xbf16, #tpu.memory_space<vmem>>, vector<144x128xbf16>
    %cst_19 = arith.constant dense<0.000000e+00> : vector<384x128xf32>
    %43 = tpu.matmul %41, %42, %cst_19 {dimension_numbers = #tpu.dot_dimension_numbers<[1], [0], [0], [1], [0, 0, 1, 1], [], []>} : vector<384x144xbf16>, vector<144x128xbf16>, vector<384x128xf32> -> vector<384x128xf32>
    %cst_20 = arith.constant 0.000000e+00 : f32
    %44 = vector.broadcast %cst_20 : f32 to vector<384x128xf32>
    %45 = arith.maximumf %43, %44 : vector<384x128xf32>
    %c0_21 = arith.constant 0 : index
    %c0_22 = arith.constant 0 : index
    %46 = vector.load %arg7[%c0_21, %c0_22] : memref<1x128xf32, #tpu.memory_space<vmem>>, vector<1x128xf32>
    %47 = vector.broadcast %46 : vector<1x128xf32> to vector<384x128xf32>
    %48 = arith.mulf %45, %47 : vector<384x128xf32>
    %c0_23 = arith.constant 0 : index
    %c0_24 = arith.constant 0 : index
    %49 = vector.load %arg8[%c0_23, %c0_24] : memref<1x128xf32, #tpu.memory_space<vmem>>, vector<1x128xf32>
    %50 = vector.broadcast %49 : vector<1x128xf32> to vector<384x128xf32>
    %51 = arith.addf %48, %50 : vector<384x128xf32>
    %c0_25 = arith.constant 0 : index
    %c0_26 = arith.constant 0 : index
    %c0_27 = arith.constant 0 : index
    %52 = vector.load %arg10[%c0_25, %c0_26, %c0_27] : memref<1x384x128xf32, #tpu.memory_space<vmem>>, vector<1x384x128xf32>
    %53 = vector.shape_cast %52 : vector<1x384x128xf32> to vector<384x128xf32>
    %54 = vector.shape_cast %51 : vector<384x128xf32> to vector<1x384x128xf32>
    tpu.vector_store %arg10[%c0_25, %c0_26, %c0_27], %54 {strides = array<i32>} : memref<1x384x128xf32, #tpu.memory_space<vmem>>, vector<1x384x128xf32>,
    return
  }
  func.func @transform_0(%arg0: i32, %arg1: i32) -> (i32, i32, i32) {
    %c0_i32 = arith.constant 0 : i32
    %c0_i32_0 = arith.constant 0 : i32
    %c0_i32_1 = arith.constant 0 : i32
    return %arg0, %c0_i32, %c0_i32_0 : i32, i32, i32
  }
  func.func @transform_1(%arg0: i32, %arg1: i32) -> (i32, i32) {
    %c0_i32 = arith.constant 0 : i32
    %c0_i32_0 = arith.constant 0 : i32
    %c0_i32_1 = arith.constant 0 : i32
    return %c0_i32, %c0_i32_0 : i32, i32
  }
  func.func @transform_2(%arg0: i32, %arg1: i32) -> (i32, i32) {
    %c0_i32 = arith.constant 0 : i32
    %c0_i32_0 = arith.constant 0 : i32
    %c0_i32_1 = arith.constant 0 : i32
    return %c0_i32, %c0_i32_0 : i32, i32
  }
  func.func @transform_3(%arg0: i32, %arg1: i32) -> (i32, i32) {
    %c0_i32 = arith.constant 0 : i32
    %c0_i32_0 = arith.constant 0 : i32
    %c0_i32_1 = arith.constant 0 : i32
    return %c0_i32, %c0_i32_0 : i32, i32
  }
  func.func @transform_4(%arg0: i32, %arg1: i32) -> (i32, i32) {
    %c0_i32 = arith.constant 0 : i32
    %c0_i32_0 = arith.constant 0 : i32
    return %c0_i32, %arg1 : i32, i32
  }
  func.func @transform_5(%arg0: i32, %arg1: i32) -> (i32, i32) {
    %c0_i32 = arith.constant 0 : i32
    %c0_i32_0 = arith.constant 0 : i32
    return %c0_i32, %arg1 : i32, i32
  }
  func.func @transform_6(%arg0: i32, %arg1: i32) -> (i32, i32) {
    %c0_i32 = arith.constant 0 : i32
    %c0_i32_0 = arith.constant 0 : i32
    return %c0_i32, %arg1 : i32, i32
  }
  func.func @transform_7(%arg0: i32, %arg1: i32) -> (i32, i32) {
    %c0_i32 = arith.constant 0 : i32
    %c0_i32_0 = arith.constant 0 : i32
    %c0_i32_1 = arith.constant 0 : i32
    return %c0_i32, %c0_i32_0 : i32, i32
  }
  func.func @transform_8(%arg0: i32, %arg1: i32) -> (i32, i32, i32) {
    %c0_i32 = arith.constant 0 : i32
    %c0_i32_0 = arith.constant 0 : i32
    return %arg0, %c0_i32, %arg1 : i32, i32, i32
  }
}

</mosaic_0001>

<llo_original>
// kernel: encoder2d_forward.1
$region0: #{encoder2d_forward.1}
  #allocation0 [shape = 'u32[]', space=smem, size = 0x4, offset = 0x4, fixed_abs, tag = 'smem constant byte address 0x4 - core index']
  #allocation1 [shape = 'u32[144,128]{1,0:T(1,128)}', space=vmem, size = 0x12000, scoped, tag = 'internal scratch']
  #allocation2 [shape = 'f32[440,16]{1,0:T(8,128)}', space=vmem, size = 0x37000, scoped, tag = 'scratch operand']
  %s0 = inlined_call_operand.vmem [shape: bf16[2,440,8], index: 0, kind: input, shape index: {}]
  %s1 = inlined_call_operand.vmem [shape: bf16[72,16], index: 1, kind: input, shape index: {}]
  %s2 = inlined_call_operand.vmem [shape: f32[1,16], index: 2, kind: input, shape index: {}]
  %s3 = inlined_call_operand.vmem [shape: f32[1,16], index: 3, kind: input, shape index: {}]
  %s4 = inlined_call_operand.vmem [shape: bf16[144,128], index: 4, kind: input, shape index: {}]
  %s5 = inlined_call_operand.vmem [shape: f32[1,128], index: 5, kind: input, shape index: {}]
  %s6 = inlined_call_operand.vmem [shape: f32[1,128], index: 6, kind: input, shape index: {}]
  %s7 = inlined_call_operand.vmem [shape: f32[384,1], index: 7, kind: input, shape index: {}]
  %s8 = inlined_call_operand.vmem [shape: f32[2,384,128], index: 8, kind: output, shape index: {}]
  %s9 = sld [smem:[#allocation0]]
  $region65: #{encoder2d_forward.1} parent=0
    _
  %s11 = ssub.s32 1, %s9
  %s12 = scalar_select 0, %s11, %s9
  loop: start=0, step=1, limit=4
  $region2: #{encoder2d_forward.1} parent=0 // loop_pre_header
    _
  $region3: #{encoder2d_forward.1} parent=0 // loop_header
    %s14 = sphi 0, %s18
    %p15 = scmp.ge.s32.totalorder %s14, 4
    %s21 = sphi 0, %s33
    %s22 = sphi 0, %s29
    %s23 = sphi 0, %s21
    %s24 = sphi 0, %s22
    %s25 = sphi 0, %s23
    %s26 = sphi 0, %s24
    %s36 = sphi 0, %s38
    %s39 = sphi 0, %s36
    %s40 = sphi 0, %s39
    %s56 = sphi 0, %s40
    %s60 = sphi 0, %s60
    %s62 = sphi 0, %s60
    %s63 = sphi 0, %s62
    %s77 = sphi 0, %s63
    %s81 = sphi 0, %s81
    %s83 = sphi 0, %s81
    %s84 = sphi 0, %s83
    %s98 = sphi 0, %s84
    %s102 = sphi 0, %s102
    %s104 = sphi 0, %s102
    %s105 = sphi 0, %s104
    %s119 = sphi 0, %s105
    %s125 = sphi 0, %s127
    %s128 = sphi 0, %s125
    %s129 = sphi 0, %s128
    %s145 = sphi 0, %s129
    %s151 = sphi 0, %s153
    %s154 = sphi 0, %s151
    %s155 = sphi 0, %s154
    %s171 = sphi 0, %s155
    %s177 = sphi 0, %s179
    %s180 = sphi 0, %s177
    %s181 = sphi 0, %s180
    %s197 = sphi 0, %s181
    %s201 = sphi 0, %s201
    %s203 = sphi 0, %s201
    %s204 = sphi 0, %s203
    %s218 = sphi 0, %s204
    %s226 = sphi 0, %s228
    %s229 = sphi 0, %s226
    %s230 = sphi 0, %s229
    %s246 = sphi 0, %s230
  $region4: #{encoder2d_forward.1} parent=0 // loop_header_branch
    %17 = sbr.rel (%p15) target = $region8
  $region5: #{encoder2d_forward.1} parent=0 // loop_body
    %s19 = ssub.s32 %s14, 1
    %s20 = ssub.s32 %s14, 2
    %s27 = sadd.s32 1, %s22
    %p28 = scmp.ge.s32.totalorder %s27, 1
    %s29 = scalar_select %p28, 0, %s27
    %s30 = sadd.s32 1, %s21
    %s31 = scalar_select %p28, %s30, %s21
    %p32 = scmp.ge.s32.totalorder %s31, 2
    %s33 = scalar_select %p32, 0, %s31
    %s34 = ssub.s32 %s21, %s33
    %p35 = scmp.eq.s32.totalorder %s34, 0
    %s37 = sadd.s32 %s36, 1
    %s38 = scalar_select %p35, %s36, %s37
    %p41 = pneg %p35
    %p42 = scmp.eq.s32.totalorder %s14, 1
    %p43 = por %p41, %p42
    %p44 = scmp.ne.s32.totalorder %s36, %s39
    %p45 = scmp.eq.s32.totalorder %s14, 0
    %p46 = por %p44, %p45
    %p47 = scmp.ne.s32.totalorder %s36, %s39
    %p48 = scmp.eq.s32.totalorder %s19, 1
    %p49 = por %p47, %p48
    %p50 = scmp.ne.s32.totalorder %s39, %s40
    %p51 = scmp.eq.s32.totalorder %s19, 0
    %p52 = por %p50, %p51
    %p53 = scmp.ne.s32.totalorder %s39, %s40
    %p54 = scmp.eq.s32.totalorder %s20, 1
    %p55 = por %p53, %p54
    %p57 = scmp.ne.s32.totalorder %s40, %s56
    %p58 = scmp.eq.s32.totalorder %s20, 0
    %p59 = por %p57, %p58
    %s61 = sadd.s32 %s60, 1
    %p64 = scmp.eq.s32.totalorder %s14, 1
    %p65 = scmp.ne.s32.totalorder %s60, %s62
    %p66 = scmp.eq.s32.totalorder %s14, 0
    %p67 = por %p65, %p66
    %p68 = scmp.ne.s32.totalorder %s60, %s62
    %p69 = scmp.eq.s32.totalorder %s19, 1
    %p70 = por %p68, %p69
    %p71 = scmp.ne.s32.totalorder %s62, %s63
    %p72 = scmp.eq.s32.totalorder %s19, 0
    %p73 = por %p71, %p72
    %p74 = scmp.ne.s32.totalorder %s62, %s63
    %p75 = scmp.eq.s32.totalorder %s20, 1
    %p76 = por %p74, %p75
    %p78 = scmp.ne.s32.totalorder %s63, %s77
    %p79 = scmp.eq.s32.totalorder %s20, 0
    %p80 = por %p78, %p79
    %s82 = sadd.s32 %s81, 1
    %p85 = scmp.eq.s32.totalorder %s14, 1
    %p86 = scmp.ne.s32.totalorder %s81, %s83
    %p87 = scmp.eq.s32.totalorder %s14, 0
    %p88 = por %p86, %p87
    %p89 = scmp.ne.s32.totalorder %s81, %s83
    %p90 = scmp.eq.s32.totalorder %s19, 1
    %p91 = por %p89, %p90
    %p92 = scmp.ne.s32.totalorder %s83, %s84
    %p93 = scmp.eq.s32.totalorder %s19, 0
    %p94 = por %p92, %p93
    %p95 = scmp.ne.s32.totalorder %s83, %s84
    %p96 = scmp.eq.s32.totalorder %s20, 1
    %p97 = por %p95, %p96
    %p99 = scmp.ne.s32.totalorder %s84, %s98
    %p100 = scmp.eq.s32.totalorder %s20, 0
    %p101 = por %p99, %p100
    %s103 = sadd.s32 %s102, 1
    %p106 = scmp.eq.s32.totalorder %s14, 1
    %p107 = scmp.ne.s32.totalorder %s102, %s104
    %p108 = scmp.eq.s32.totalorder %s14, 0
    %p109 = por %p107, %p108
    %p110 = scmp.ne.s32.totalorder %s102, %s104
    %p111 = scmp.eq.s32.totalorder %s19, 1
    %p112 = por %p110, %p111
    %p113 = scmp.ne.s32.totalorder %s104, %s105
    %p114 = scmp.eq.s32.totalorder %s19, 0
    %p115 = por %p113, %p114
    %p116 = scmp.ne.s32.totalorder %s104, %s105
    %p117 = scmp.eq.s32.totalorder %s20, 1
    %p118 = por %p116, %p117
    %p120 = scmp.ne.s32.totalorder %s105, %s119
    %p121 = scmp.eq.s32.totalorder %s20, 0
    %p122 = por %p120, %p121
    %s123 = ssub.s32 %s22, %s29
    %p124 = scmp.eq.s32.totalorder %s123, 0
    %s126 = sadd.s32 %s125, 1
    %s127 = scalar_select %p124, %s125, %s126
    %p130 = pneg %p124
    %p131 = scmp.eq.s32.totalorder %s14, 1
    %p132 = por %p130, %p131
    %p133 = scmp.ne.s32.totalorder %s125, %s128
    %p134 = scmp.eq.s32.totalorder %s14, 0
    %p135 = por %p133, %p134
    %p136 = scmp.ne.s32.totalorder %s125, %s128
    %p137 = scmp.eq.s32.totalorder %s19, 1
    %p138 = por %p136, %p137
    %p139 = scmp.ne.s32.totalorder %s128, %s129
    %p140 = scmp.eq.s32.totalorder %s19, 0
    %p141 = por %p139, %p140
    %p142 = scmp.ne.s32.totalorder %s128, %s129
    %p143 = scmp.eq.s32.totalorder %s20, 1
    %p144 = por %p142, %p143
    %p146 = scmp.ne.s32.totalorder %s129, %s145
    %p147 = scmp.eq.s32.totalorder %s20, 0
    %p148 = por %p146, %p147
    %s149 = ssub.s32 %s22, %s29
    %p150 = scmp.eq.s32.totalorder %s149, 0
    %s152 = sadd.s32 %s151, 1
    %s153 = scalar_select %p150, %s151, %s152
    %p156 = pneg %p150
    %p157 = scmp.eq.s32.totalorder %s14, 1
    %p158 = por %p156, %p157
    %p159 = scmp.ne.s32.totalorder %s151, %s154
    %p160 = scmp.eq.s32.totalorder %s14, 0
    %p161 = por %p159, %p160
    %p162 = scmp.ne.s32.totalorder %s151, %s154
    %p163 = scmp.eq.s32.totalorder %s19, 1
    %p164 = por %p162, %p163
    %p165 = scmp.ne.s32.totalorder %s154, %s155
    %p166 = scmp.eq.s32.totalorder %s19, 0
    %p167 = por %p165, %p166
    %p168 = scmp.ne.s32.totalorder %s154, %s155
    %p169 = scmp.eq.s32.totalorder %s20, 1
    %p170 = por %p168, %p169
    %p172 = scmp.ne.s32.totalorder %s155, %s171
    %p173 = scmp.eq.s32.totalorder %s20, 0
    %p174 = por %p172, %p173
    %s175 = ssub.s32 %s22, %s29
    %p176 = scmp.eq.s32.totalorder %s175, 0
    %s178 = sadd.s32 %s177, 1
    %s179 = scalar_select %p176, %s177, %s178
    %p182 = pneg %p176
    %p183 = scmp.eq.s32.totalorder %s14, 1
    %p184 = por %p182, %p183
    %p185 = scmp.ne.s32.totalorder %s177, %s180
    %p186 = scmp.eq.s32.totalorder %s14, 0
    %p187 = por %p185, %p186
    %p188 = scmp.ne.s32.totalorder %s177, %s180
    %p189 = scmp.eq.s32.totalorder %s19, 1
    %p190 = por %p188, %p189
    %p191 = scmp.ne.s32.totalorder %s180, %s181
    %p192 = scmp.eq.s32.totalorder %s19, 0
    %p193 = por %p191, %p192
    %p194 = scmp.ne.s32.totalorder %s180, %s181
    %p195 = scmp.eq.s32.totalorder %s20, 1
    %p196 = por %p194, %p195
    %p198 = scmp.ne.s32.totalorder %s181, %s197
    %p199 = scmp.eq.s32.totalorder %s20, 0
    %p200 = por %p198, %p199
    %s202 = sadd.s32 %s201, 1
    %p205 = scmp.eq.s32.totalorder %s14, 1
    %p206 = scmp.ne.s32.totalorder %s201, %s203
    %p207 = scmp.eq.s32.totalorder %s14, 0
    %p208 = por %p206, %p207
    %p209 = scmp.ne.s32.totalorder %s201, %s203
    %p210 = scmp.eq.s32.totalorder %s19, 1
    %p211 = por %p209, %p210
    %p212 = scmp.ne.s32.totalorder %s203, %s204
    %p213 = scmp.eq.s32.totalorder %s19, 0
    %p214 = por %p212, %p213
    %p215 = scmp.ne.s32.totalorder %s203, %s204
    %p216 = scmp.eq.s32.totalorder %s20, 1
    %p217 = por %p215, %p216
    %p219 = scmp.ne.s32.totalorder %s204, %s218
    %p220 = scmp.eq.s32.totalorder %s20, 0
    %p221 = por %p219, %p220
    %s222 = ssub.s32 %s21, %s33
    %s223 = ssub.s32 %s22, %s29
    %s224 = sor.u32 %s222, %s223
    %p225 = scmp.eq.s32.totalorder %s224, 0
    %s227 = sadd.s32 %s226, 1
    %s228 = scalar_select %p225, %s226, %s227
    %p231 = pneg %p225
    %p232 = scmp.eq.s32.totalorder %s14, 1
    %p233 = por %p231, %p232
    %p234 = scmp.ne.s32.totalorder %s226, %s229
    %p235 = scmp.eq.s32.totalorder %s14, 0
    %p236 = por %p234, %p235
    %p237 = scmp.ne.s32.totalorder %s226, %s229
    %p238 = scmp.eq.s32.totalorder %s19, 1
    %p239 = por %p237, %p238
    %p240 = scmp.ne.s32.totalorder %s229, %s230
    %p241 = scmp.eq.s32.totalorder %s19, 0
    %p242 = por %p240, %p241
    %p243 = scmp.ne.s32.totalorder %s229, %s230
    %p244 = scmp.eq.s32.totalorder %s20, 1
    %p245 = por %p243, %p244
    %p247 = scmp.ne.s32.totalorder %s230, %s246
    %p248 = scmp.eq.s32.totalorder %s20, 0
    %p249 = por %p247, %p248
    %p250 = scmp.le.s32.totalorder 1, %s14
    %p251 = scmp.lt.s32.totalorder %s14, 3
    %p252 = pnand %p250, %p251
    %p253 = pneg %p252
    // Predicated region
    $region9: #{encoder2d_forward.1} parent=5 // pred_check
      _
    $region10: #{encoder2d_forward.1} parent=5 // pred_check_branch
      %255 = sbr.rel (%p252) target = $region12
    $region11: #{encoder2d_forward.1} parent=5 // pred_region
      %s256 = ssub.s32 %s14, 1
      // Predicated region
      $region13: #{encoder2d_forward.1} parent=11 // pred_check
        %p257 = pneg %p73
      $region14: #{encoder2d_forward.1} parent=11 // pred_check_branch
        %259 = sbr.rel (%p257) target = $region16
      $region15: #{encoder2d_forward.1} parent=11 // pred_region
        _
      $region16: #{encoder2d_forward.1} parent=11 // pred_fallthru
        _
      // Predicated region
      $region17: #{encoder2d_forward.1} parent=11 // pred_check
        %p260 = pneg %p94
      $region18: #{encoder2d_forward.1} parent=11 // pred_check_branch
        %262 = sbr.rel (%p260) target = $region20
      $region19: #{encoder2d_forward.1} parent=11 // pred_region
        _
      $region20: #{encoder2d_forward.1} parent=11 // pred_fallthru
        _
      // Predicated region
      $region21: #{encoder2d_forward.1} parent=11 // pred_check
        %p263 = pneg %p115
      $region22: #{encoder2d_forward.1} parent=11 // pred_check_branch
        %265 = sbr.rel (%p263) target = $region24
      $region23: #{encoder2d_forward.1} parent=11 // pred_region
        _
      $region24: #{encoder2d_forward.1} parent=11 // pred_fallthru
        _
      // Predicated region
      $region25: #{encoder2d_forward.1} parent=11 // pred_check
        %p266 = pneg %p141
      $region26: #{encoder2d_forward.1} parent=11 // pred_check_branch
        %268 = sbr.rel (%p266) target = $region28
      $region27: #{encoder2d_forward.1} parent=11 // pred_region
        %p269 = scmp.lt.s32.totalorder %s24, 0
        %s270 = scalar_select %p269, %s24, 0
        %s271 = smul.addr %s270, 4
        %s272 = scalar_lea.vmem %s4, %s271
      $region28: #{encoder2d_forward.1} parent=11 // pred_fallthru
        _
      // Predicated region
      $region29: #{encoder2d_forward.1} parent=11 // pred_check
        %p273 = pneg %p167
      $region30: #{encoder2d_forward.1} parent=11 // pred_check_branch
        %275 = sbr.rel (%p273) target = $region32
      $region31: #{encoder2d_forward.1} parent=11 // pred_region
        %p276 = scmp.lt.s32.totalorder %s24, 0
        %s277 = scalar_select %p276, %s24, 0
        %s278 = scalar_lea.vmem %s5, %s277
      $region32: #{encoder2d_forward.1} parent=11 // pred_fallthru
        _
      // Predicated region
      $region33: #{encoder2d_forward.1} parent=11 // pred_check
        %p279 = pneg %p193
      $region34: #{encoder2d_forward.1} parent=11 // pred_check_branch
        %281 = sbr.rel (%p279) target = $region36
      $region35: #{encoder2d_forward.1} parent=11 // pred_region
        %p282 = scmp.lt.s32.totalorder %s24, 0
        %s283 = scalar_select %p282, %s24, 0
        %s284 = scalar_lea.vmem %s6, %s283
      $region36: #{encoder2d_forward.1} parent=11 // pred_fallthru
        _
      // Predicated region
      $region37: #{encoder2d_forward.1} parent=11 // pred_check
        %p285 = pneg %p214
      $region38: #{encoder2d_forward.1} parent=11 // pred_check_branch
        %287 = sbr.rel (%p285) target = $region40
      $region39: #{encoder2d_forward.1} parent=11 // pred_region
        _
      $region40: #{encoder2d_forward.1} parent=11 // pred_fallthru
        _
    $region12: #{encoder2d_forward.1} parent=5 // pred_fallthru
      _
    %p288 = scmp.lt.s32.totalorder %s14, 2
    // Predicated region
    $region41: #{encoder2d_forward.1} parent=5 // pred_check
      %p289 = pneg %p288
    $region42: #{encoder2d_forward.1} parent=5 // pred_check_branch
      %291 = sbr.rel (%p289) target = $region44
    $region43: #{encoder2d_forward.1} parent=5 // pred_region
      // Predicated region
      $region45: #{encoder2d_forward.1} parent=43 // pred_check
        %p292 = pneg %p46
      $region46: #{encoder2d_forward.1} parent=43 // pred_check_branch
        %294 = sbr.rel (%p292) target = $region48
      $region47: #{encoder2d_forward.1} parent=43 // pred_region
        %p295 = scmp.lt.s32.totalorder %s21, 1
        %s296 = scalar_select %p295, %s21, 1
        %s297 = smul.addr %s296, 55
        %s298 = smul.addr %s297, 4
        %s299 = scalar_lea.vmem %s0, %s298
      $region48: #{encoder2d_forward.1} parent=43 // pred_fallthru
        _
    $region44: #{encoder2d_forward.1} parent=5 // pred_fallthru
      _
    %p300 = scmp.le.s32.totalorder 1, %s14
    %p301 = scmp.lt.s32.totalorder %s14, 3
    %p302 = pnand %p300, %p301
    %p303 = pneg %p302
    // Predicated region
    $region49: #{encoder2d_forward.1} parent=5 // pred_check
      _
    $region50: #{encoder2d_forward.1} parent=5 // pred_check_branch
      %305 = sbr.rel (%p302) target = $region52
    $region51: #{encoder2d_forward.1} parent=5 // pred_region
      %s306 = ssub.s32 %s14, 1
      %p307 = scmp.lt.s32.totalorder %s23, 1
      %s308 = scalar_select %p307, %s23, 1
      %s309 = smul.addr %s308, 55
      %s310 = smul.addr %s309, 4
      %s311 = scalar_lea.vmem %s0, %s310
      %p312 = pneg %p52
      %p313 = pneg %p49
      %p314 = pneg %p73
      %p315 = pneg %p70
      %p316 = pneg %p94
      %p317 = pneg %p91
      %p318 = pneg %p115
      %p319 = pneg %p112
      %p320 = scmp.lt.s32.totalorder %s24, 0
      %s321 = scalar_select %p320, %s24, 0
      %s322 = smul.addr %s321, 4
      %s323 = scalar_lea.vmem %s4, %s322
      %p324 = pneg %p141
      %p325 = pneg %p138
      %p326 = scmp.lt.s32.totalorder %s24, 0
      %s327 = scalar_select %p326, %s24, 0
      %s328 = scalar_lea.vmem %s5, %s327
      %p329 = pneg %p167
      %p330 = pneg %p164
      %p331 = scmp.lt.s32.totalorder %s24, 0
      %s332 = scalar_select %p331, %s24, 0
      %s333 = scalar_lea.vmem %s6, %s332
      %p334 = pneg %p193
      %p335 = pneg %p190
      %p336 = pneg %p214
      %p337 = pneg %p211
      %p338 = pneg %p242
      %p339 = pneg %p239
      %p340 = scmp.lt.s32.totalorder %s23, 1
      %s341 = scalar_select %p340, %s23, 1
      %p342 = scmp.lt.s32.totalorder %s24, 0
      %s343 = scalar_select %p342, %s24, 0
      %s344 = smul.addr %s341, 48
      %s345 = sadd.s32 %s343, %s344
      %s346 = smul.addr %s345, 8
      %s347 = scalar_lea.vmem %s8, %s346
      %p348 = scmp.lt.s32.totalorder %s23, 1
      %s349 = scalar_select %p348, %s23, 1
      %s350 = smul.addr %s349, 55
      %s351 = smul.addr %s350, 4
      %s352 = scalar_lea.vmem %s0, %s351
      %p353 = scmp.lt.s32.totalorder %s24, 0
      %s354 = scalar_select %p353, %s24, 0
      %s355 = smul.addr %s354, 4
      %s356 = scalar_lea.vmem %s4, %s355
      %p357 = scmp.lt.s32.totalorder %s24, 0
      %s358 = scalar_select %p357, %s24, 0
      %s359 = scalar_lea.vmem %s5, %s358
      %p360 = scmp.lt.s32.totalorder %s24, 0
      %s361 = scalar_select %p360, %s24, 0
      %s362 = scalar_lea.vmem %s6, %s361
      %p363 = scmp.lt.s32.totalorder %s23, 1
      %s364 = scalar_select %p363, %s23, 1
      %p365 = scmp.lt.s32.totalorder %s24, 0
      %s366 = scalar_select %p365, %s24, 0
      %s367 = smul.addr %s364, 48
      %s368 = sadd.s32 %s366, %s367
      %s369 = smul.addr %s368, 8
      %s370 = scalar_lea.vmem %s8, %s369
      %v372 = vld [vmem:[%s352] sm:$0xf]
      %v373 = vld [vmem:[%s352 + $0x4] sm:$0xf]
      %v374 = vld [vmem:[%s352 + $0x8] sm:$0xf]
      %v375 = vld [vmem:[%s352 + $0xc] sm:$0xf]
      %v376 = vld [vmem:[%s352 + $0x10] sm:$0xf]
      %v377 = vld [vmem:[%s352 + $0x14] sm:$0xf]
      %v378 = vld [vmem:[%s352 + $0x18] sm:$0xf]
      %v379 = vld [vmem:[%s352 + $0x1c] sm:$0xf]
      %v380 = vld [vmem:[%s352 + $0x20] sm:$0xf]
      %v381 = vld [vmem:[%s352 + $0x24] sm:$0xf]
      %v382 = vld [vmem:[%s352 + $0x28] sm:$0xf]
      %v383 = vld [vmem:[%s352 + $0x2c] sm:$0xf]
      %v384 = vld [vmem:[%s352 + $0x30] sm:$0xf]
      %v385 = vld [vmem:[%s352 + $0x34] sm:$0xf]
      %v386 = vld [vmem:[%s352 + $0x38] sm:$0xf]
      %v387 = vld [vmem:[%s352 + $0x3c] sm:$0xf]
      %v388 = vld [vmem:[%s352 + $0x40] sm:$0xf]
      %v389 = vld [vmem:[%s352 + $0x44] sm:$0xf]
      %v390 = vld [vmem:[%s352 + $0x48] sm:$0xf]
      %v391 = vld [vmem:[%s352 + $0x4c] sm:$0xf]
      %v392 = vld [vmem:[%s352 + $0x50] sm:$0xf]
      %v393 = vld [vmem:[%s352 + $0x54] sm:$0xf]
      %v394 = vld [vmem:[%s352 + $0x58] sm:$0xf]
      %v395 = vld [vmem:[%s352 + $0x5c] sm:$0xf]
      %v396 = vld [vmem:[%s352 + $0x60] sm:$0xf]
      %v397 = vld [vmem:[%s352 + $0x64] sm:$0xf]
      %v398 = vld [vmem:[%s352 + $0x68] sm:$0xf]
      %v399 = vld [vmem:[%s352 + $0x6c] sm:$0xf]
      %v400 = vld [vmem:[%s352 + $0x70] sm:$0xf]
      %v401 = vld [vmem:[%s352 + $0x74] sm:$0xf]
      %v402 = vld [vmem:[%s352 + $0x78] sm:$0xf]
      %v403 = vld [vmem:[%s352 + $0x7c] sm:$0xf]
      %v404 = vld [vmem:[%s352 + $0x80] sm:$0xf]
      %v405 = vld [vmem:[%s352 + $0x84] sm:$0xf]
      %v406 = vld [vmem:[%s352 + $0x88] sm:$0xf]
      %v407 = vld [vmem:[%s352 + $0x8c] sm:$0xf]
      %v408 = vld [vmem:[%s352 + $0x90] sm:$0xf]
      %v409 = vld [vmem:[%s352 + $0x94] sm:$0xf]
      %v410 = vld [vmem:[%s352 + $0x98] sm:$0xf]
      %v411 = vld [vmem:[%s352 + $0x9c] sm:$0xf]
      %v412 = vld [vmem:[%s352 + $0xa0] sm:$0xf]
      %v413 = vld [vmem:[%s352 + $0xa4] sm:$0xf]
      %v414 = vld [vmem:[%s352 + $0xa8] sm:$0xf]
      %v415 = vld [vmem:[%s352 + $0xac] sm:$0xf]
      %v416 = vld [vmem:[%s352 + $0xb0] sm:$0xf]
      %v417 = vld [vmem:[%s352 + $0xb4] sm:$0xf]
      %v418 = vld [vmem:[%s352 + $0xb8] sm:$0xf]
      %v419 = vld [vmem:[%s352 + $0xbc] sm:$0xf]
      %v420 = vld [vmem:[%s352 + $0xc0] sm:$0xf]
      %v421 = vld [vmem:[%s352 + $0xc4] sm:$0xf]
      %v422 = vld [vmem:[%s352 + $0xc8] sm:$0xf]
      %v423 = vld [vmem:[%s352 + $0xcc] sm:$0xf]
      %v424 = vld [vmem:[%s352 + $0xd0] sm:$0xf]
      %v425 = vld [vmem:[%s352 + $0xd4] sm:$0xf]
      %v426 = vld [vmem:[%s352 + $0xd8] sm:$0xf]
      %v427 = vunpack.c.l.bf16 %v372
      %v428 = vunpack.c.l.bf16 %v373
      %v429 = vunpack.c.l.bf16 %v374
      %v430 = vunpack.c.l.bf16 %v375
      %v431 = vunpack.c.l.bf16 %v376
      %v432 = vunpack.c.l.bf16 %v377
      %v433 = vunpack.c.l.bf16 %v378
      %v434 = vunpack.c.l.bf16 %v379
      %v435 = vunpack.c.l.bf16 %v380
      %v436 = vunpack.c.l.bf16 %v381
      %v437 = vunpack.c.l.bf16 %v382
      %v438 = vunpack.c.l.bf16 %v383
      %v439 = vunpack.c.l.bf16 %v384
      %v440 = vunpack.c.l.bf16 %v385
      %v441 = vunpack.c.l.bf16 %v386
      %v442 = vunpack.c.l.bf16 %v387
      %v443 = vunpack.c.l.bf16 %v388
      %v444 = vunpack.c.l.bf16 %v389
      %v445 = vunpack.c.l.bf16 %v390
      %v446 = vunpack.c.l.bf16 %v391
      %v447 = vunpack.c.l.bf16 %v392
      %v448 = vunpack.c.l.bf16 %v393
      %v449 = vunpack.c.l.bf16 %v394
      %v450 = vunpack.c.l.bf16 %v395
      %v451 = vunpack.c.l.bf16 %v396
      %v452 = vunpack.c.l.bf16 %v397
      %v453 = vunpack.c.l.bf16 %v398
      %v454 = vunpack.c.l.bf16 %v399
      %v455 = vunpack.c.l.bf16 %v400
      %v456 = vunpack.c.l.bf16 %v401
      %v457 = vunpack.c.l.bf16 %v402
      %v458 = vunpack.c.l.bf16 %v403
      %v459 = vunpack.c.l.bf16 %v404
      %v460 = vunpack.c.l.bf16 %v405
      %v461 = vunpack.c.l.bf16 %v406
      %v462 = vunpack.c.l.bf16 %v407
      %v463 = vunpack.c.l.bf16 %v408
      %v464 = vunpack.c.l.bf16 %v409
      %v465 = vunpack.c.l.bf16 %v410
      %v466 = vunpack.c.l.bf16 %v411
      %v467 = vunpack.c.l.bf16 %v412
      %v468 = vunpack.c.l.bf16 %v413
      %v469 = vunpack.c.l.bf16 %v414
      %v470 = vunpack.c.l.bf16 %v415
      %v471 = vunpack.c.l.bf16 %v416
      %v472 = vunpack.c.l.bf16 %v417
      %v473 = vunpack.c.l.bf16 %v418
      %v474 = vunpack.c.l.bf16 %v419
      %v475 = vunpack.c.l.bf16 %v420
      %v476 = vunpack.c.l.bf16 %v421
      %v477 = vunpack.c.l.bf16 %v422
      %v478 = vunpack.c.l.bf16 %v423
      %v479 = vunpack.c.l.bf16 %v424
      %v480 = vunpack.c.l.bf16 %v425
      %v481 = vunpack.c.l.bf16 %v426
      %vm531 = vcmask 1046528
      %v532 = vrot.slane %v427, 1
      %v533 = vrot.slane %v428, 1
      %v534 = vsel %vm531, %v532, %v533
      %v535 = vrot.slane %v429, 1
      %v536 = vsel %vm531, %v533, %v535
      %v537 = vrot.slane %v430, 1
      %v538 = vsel %vm531, %v535, %v537
      %v539 = vrot.slane %v431, 1
      %v540 = vsel %vm531, %v537, %v539
      %v541 = vrot.slane %v432, 1
      %v542 = vsel %vm531, %v539, %v541
      %v543 = vrot.slane %v433, 1
      %v544 = vsel %vm531, %v541, %v543
      %v545 = vrot.slane %v434, 1
      %v546 = vsel %vm531, %v543, %v545
      %v547 = vrot.slane %v435, 1
      %v548 = vsel %vm531, %v545, %v547
      %v549 = vrot.slane %v436, 1
      %v550 = vsel %vm531, %v547, %v549
      %v551 = vrot.slane %v437, 1
      %v552 = vsel %vm531, %v549, %v551
      %v553 = vrot.slane %v438, 1
      %v554 = vsel %vm531, %v551, %v553
      %v555 = vrot.slane %v439, 1
      %v556 = vsel %vm531, %v553, %v555
      %v557 = vrot.slane %v440, 1
      %v558 = vsel %vm531, %v555, %v557
      %v559 = vrot.slane %v441, 1
      %v560 = vsel %vm531, %v557, %v559
      %v561 = vrot.slane %v442, 1
      %v562 = vsel %vm531, %v559, %v561
      %v563 = vrot.slane %v443, 1
      %v564 = vsel %vm531, %v561, %v563
      %v565 = vrot.slane %v444, 1
      %v566 = vsel %vm531, %v563, %v565
      %v567 = vrot.slane %v445, 1
      %v568 = vsel %vm531, %v565, %v567
      %v569 = vrot.slane %v446, 1
      %v570 = vsel %vm531, %v567, %v569
      %v571 = vrot.slane %v447, 1
      %v572 = vsel %vm531, %v569, %v571
      %v573 = vrot.slane %v448, 1
      %v574 = vsel %vm531, %v571, %v573
      %v575 = vrot.slane %v449, 1
      %v576 = vsel %vm531, %v573, %v575
      %v577 = vrot.slane %v450, 1
      %v578 = vsel %vm531, %v575, %v577
      %v579 = vrot.slane %v451, 1
      %v580 = vsel %vm531, %v577, %v579
      %v581 = vrot.slane %v452, 1
      %v582 = vsel %vm531, %v579, %v581
      %v583 = vrot.slane %v453, 1
      %v584 = vsel %vm531, %v581, %v583
      %v585 = vrot.slane %v454, 1
      %v586 = vsel %vm531, %v583, %v585
      %v587 = vrot.slane %v455, 1
      %v588 = vsel %vm531, %v585, %v587
      %v589 = vrot.slane %v456, 1
      %v590 = vsel %vm531, %v587, %v589
      %v591 = vrot.slane %v457, 1
      %v592 = vsel %vm531, %v589, %v591
      %v593 = vrot.slane %v458, 1
      %v594 = vsel %vm531, %v591, %v593
      %v595 = vrot.slane %v459, 1
      %v596 = vsel %vm531, %v593, %v595
      %v597 = vrot.slane %v460, 1
      %v598 = vsel %vm531, %v595, %v597
      %v599 = vrot.slane %v461, 1
      %v600 = vsel %vm531, %v597, %v599
      %v601 = vrot.slane %v462, 1
      %v602 = vsel %vm531, %v599, %v601
      %v603 = vrot.slane %v463, 1
      %v604 = vsel %vm531, %v601, %v603
      %v605 = vrot.slane %v464, 1
      %v606 = vsel %vm531, %v603, %v605
      %v607 = vrot.slane %v465, 1
      %v608 = vsel %vm531, %v605, %v607
      %v609 = vrot.slane %v466, 1
      %v610 = vsel %vm531, %v607, %v609
      %v611 = vrot.slane %v467, 1
      %v612 = vsel %vm531, %v609, %v611
      %v613 = vrot.slane %v468, 1
      %v614 = vsel %vm531, %v611, %v613
      %v615 = vrot.slane %v469, 1
      %v616 = vsel %vm531, %v613, %v615
      %v617 = vrot.slane %v470, 1
      %v618 = vsel %vm531, %v615, %v617
      %v619 = vrot.slane %v471, 1
      %v620 = vsel %vm531, %v617, %v619
      %v621 = vrot.slane %v472, 1
      %v622 = vsel %vm531, %v619, %v621
      %v623 = vrot.slane %v473, 1
      %v624 = vsel %vm531, %v621, %v623
      %v625 = vrot.slane %v474, 1
      %v626 = vsel %vm531, %v623, %v625
      %v627 = vrot.slane %v475, 1
      %v628 = vsel %vm531, %v625, %v627
      %629 = vrot.lane.b32.xlu0 %v534, 8
      %v630 = vpop.permute.xlu0 %629
      %631 = vrot.lane.b32.xlu0 %v536, 8
      %v632 = vpop.permute.xlu0 %631
      %633 = vrot.lane.b32.xlu0 %v538, 8
      %v634 = vpop.permute.xlu0 %633
      %635 = vrot.lane.b32.xlu0 %v540, 8
      %v636 = vpop.permute.xlu0 %635
      %637 = vrot.lane.b32.xlu0 %v542, 8
      %v638 = vpop.permute.xlu0 %637
      %639 = vrot.lane.b32.xlu0 %v544, 8
      %v640 = vpop.permute.xlu0 %639
      %641 = vrot.lane.b32.xlu0 %v546, 8
      %v642 = vpop.permute.xlu0 %641
      %643 = vrot.lane.b32.xlu0 %v548, 8
      %v644 = vpop.permute.xlu0 %643
      %645 = vrot.lane.b32.xlu0 %v550, 8
      %v646 = vpop.permute.xlu0 %645
      %647 = vrot.lane.b32.xlu0 %v552, 8
      %v648 = vpop.permute.xlu0 %647
      %649 = vrot.lane.b32.xlu0 %v554, 8
      %v650 = vpop.permute.xlu0 %649
      %651 = vrot.lane.b32.xlu0 %v556, 8
      %v652 = vpop.permute.xlu0 %651
      %653 = vrot.lane.b32.xlu0 %v558, 8
      %v654 = vpop.permute.xlu0 %653
      %655 = vrot.lane.b32.xlu0 %v560, 8
      %v656 = vpop.permute.xlu0 %655
      %657 = vrot.lane.b32.xlu0 %v562, 8
      %v658 = vpop.permute.xlu0 %657
      %659 = vrot.lane.b32.xlu0 %v564, 8
      %v660 = vpop.permute.xlu0 %659
      %661 = vrot.lane.b32.xlu0 %v566, 8
      %v662 = vpop.permute.xlu0 %661
      %663 = vrot.lane.b32.xlu0 %v568, 8
      %v664 = vpop.permute.xlu0 %663
      %665 = vrot.lane.b32.xlu0 %v570, 8
      %v666 = vpop.permute.xlu0 %665
      %667 = vrot.lane.b32.xlu0 %v572, 8
      %v668 = vpop.permute.xlu0 %667
      %669 = vrot.lane.b32.xlu0 %v574, 8
      %v670 = vpop.permute.xlu0 %669
      %671 = vrot.lane.b32.xlu0 %v576, 8
      %v672 = vpop.permute.xlu0 %671
      %673 = vrot.lane.b32.xlu0 %v578, 8
      %v674 = vpop.permute.xlu0 %673
      %675 = vrot.lane.b32.xlu0 %v580, 8
      %v676 = vpop.permute.xlu0 %675
      %677 = vrot.lane.b32.xlu0 %v582, 8
      %v678 = vpop.permute.xlu0 %677
      %679 = vrot.lane.b32.xlu0 %v584, 8
      %v680 = vpop.permute.xlu0 %679
      %681 = vrot.lane.b32.xlu0 %v586, 8
      %v682 = vpop.permute.xlu0 %681
      %683 = vrot.lane.b32.xlu0 %v588, 8
      %v684 = vpop.permute.xlu0 %683
      %685 = vrot.lane.b32.xlu0 %v590, 8
      %v686 = vpop.permute.xlu0 %685
      %687 = vrot.lane.b32.xlu0 %v592, 8
      %v688 = vpop.permute.xlu0 %687
      %689 = vrot.lane.b32.xlu0 %v594, 8
      %v690 = vpop.permute.xlu0 %689
      %691 = vrot.lane.b32.xlu0 %v596, 8
      %v692 = vpop.permute.xlu0 %691
      %693 = vrot.lane.b32.xlu0 %v598, 8
      %v694 = vpop.permute.xlu0 %693
      %695 = vrot.lane.b32.xlu0 %v600, 8
      %v696 = vpop.permute.xlu0 %695
      %697 = vrot.lane.b32.xlu0 %v602, 8
      %v698 = vpop.permute.xlu0 %697
      %699 = vrot.lane.b32.xlu0 %v604, 8
      %v700 = vpop.permute.xlu0 %699
      %701 = vrot.lane.b32.xlu0 %v606, 8
      %v702 = vpop.permute.xlu0 %701
      %703 = vrot.lane.b32.xlu0 %v608, 8
      %v704 = vpop.permute.xlu0 %703
      %705 = vrot.lane.b32.xlu0 %v610, 8
      %v706 = vpop.permute.xlu0 %705
      %707 = vrot.lane.b32.xlu0 %v612, 8
      %v708 = vpop.permute.xlu0 %707
      %709 = vrot.lane.b32.xlu0 %v614, 8
      %v710 = vpop.permute.xlu0 %709
      %711 = vrot.lane.b32.xlu0 %v616, 8
      %v712 = vpop.permute.xlu0 %711
      %713 = vrot.lane.b32.xlu0 %v618, 8
      %v714 = vpop.permute.xlu0 %713
      %715 = vrot.lane.b32.xlu0 %v620, 8
      %v716 = vpop.permute.xlu0 %715
      %717 = vrot.lane.b32.xlu0 %v622, 8
      %v718 = vpop.permute.xlu0 %717
      %719 = vrot.lane.b32.xlu0 %v624, 8
      %v720 = vpop.permute.xlu0 %719
      %721 = vrot.lane.b32.xlu0 %v626, 8
      %v722 = vpop.permute.xlu0 %721
      %723 = vrot.lane.b32.xlu0 %v628, 8
      %v724 = vpop.permute.xlu0 %723
      %vm773 = vcmask 1045504
      %v774 = vrot.slane %v427, 2
      %v775 = vrot.slane %v428, 2
      %v776 = vsel %vm773, %v774, %v775
      %v777 = vrot.slane %v429, 2
      %v778 = vsel %vm773, %v775, %v777
      %v779 = vrot.slane %v430, 2
      %v780 = vsel %vm773, %v777, %v779
      %v781 = vrot.slane %v431, 2
      %v782 = vsel %vm773, %v779, %v781
      %v783 = vrot.slane %v432, 2
      %v784 = vsel %vm773, %v781, %v783
      %v785 = vrot.slane %v433, 2
      %v786 = vsel %vm773, %v783, %v785
      %v787 = vrot.slane %v434, 2
      %v788 = vsel %vm773, %v785, %v787
      %v789 = vrot.slane %v435, 2
      %v790 = vsel %vm773, %v787, %v789
      %v791 = vrot.slane %v436, 2
      %v792 = vsel %vm773, %v789, %v791
      %v793 = vrot.slane %v437, 2
      %v794 = vsel %vm773, %v791, %v793
      %v795 = vrot.slane %v438, 2
      %v796 = vsel %vm773, %v793, %v795
      %v797 = vrot.slane %v439, 2
      %v798 = vsel %vm773, %v795, %v797
      %v799 = vrot.slane %v440, 2
      %v800 = vsel %vm773, %v797, %v799
      %v801 = vrot.slane %v441, 2
      %v802 = vsel %vm773, %v799, %v801
      %v803 = vrot.slane %v442, 2
      %v804 = vsel %vm773, %v801, %v803
      %v805 = vrot.slane %v443, 2
      %v806 = vsel %vm773, %v803, %v805
      %v807 = vrot.slane %v444, 2
      %v808 = vsel %vm773, %v805, %v807
      %v809 = vrot.slane %v445, 2
      %v810 = vsel %vm773, %v807, %v809
      %v811 = vrot.slane %v446, 2
      %v812 = vsel %vm773, %v809, %v811
      %v813 = vrot.slane %v447, 2
      %v814 = vsel %vm773, %v811, %v813
      %v815 = vrot.slane %v448, 2
      %v816 = vsel %vm773, %v813, %v815
      %v817 = vrot.slane %v449, 2
      %v818 = vsel %vm773, %v815, %v817
      %v819 = vrot.slane %v450, 2
      %v820 = vsel %vm773, %v817, %v819
      %v821 = vrot.slane %v451, 2
      %v822 = vsel %vm773, %v819, %v821
      %v823 = vrot.slane %v452, 2
      %v824 = vsel %vm773, %v821, %v823
      %v825 = vrot.slane %v453, 2
      %v826 = vsel %vm773, %v823, %v825
      %v827 = vrot.slane %v454, 2
      %v828 = vsel %vm773, %v825, %v827
      %v829 = vrot.slane %v455, 2
      %v830 = vsel %vm773, %v827, %v829
      %v831 = vrot.slane %v456, 2
      %v832 = vsel %vm773, %v829, %v831
      %v833 = vrot.slane %v457, 2
      %v834 = vsel %vm773, %v831, %v833
      %v835 = vrot.slane %v458, 2
      %v836 = vsel %vm773, %v833, %v835
      %v837 = vrot.slane %v459, 2
      %v838 = vsel %vm773, %v835, %v837
      %v839 = vrot.slane %v460, 2
      %v840 = vsel %vm773, %v837, %v839
      %v841 = vrot.slane %v461, 2
      %v842 = vsel %vm773, %v839, %v841
      %v843 = vrot.slane %v462, 2
      %v844 = vsel %vm773, %v841, %v843
      %v845 = vrot.slane %v463, 2
      %v846 = vsel %vm773, %v843, %v845
      %v847 = vrot.slane %v464, 2
      %v848 = vsel %vm773, %v845, %v847
      %v849 = vrot.slane %v465, 2
      %v850 = vsel %vm773, %v847, %v849
      %v851 = vrot.slane %v466, 2
      %v852 = vsel %vm773, %v849, %v851
      %v853 = vrot.slane %v467, 2
      %v854 = vsel %vm773, %v851, %v853
      %v855 = vrot.slane %v468, 2
      %v856 = vsel %vm773, %v853, %v855
      %v857 = vrot.slane %v469, 2
      %v858 = vsel %vm773, %v855, %v857
      %v859 = vrot.slane %v470, 2
      %v860 = vsel %vm773, %v857, %v859
      %v861 = vrot.slane %v471, 2
      %v862 = vsel %vm773, %v859, %v861
      %v863 = vrot.slane %v472, 2
      %v864 = vsel %vm773, %v861, %v863
      %v865 = vrot.slane %v473, 2
      %v866 = vsel %vm773, %v863, %v865
      %v867 = vrot.slane %v474, 2
      %v868 = vsel %vm773, %v865, %v867
      %v869 = vrot.slane %v475, 2
      %v870 = vsel %vm773, %v867, %v869
      %871 = vrot.lane.b32.xlu0 %v776, 16
      %v872 = vpop.permute.xlu0 %871
      %873 = vrot.lane.b32.xlu0 %v778, 16
      %v874 = vpop.permute.xlu0 %873
      %875 = vrot.lane.b32.xlu0 %v780, 16
      %v876 = vpop.permute.xlu0 %875
      %877 = vrot.lane.b32.xlu0 %v782, 16
      %v878 = vpop.permute.xlu0 %877
      %879 = vrot.lane.b32.xlu0 %v784, 16
      %v880 = vpop.permute.xlu0 %879
      %881 = vrot.lane.b32.xlu0 %v786, 16
      %v882 = vpop.permute.xlu0 %881
      %883 = vrot.lane.b32.xlu0 %v788, 16
      %v884 = vpop.permute.xlu0 %883
      %885 = vrot.lane.b32.xlu0 %v790, 16
      %v886 = vpop.permute.xlu0 %885
      %887 = vrot.lane.b32.xlu0 %v792, 16
      %v888 = vpop.permute.xlu0 %887
      %889 = vrot.lane.b32.xlu0 %v794, 16
      %v890 = vpop.permute.xlu0 %889
      %891 = vrot.lane.b32.xlu0 %v796, 16
      %v892 = vpop.permute.xlu0 %891
      %893 = vrot.lane.b32.xlu0 %v798, 16
      %v894 = vpop.permute.xlu0 %893
      %895 = vrot.lane.b32.xlu0 %v800, 16
      %v896 = vpop.permute.xlu0 %895
      %897 = vrot.lane.b32.xlu0 %v802, 16
      %v898 = vpop.permute.xlu0 %897
      %899 = vrot.lane.b32.xlu0 %v804, 16
      %v900 = vpop.permute.xlu0 %899
      %901 = vrot.lane.b32.xlu0 %v806, 16
      %v902 = vpop.permute.xlu0 %901
      %903 = vrot.lane.b32.xlu0 %v808, 16
      %v904 = vpop.permute.xlu0 %903
      %905 = vrot.lane.b32.xlu0 %v810, 16
      %v906 = vpop.permute.xlu0 %905
      %907 = vrot.lane.b32.xlu0 %v812, 16
      %v908 = vpop.permute.xlu0 %907
      %909 = vrot.lane.b32.xlu0 %v814, 16
      %v910 = vpop.permute.xlu0 %909
      %911 = vrot.lane.b32.xlu0 %v816, 16
      %v912 = vpop.permute.xlu0 %911
      %913 = vrot.lane.b32.xlu0 %v818, 16
      %v914 = vpop.permute.xlu0 %913
      %915 = vrot.lane.b32.xlu0 %v820, 16
      %v916 = vpop.permute.xlu0 %915
      %917 = vrot.lane.b32.xlu0 %v822, 16
      %v918 = vpop.permute.xlu0 %917
      %919 = vrot.lane.b32.xlu0 %v824, 16
      %v920 = vpop.permute.xlu0 %919
      %921 = vrot.lane.b32.xlu0 %v826, 16
      %v922 = vpop.permute.xlu0 %921
      %923 = vrot.lane.b32.xlu0 %v828, 16
      %v924 = vpop.permute.xlu0 %923
      %925 = vrot.lane.b32.xlu0 %v830, 16
      %v926 = vpop.permute.xlu0 %925
      %927 = vrot.lane.b32.xlu0 %v832, 16
      %v928 = vpop.permute.xlu0 %927
      %929 = vrot.lane.b32.xlu0 %v834, 16
      %v930 = vpop.permute.xlu0 %929
      %931 = vrot.lane.b32.xlu0 %v836, 16
      %v932 = vpop.permute.xlu0 %931
      %933 = vrot.lane.b32.xlu0 %v838, 16
      %v934 = vpop.permute.xlu0 %933
      %935 = vrot.lane.b32.xlu0 %v840, 16
      %v936 = vpop.permute.xlu0 %935
      %937 = vrot.lane.b32.xlu0 %v842, 16
      %v938 = vpop.permute.xlu0 %937
      %939 = vrot.lane.b32.xlu0 %v844, 16
      %v940 = vpop.permute.xlu0 %939
      %941 = vrot.lane.b32.xlu0 %v846, 16
      %v942 = vpop.permute.xlu0 %941
      %943 = vrot.lane.b32.xlu0 %v848, 16
      %v944 = vpop.permute.xlu0 %943
      %945 = vrot.lane.b32.xlu0 %v850, 16
      %v946 = vpop.permute.xlu0 %945
      %947 = vrot.lane.b32.xlu0 %v852, 16
      %v948 = vpop.permute.xlu0 %947
      %949 = vrot.lane.b32.xlu0 %v854, 16
      %v950 = vpop.permute.xlu0 %949
      %951 = vrot.lane.b32.xlu0 %v856, 16
      %v952 = vpop.permute.xlu0 %951
      %953 = vrot.lane.b32.xlu0 %v858, 16
      %v954 = vpop.permute.xlu0 %953
      %955 = vrot.lane.b32.xlu0 %v860, 16
      %v956 = vpop.permute.xlu0 %955
      %957 = vrot.lane.b32.xlu0 %v862, 16
      %v958 = vpop.permute.xlu0 %957
      %959 = vrot.lane.b32.xlu0 %v864, 16
      %v960 = vpop.permute.xlu0 %959
      %961 = vrot.lane.b32.xlu0 %v866, 16
      %v962 = vpop.permute.xlu0 %961
      %963 = vrot.lane.b32.xlu0 %v868, 16
      %v964 = vpop.permute.xlu0 %963
      %965 = vrot.lane.b32.xlu0 %v870, 16
      %v966 = vpop.permute.xlu0 %965
      %1017 = vrot.lane.b32.xlu0 %v430, 24
      %v1018 = vpop.permute.xlu0 %1017
      %1019 = vrot.lane.b32.xlu0 %v431, 24
      %v1020 = vpop.permute.xlu0 %1019
      %1021 = vrot.lane.b32.xlu0 %v432, 24
      %v1022 = vpop.permute.xlu0 %1021
      %1023 = vrot.lane.b32.xlu0 %v433, 24
      %v1024 = vpop.permute.xlu0 %1023
      %1025 = vrot.lane.b32.xlu0 %v434, 24
      %v1026 = vpop.permute.xlu0 %1025
      %1027 = vrot.lane.b32.xlu0 %v435, 24
      %v1028 = vpop.permute.xlu0 %1027
      %1029 = vrot.lane.b32.xlu0 %v436, 24
      %v1030 = vpop.permute.xlu0 %1029
      %1031 = vrot.lane.b32.xlu0 %v437, 24
      %v1032 = vpop.permute.xlu0 %1031
      %1033 = vrot.lane.b32.xlu0 %v438, 24
      %v1034 = vpop.permute.xlu0 %1033
      %1035 = vrot.lane.b32.xlu0 %v439, 24
      %v1036 = vpop.permute.xlu0 %1035
      %1037 = vrot.lane.b32.xlu0 %v440, 24
      %v1038 = vpop.permute.xlu0 %1037
      %1039 = vrot.lane.b32.xlu0 %v441, 24
      %v1040 = vpop.permute.xlu0 %1039
      %1041 = vrot.lane.b32.xlu0 %v442, 24
      %v1042 = vpop.permute.xlu0 %1041
      %1043 = vrot.lane.b32.xlu0 %v443, 24
      %v1044 = vpop.permute.xlu0 %1043
      %1045 = vrot.lane.b32.xlu0 %v444, 24
      %v1046 = vpop.permute.xlu0 %1045
      %1047 = vrot.lane.b32.xlu0 %v445, 24
      %v1048 = vpop.permute.xlu0 %1047
      %1049 = vrot.lane.b32.xlu0 %v446, 24
      %v1050 = vpop.permute.xlu0 %1049
      %1051 = vrot.lane.b32.xlu0 %v447, 24
      %v1052 = vpop.permute.xlu0 %1051
      %1053 = vrot.lane.b32.xlu0 %v448, 24
      %v1054 = vpop.permute.xlu0 %1053
      %1055 = vrot.lane.b32.xlu0 %v449, 24
      %v1056 = vpop.permute.xlu0 %1055
      %1057 = vrot.lane.b32.xlu0 %v450, 24
      %v1058 = vpop.permute.xlu0 %1057
      %1059 = vrot.lane.b32.xlu0 %v451, 24
      %v1060 = vpop.permute.xlu0 %1059
      %1061 = vrot.lane.b32.xlu0 %v452, 24
      %v1062 = vpop.permute.xlu0 %1061
      %1063 = vrot.lane.b32.xlu0 %v453, 24
      %v1064 = vpop.permute.xlu0 %1063
      %1065 = vrot.lane.b32.xlu0 %v454, 24
      %v1066 = vpop.permute.xlu0 %1065
      %1067 = vrot.lane.b32.xlu0 %v455, 24
      %v1068 = vpop.permute.xlu0 %1067
      %1069 = vrot.lane.b32.xlu0 %v456, 24
      %v1070 = vpop.permute.xlu0 %1069
      %1071 = vrot.lane.b32.xlu0 %v457, 24
      %v1072 = vpop.permute.xlu0 %1071
      %1073 = vrot.lane.b32.xlu0 %v458, 24
      %v1074 = vpop.permute.xlu0 %1073
      %1075 = vrot.lane.b32.xlu0 %v459, 24
      %v1076 = vpop.permute.xlu0 %1075
      %1077 = vrot.lane.b32.xlu0 %v460, 24
      %v1078 = vpop.permute.xlu0 %1077
      %1079 = vrot.lane.b32.xlu0 %v461, 24
      %v1080 = vpop.permute.xlu0 %1079
      %1081 = vrot.lane.b32.xlu0 %v462, 24
      %v1082 = vpop.permute.xlu0 %1081
      %1083 = vrot.lane.b32.xlu0 %v463, 24
      %v1084 = vpop.permute.xlu0 %1083
      %1085 = vrot.lane.b32.xlu0 %v464, 24
      %v1086 = vpop.permute.xlu0 %1085
      %1087 = vrot.lane.b32.xlu0 %v465, 24
      %v1088 = vpop.permute.xlu0 %1087
      %1089 = vrot.lane.b32.xlu0 %v466, 24
      %v1090 = vpop.permute.xlu0 %1089
      %1091 = vrot.lane.b32.xlu0 %v467, 24
      %v1092 = vpop.permute.xlu0 %1091
      %1093 = vrot.lane.b32.xlu0 %v468, 24
      %v1094 = vpop.permute.xlu0 %1093
      %1095 = vrot.lane.b32.xlu0 %v469, 24
      %v1096 = vpop.permute.xlu0 %1095
      %1097 = vrot.lane.b32.xlu0 %v470, 24
      %v1098 = vpop.permute.xlu0 %1097
      %1099 = vrot.lane.b32.xlu0 %v471, 24
      %v1100 = vpop.permute.xlu0 %1099
      %1101 = vrot.lane.b32.xlu0 %v472, 24
      %v1102 = vpop.permute.xlu0 %1101
      %1103 = vrot.lane.b32.xlu0 %v473, 24
      %v1104 = vpop.permute.xlu0 %1103
      %1105 = vrot.lane.b32.xlu0 %v474, 24
      %v1106 = vpop.permute.xlu0 %1105
      %1107 = vrot.lane.b32.xlu0 %v475, 24
      %v1108 = vpop.permute.xlu0 %1107
      %1109 = vrot.lane.b32.xlu0 %v476, 24
      %v1110 = vpop.permute.xlu0 %1109
      %1111 = vrot.lane.b32.xlu0 %v477, 24
      %v1112 = vpop.permute.xlu0 %1111
      %v1162 = vrot.slane %v476, 1
      %v1163 = vsel %vm531, %v627, %v1162
      %v1164 = vrot.slane %v477, 1
      %v1165 = vsel %vm531, %v1162, %v1164
      %v1166 = vrot.slane %v478, 1
      %v1167 = vsel %vm531, %v1164, %v1166
      %1168 = vrot.lane.b32.xlu0 %v540, 32
      %v1169 = vpop.permute.xlu0 %1168
      %1170 = vrot.lane.b32.xlu0 %v542, 32
      %v1171 = vpop.permute.xlu0 %1170
      %1172 = vrot.lane.b32.xlu0 %v544, 32
      %v1173 = vpop.permute.xlu0 %1172
      %1174 = vrot.lane.b32.xlu0 %v546, 32
      %v1175 = vpop.permute.xlu0 %1174
      %1176 = vrot.lane.b32.xlu0 %v548, 32
      %v1177 = vpop.permute.xlu0 %1176
      %1178 = vrot.lane.b32.xlu0 %v550, 32
      %v1179 = vpop.permute.xlu0 %1178
      %1180 = vrot.lane.b32.xlu0 %v552, 32
      %v1181 = vpop.permute.xlu0 %1180
      %1182 = vrot.lane.b32.xlu0 %v554, 32
      %v1183 = vpop.permute.xlu0 %1182
      %1184 = vrot.lane.b32.xlu0 %v556, 32
      %v1185 = vpop.permute.xlu0 %1184
      %1186 = vrot.lane.b32.xlu0 %v558, 32
      %v1187 = vpop.permute.xlu0 %1186
      %1188 = vrot.lane.b32.xlu0 %v560, 32
      %v1189 = vpop.permute.xlu0 %1188
      %1190 = vrot.lane.b32.xlu0 %v562, 32
      %v1191 = vpop.permute.xlu0 %1190
      %1192 = vrot.lane.b32.xlu0 %v564, 32
      %v1193 = vpop.permute.xlu0 %1192
      %1194 = vrot.lane.b32.xlu0 %v566, 32
      %v1195 = vpop.permute.xlu0 %1194
      %1196 = vrot.lane.b32.xlu0 %v568, 32
      %v1197 = vpop.permute.xlu0 %1196
      %1198 = vrot.lane.b32.xlu0 %v570, 32
      %v1199 = vpop.permute.xlu0 %1198
      %1200 = vrot.lane.b32.xlu0 %v572, 32
      %v1201 = vpop.permute.xlu0 %1200
      %1202 = vrot.lane.b32.xlu0 %v574, 32
      %v1203 = vpop.permute.xlu0 %1202
      %1204 = vrot.lane.b32.xlu0 %v576, 32
      %v1205 = vpop.permute.xlu0 %1204
      %1206 = vrot.lane.b32.xlu0 %v578, 32
      %v1207 = vpop.permute.xlu0 %1206
      %1208 = vrot.lane.b32.xlu0 %v580, 32
      %v1209 = vpop.permute.xlu0 %1208
      %1210 = vrot.lane.b32.xlu0 %v582, 32
      %v1211 = vpop.permute.xlu0 %1210
      %1212 = vrot.lane.b32.xlu0 %v584, 32
      %v1213 = vpop.permute.xlu0 %1212
      %1214 = vrot.lane.b32.xlu0 %v586, 32
      %v1215 = vpop.permute.xlu0 %1214
      %1216 = vrot.lane.b32.xlu0 %v588, 32
      %v1217 = vpop.permute.xlu0 %1216
      %1218 = vrot.lane.b32.xlu0 %v590, 32
      %v1219 = vpop.permute.xlu0 %1218
      %1220 = vrot.lane.b32.xlu0 %v592, 32
      %v1221 = vpop.permute.xlu0 %1220
      %1222 = vrot.lane.b32.xlu0 %v594, 32
      %v1223 = vpop.permute.xlu0 %1222
      %1224 = vrot.lane.b32.xlu0 %v596, 32
      %v1225 = vpop.permute.xlu0 %1224
      %1226 = vrot.lane.b32.xlu0 %v598, 32
      %v1227 = vpop.permute.xlu0 %1226
      %1228 = vrot.lane.b32.xlu0 %v600, 32
      %v1229 = vpop.permute.xlu0 %1228
      %1230 = vrot.lane.b32.xlu0 %v602, 32
      %v1231 = vpop.permute.xlu0 %1230
      %1232 = vrot.lane.b32.xlu0 %v604, 32
      %v1233 = vpop.permute.xlu0 %1232
      %1234 = vrot.lane.b32.xlu0 %v606, 32
      %v1235 = vpop.permute.xlu0 %1234
      %1236 = vrot.lane.b32.xlu0 %v608, 32
      %v1237 = vpop.permute.xlu0 %1236
      %1238 = vrot.lane.b32.xlu0 %v610, 32
      %v1239 = vpop.permute.xlu0 %1238
      %1240 = vrot.lane.b32.xlu0 %v612, 32
      %v1241 = vpop.permute.xlu0 %1240
      %1242 = vrot.lane.b32.xlu0 %v614, 32
      %v1243 = vpop.permute.xlu0 %1242
      %1244 = vrot.lane.b32.xlu0 %v616, 32
      %v1245 = vpop.permute.xlu0 %1244
      %1246 = vrot.lane.b32.xlu0 %v618, 32
      %v1247 = vpop.permute.xlu0 %1246
      %1248 = vrot.lane.b32.xlu0 %v620, 32
      %v1249 = vpop.permute.xlu0 %1248
      %1250 = vrot.lane.b32.xlu0 %v622, 32
      %v1251 = vpop.permute.xlu0 %1250
      %1252 = vrot.lane.b32.xlu0 %v624, 32
      %v1253 = vpop.permute.xlu0 %1252
      %1254 = vrot.lane.b32.xlu0 %v626, 32
      %v1255 = vpop.permute.xlu0 %1254
      %1256 = vrot.lane.b32.xlu0 %v628, 32
      %v1257 = vpop.permute.xlu0 %1256
      %1258 = vrot.lane.b32.xlu0 %v1163, 32
      %v1259 = vpop.permute.xlu0 %1258
      %1260 = vrot.lane.b32.xlu0 %v1165, 32
      %v1261 = vpop.permute.xlu0 %1260
      %1262 = vrot.lane.b32.xlu0 %v1167, 32
      %v1263 = vpop.permute.xlu0 %1262
      %v1312 = vrot.slane %v476, 2
      %v1313 = vsel %vm773, %v869, %v1312
      %v1314 = vrot.slane %v477, 2
      %v1315 = vsel %vm773, %v1312, %v1314
      %v1316 = vrot.slane %v478, 2
      %v1317 = vsel %vm773, %v1314, %v1316
      %1318 = vrot.lane.b32.xlu0 %v782, 40
      %v1319 = vpop.permute.xlu0 %1318
      %1320 = vrot.lane.b32.xlu0 %v784, 40
      %v1321 = vpop.permute.xlu0 %1320
      %1322 = vrot.lane.b32.xlu0 %v786, 40
      %v1323 = vpop.permute.xlu0 %1322
      %1324 = vrot.lane.b32.xlu0 %v788, 40
      %v1325 = vpop.permute.xlu0 %1324
      %1326 = vrot.lane.b32.xlu0 %v790, 40
      %v1327 = vpop.permute.xlu0 %1326
      %1328 = vrot.lane.b32.xlu0 %v792, 40
      %v1329 = vpop.permute.xlu0 %1328
      %1330 = vrot.lane.b32.xlu0 %v794, 40
      %v1331 = vpop.permute.xlu0 %1330
      %1332 = vrot.lane.b32.xlu0 %v796, 40
      %v1333 = vpop.permute.xlu0 %1332
      %1334 = vrot.lane.b32.xlu0 %v798, 40
      %v1335 = vpop.permute.xlu0 %1334
      %1336 = vrot.lane.b32.xlu0 %v800, 40
      %v1337 = vpop.permute.xlu0 %1336
      %1338 = vrot.lane.b32.xlu0 %v802, 40
      %v1339 = vpop.permute.xlu0 %1338
      %1340 = vrot.lane.b32.xlu0 %v804, 40
      %v1341 = vpop.permute.xlu0 %1340
      %1342 = vrot.lane.b32.xlu0 %v806, 40
      %v1343 = vpop.permute.xlu0 %1342
      %1344 = vrot.lane.b32.xlu0 %v808, 40
      %v1345 = vpop.permute.xlu0 %1344
      %1346 = vrot.lane.b32.xlu0 %v810, 40
      %v1347 = vpop.permute.xlu0 %1346
      %1348 = vrot.lane.b32.xlu0 %v812, 40
      %v1349 = vpop.permute.xlu0 %1348
      %1350 = vrot.lane.b32.xlu0 %v814, 40
      %v1351 = vpop.permute.xlu0 %1350
      %1352 = vrot.lane.b32.xlu0 %v816, 40
      %v1353 = vpop.permute.xlu0 %1352
      %1354 = vrot.lane.b32.xlu0 %v818, 40
      %v1355 = vpop.permute.xlu0 %1354
      %1356 = vrot.lane.b32.xlu0 %v820, 40
      %v1357 = vpop.permute.xlu0 %1356
      %1358 = vrot.lane.b32.xlu0 %v822, 40
      %v1359 = vpop.permute.xlu0 %1358
      %1360 = vrot.lane.b32.xlu0 %v824, 40
      %v1361 = vpop.permute.xlu0 %1360
      %1362 = vrot.lane.b32.xlu0 %v826, 40
      %v1363 = vpop.permute.xlu0 %1362
      %1364 = vrot.lane.b32.xlu0 %v828, 40
      %v1365 = vpop.permute.xlu0 %1364
      %1366 = vrot.lane.b32.xlu0 %v830, 40
      %v1367 = vpop.permute.xlu0 %1366
      %1368 = vrot.lane.b32.xlu0 %v832, 40
      %v1369 = vpop.permute.xlu0 %1368
      %1370 = vrot.lane.b32.xlu0 %v834, 40
      %v1371 = vpop.permute.xlu0 %1370
      %1372 = vrot.lane.b32.xlu0 %v836, 40
      %v1373 = vpop.permute.xlu0 %1372
      %1374 = vrot.lane.b32.xlu0 %v838, 40
      %v1375 = vpop.permute.xlu0 %1374
      %1376 = vrot.lane.b32.xlu0 %v840, 40
      %v1377 = vpop.permute.xlu0 %1376
      %1378 = vrot.lane.b32.xlu0 %v842, 40
      %v1379 = vpop.permute.xlu0 %1378
      %1380 = vrot.lane.b32.xlu0 %v844, 40
      %v1381 = vpop.permute.xlu0 %1380
      %1382 = vrot.lane.b32.xlu0 %v846, 40
      %v1383 = vpop.permute.xlu0 %1382
      %1384 = vrot.lane.b32.xlu0 %v848, 40
      %v1385 = vpop.permute.xlu0 %1384
      %1386 = vrot.lane.b32.xlu0 %v850, 40
      %v1387 = vpop.permute.xlu0 %1386
      %1388 = vrot.lane.b32.xlu0 %v852, 40
      %v1389 = vpop.permute.xlu0 %1388
      %1390 = vrot.lane.b32.xlu0 %v854, 40
      %v1391 = vpop.permute.xlu0 %1390
      %1392 = vrot.lane.b32.xlu0 %v856, 40
      %v1393 = vpop.permute.xlu0 %1392
      %1394 = vrot.lane.b32.xlu0 %v858, 40
      %v1395 = vpop.permute.xlu0 %1394
      %1396 = vrot.lane.b32.xlu0 %v860, 40
      %v1397 = vpop.permute.xlu0 %1396
      %1398 = vrot.lane.b32.xlu0 %v862, 40
      %v1399 = vpop.permute.xlu0 %1398
      %1400 = vrot.lane.b32.xlu0 %v864, 40
      %v1401 = vpop.permute.xlu0 %1400
      %1402 = vrot.lane.b32.xlu0 %v866, 40
      %v1403 = vpop.permute.xlu0 %1402
      %1404 = vrot.lane.b32.xlu0 %v868, 40
      %v1405 = vpop.permute.xlu0 %1404
      %1406 = vrot.lane.b32.xlu0 %v870, 40
      %v1407 = vpop.permute.xlu0 %1406
      %1408 = vrot.lane.b32.xlu0 %v1313, 40
      %v1409 = vpop.permute.xlu0 %1408
      %1410 = vrot.lane.b32.xlu0 %v1315, 40
      %v1411 = vpop.permute.xlu0 %1410
      %1412 = vrot.lane.b32.xlu0 %v1317, 40
      %v1413 = vpop.permute.xlu0 %1412
      %1464 = vrot.lane.b32.xlu0 %v433, 48
      %v1465 = vpop.permute.xlu0 %1464
      %1466 = vrot.lane.b32.xlu0 %v434, 48
      %v1467 = vpop.permute.xlu0 %1466
      %1468 = vrot.lane.b32.xlu0 %v435, 48
      %v1469 = vpop.permute.xlu0 %1468
      %1470 = vrot.lane.b32.xlu0 %v436, 48
      %v1471 = vpop.permute.xlu0 %1470
      %1472 = vrot.lane.b32.xlu0 %v437, 48
      %v1473 = vpop.permute.xlu0 %1472
      %1474 = vrot.lane.b32.xlu0 %v438, 48
      %v1475 = vpop.permute.xlu0 %1474
      %1476 = vrot.lane.b32.xlu0 %v439, 48
      %v1477 = vpop.permute.xlu0 %1476
      %1478 = vrot.lane.b32.xlu0 %v440, 48
      %v1479 = vpop.permute.xlu0 %1478
      %1480 = vrot.lane.b32.xlu0 %v441, 48
      %v1481 = vpop.permute.xlu0 %1480
      %1482 = vrot.lane.b32.xlu0 %v442, 48
      %v1483 = vpop.permute.xlu0 %1482
      %1484 = vrot.lane.b32.xlu0 %v443, 48
      %v1485 = vpop.permute.xlu0 %1484
      %1486 = vrot.lane.b32.xlu0 %v444, 48
      %v1487 = vpop.permute.xlu0 %1486
      %1488 = vrot.lane.b32.xlu0 %v445, 48
      %v1489 = vpop.permute.xlu0 %1488
      %1490 = vrot.lane.b32.xlu0 %v446, 48
      %v1491 = vpop.permute.xlu0 %1490
      %1492 = vrot.lane.b32.xlu0 %v447, 48
      %v1493 = vpop.permute.xlu0 %1492
      %1494 = vrot.lane.b32.xlu0 %v448, 48
      %v1495 = vpop.permute.xlu0 %1494
      %1496 = vrot.lane.b32.xlu0 %v449, 48
      %v1497 = vpop.permute.xlu0 %1496
      %1498 = vrot.lane.b32.xlu0 %v450, 48
      %v1499 = vpop.permute.xlu0 %1498
      %1500 = vrot.lane.b32.xlu0 %v451, 48
      %v1501 = vpop.permute.xlu0 %1500
      %1502 = vrot.lane.b32.xlu0 %v452, 48
      %v1503 = vpop.permute.xlu0 %1502
      %1504 = vrot.lane.b32.xlu0 %v453, 48
      %v1505 = vpop.permute.xlu0 %1504
      %1506 = vrot.lane.b32.xlu0 %v454, 48
      %v1507 = vpop.permute.xlu0 %1506
      %1508 = vrot.lane.b32.xlu0 %v455, 48
      %v1509 = vpop.permute.xlu0 %1508
      %1510 = vrot.lane.b32.xlu0 %v456, 48
      %v1511 = vpop.permute.xlu0 %1510
      %1512 = vrot.lane.b32.xlu0 %v457, 48
      %v1513 = vpop.permute.xlu0 %1512
      %1514 = vrot.lane.b32.xlu0 %v458, 48
      %v1515 = vpop.permute.xlu0 %1514
      %1516 = vrot.lane.b32.xlu0 %v459, 48
      %v1517 = vpop.permute.xlu0 %1516
      %1518 = vrot.lane.b32.xlu0 %v460, 48
      %v1519 = vpop.permute.xlu0 %1518
      %1520 = vrot.lane.b32.xlu0 %v461, 48
      %v1521 = vpop.permute.xlu0 %1520
      %1522 = vrot.lane.b32.xlu0 %v462, 48
      %v1523 = vpop.permute.xlu0 %1522
      %1524 = vrot.lane.b32.xlu0 %v463, 48
      %v1525 = vpop.permute.xlu0 %1524
      %1526 = vrot.lane.b32.xlu0 %v464, 48
      %v1527 = vpop.permute.xlu0 %1526
      %1528 = vrot.lane.b32.xlu0 %v465, 48
      %v1529 = vpop.permute.xlu0 %1528
      %1530 = vrot.lane.b32.xlu0 %v466, 48
      %v1531 = vpop.permute.xlu0 %1530
      %1532 = vrot.lane.b32.xlu0 %v467, 48
      %v1533 = vpop.permute.xlu0 %1532
      %1534 = vrot.lane.b32.xlu0 %v468, 48
      %v1535 = vpop.permute.xlu0 %1534
      %1536 = vrot.lane.b32.xlu0 %v469, 48
      %v1537 = vpop.permute.xlu0 %1536
      %1538 = vrot.lane.b32.xlu0 %v470, 48
      %v1539 = vpop.permute.xlu0 %1538
      %1540 = vrot.lane.b32.xlu0 %v471, 48
      %v1541 = vpop.permute.xlu0 %1540
      %1542 = vrot.lane.b32.xlu0 %v472, 48
      %v1543 = vpop.permute.xlu0 %1542
      %1544 = vrot.lane.b32.xlu0 %v473, 48
      %v1545 = vpop.permute.xlu0 %1544
      %1546 = vrot.lane.b32.xlu0 %v474, 48
      %v1547 = vpop.permute.xlu0 %1546
      %1548 = vrot.lane.b32.xlu0 %v475, 48
      %v1549 = vpop.permute.xlu0 %1548
      %1550 = vrot.lane.b32.xlu0 %v476, 48
      %v1551 = vpop.permute.xlu0 %1550
      %1552 = vrot.lane.b32.xlu0 %v477, 48
      %v1553 = vpop.permute.xlu0 %1552
      %1554 = vrot.lane.b32.xlu0 %v478, 48
      %v1555 = vpop.permute.xlu0 %1554
      %1556 = vrot.lane.b32.xlu0 %v479, 48
      %v1557 = vpop.permute.xlu0 %1556
      %1558 = vrot.lane.b32.xlu0 %v480, 48
      %v1559 = vpop.permute.xlu0 %1558
      %v1609 = vrot.slane %v479, 1
      %v1610 = vsel %vm531, %v1166, %v1609
      %v1611 = vrot.slane %v480, 1
      %v1612 = vsel %vm531, %v1609, %v1611
      %v1613 = vrot.slane %v481, 1
      %v1614 = vsel %vm531, %v1611, %v1613
      %1615 = vrot.lane.b32.xlu0 %v546, 56
      %v1616 = vpop.permute.xlu0 %1615
      %1617 = vrot.lane.b32.xlu0 %v548, 56
      %v1618 = vpop.permute.xlu0 %1617
      %1619 = vrot.lane.b32.xlu0 %v550, 56
      %v1620 = vpop.permute.xlu0 %1619
      %1621 = vrot.lane.b32.xlu0 %v552, 56
      %v1622 = vpop.permute.xlu0 %1621
      %1623 = vrot.lane.b32.xlu0 %v554, 56
      %v1624 = vpop.permute.xlu0 %1623
      %1625 = vrot.lane.b32.xlu0 %v556, 56
      %v1626 = vpop.permute.xlu0 %1625
      %1627 = vrot.lane.b32.xlu0 %v558, 56
      %v1628 = vpop.permute.xlu0 %1627
      %1629 = vrot.lane.b32.xlu0 %v560, 56
      %v1630 = vpop.permute.xlu0 %1629
      %1631 = vrot.lane.b32.xlu0 %v562, 56
      %v1632 = vpop.permute.xlu0 %1631
      %1633 = vrot.lane.b32.xlu0 %v564, 56
      %v1634 = vpop.permute.xlu0 %1633
      %1635 = vrot.lane.b32.xlu0 %v566, 56
      %v1636 = vpop.permute.xlu0 %1635
      %1637 = vrot.lane.b32.xlu0 %v568, 56
      %v1638 = vpop.permute.xlu0 %1637
      %1639 = vrot.lane.b32.xlu0 %v570, 56
      %v1640 = vpop.permute.xlu0 %1639
      %1641 = vrot.lane.b32.xlu0 %v572, 56
      %v1642 = vpop.permute.xlu0 %1641
      %1643 = vrot.lane.b32.xlu0 %v574, 56
      %v1644 = vpop.permute.xlu0 %1643
      %1645 = vrot.lane.b32.xlu0 %v576, 56
      %v1646 = vpop.permute.xlu0 %1645
      %1647 = vrot.lane.b32.xlu0 %v578, 56
      %v1648 = vpop.permute.xlu0 %1647
      %1649 = vrot.lane.b32.xlu0 %v580, 56
      %v1650 = vpop.permute.xlu0 %1649
      %1651 = vrot.lane.b32.xlu0 %v582, 56
      %v1652 = vpop.permute.xlu0 %1651
      %1653 = vrot.lane.b32.xlu0 %v584, 56
      %v1654 = vpop.permute.xlu0 %1653
      %1655 = vrot.lane.b32.xlu0 %v586, 56
      %v1656 = vpop.permute.xlu0 %1655
      %1657 = vrot.lane.b32.xlu0 %v588, 56
      %v1658 = vpop.permute.xlu0 %1657
      %1659 = vrot.lane.b32.xlu0 %v590, 56
      %v1660 = vpop.permute.xlu0 %1659
      %1661 = vrot.lane.b32.xlu0 %v592, 56
      %v1662 = vpop.permute.xlu0 %1661
      %1663 = vrot.lane.b32.xlu0 %v594, 56
      %v1664 = vpop.permute.xlu0 %1663
      %1665 = vrot.lane.b32.xlu0 %v596, 56
      %v1666 = vpop.permute.xlu0 %1665
      %1667 = vrot.lane.b32.xlu0 %v598, 56
      %v1668 = vpop.permute.xlu0 %1667
      %1669 = vrot.lane.b32.xlu0 %v600, 56
      %v1670 = vpop.permute.xlu0 %1669
      %1671 = vrot.lane.b32.xlu0 %v602, 56
      %v1672 = vpop.permute.xlu0 %1671
      %1673 = vrot.lane.b32.xlu0 %v604, 56
      %v1674 = vpop.permute.xlu0 %1673
      %1675 = vrot.lane.b32.xlu0 %v606, 56
      %v1676 = vpop.permute.xlu0 %1675
      %1677 = vrot.lane.b32.xlu0 %v608, 56
      %v1678 = vpop.permute.xlu0 %1677
      %1679 = vrot.lane.b32.xlu0 %v610, 56
      %v1680 = vpop.permute.xlu0 %1679
      %1681 = vrot.lane.b32.xlu0 %v612, 56
      %v1682 = vpop.permute.xlu0 %1681
      %1683 = vrot.lane.b32.xlu0 %v614, 56
      %v1684 = vpop.permute.xlu0 %1683
      %1685 = vrot.lane.b32.xlu0 %v616, 56
      %v1686 = vpop.permute.xlu0 %1685
      %1687 = vrot.lane.b32.xlu0 %v618, 56
      %v1688 = vpop.permute.xlu0 %1687
      %1689 = vrot.lane.b32.xlu0 %v620, 56
      %v1690 = vpop.permute.xlu0 %1689
      %1691 = vrot.lane.b32.xlu0 %v622, 56
      %v1692 = vpop.permute.xlu0 %1691
      %1693 = vrot.lane.b32.xlu0 %v624, 56
      %v1694 = vpop.permute.xlu0 %1693
      %1695 = vrot.lane.b32.xlu0 %v626, 56
      %v1696 = vpop.permute.xlu0 %1695
      %1697 = vrot.lane.b32.xlu0 %v628, 56
      %v1698 = vpop.permute.xlu0 %1697
      %1699 = vrot.lane.b32.xlu0 %v1163, 56
      %v1700 = vpop.permute.xlu0 %1699
      %1701 = vrot.lane.b32.xlu0 %v1165, 56
      %v1702 = vpop.permute.xlu0 %1701
      %1703 = vrot.lane.b32.xlu0 %v1167, 56
      %v1704 = vpop.permute.xlu0 %1703
      %1705 = vrot.lane.b32.xlu0 %v1610, 56
      %v1706 = vpop.permute.xlu0 %1705
      %1707 = vrot.lane.b32.xlu0 %v1612, 56
      %v1708 = vpop.permute.xlu0 %1707
      %1709 = vrot.lane.b32.xlu0 %v1614, 56
      %v1710 = vpop.permute.xlu0 %1709
      %v1759 = vrot.slane %v479, 2
      %v1760 = vsel %vm773, %v1316, %v1759
      %v1761 = vrot.slane %v480, 2
      %v1762 = vsel %vm773, %v1759, %v1761
      %v1763 = vrot.slane %v481, 2
      %v1764 = vsel %vm773, %v1761, %v1763
      %1765 = vrot.lane.b32.xlu0 %v788, 64
      %v1766 = vpop.permute.xlu0 %1765
      %1767 = vrot.lane.b32.xlu0 %v790, 64
      %v1768 = vpop.permute.xlu0 %1767
      %1769 = vrot.lane.b32.xlu0 %v792, 64
      %v1770 = vpop.permute.xlu0 %1769
      %1771 = vrot.lane.b32.xlu0 %v794, 64
      %v1772 = vpop.permute.xlu0 %1771
      %1773 = vrot.lane.b32.xlu0 %v796, 64
      %v1774 = vpop.permute.xlu0 %1773
      %1775 = vrot.lane.b32.xlu0 %v798, 64
      %v1776 = vpop.permute.xlu0 %1775
      %1777 = vrot.lane.b32.xlu0 %v800, 64
      %v1778 = vpop.permute.xlu0 %1777
      %1779 = vrot.lane.b32.xlu0 %v802, 64
      %v1780 = vpop.permute.xlu0 %1779
      %1781 = vrot.lane.b32.xlu0 %v804, 64
      %v1782 = vpop.permute.xlu0 %1781
      %1783 = vrot.lane.b32.xlu0 %v806, 64
      %v1784 = vpop.permute.xlu0 %1783
      %1785 = vrot.lane.b32.xlu0 %v808, 64
      %v1786 = vpop.permute.xlu0 %1785
      %1787 = vrot.lane.b32.xlu0 %v810, 64
      %v1788 = vpop.permute.xlu0 %1787
      %1789 = vrot.lane.b32.xlu0 %v812, 64
      %v1790 = vpop.permute.xlu0 %1789
      %1791 = vrot.lane.b32.xlu0 %v814, 64
      %v1792 = vpop.permute.xlu0 %1791
      %1793 = vrot.lane.b32.xlu0 %v816, 64
      %v1794 = vpop.permute.xlu0 %1793
      %1795 = vrot.lane.b32.xlu0 %v818, 64
      %v1796 = vpop.permute.xlu0 %1795
      %1797 = vrot.lane.b32.xlu0 %v820, 64
      %v1798 = vpop.permute.xlu0 %1797
      %1799 = vrot.lane.b32.xlu0 %v822, 64
      %v1800 = vpop.permute.xlu0 %1799
      %1801 = vrot.lane.b32.xlu0 %v824, 64
      %v1802 = vpop.permute.xlu0 %1801
      %1803 = vrot.lane.b32.xlu0 %v826, 64
      %v1804 = vpop.permute.xlu0 %1803
      %1805 = vrot.lane.b32.xlu0 %v828, 64
      %v1806 = vpop.permute.xlu0 %1805
      %1807 = vrot.lane.b32.xlu0 %v830, 64
      %v1808 = vpop.permute.xlu0 %1807
      %1809 = vrot.lane.b32.xlu0 %v832, 64
      %v1810 = vpop.permute.xlu0 %1809
      %1811 = vrot.lane.b32.xlu0 %v834, 64
      %v1812 = vpop.permute.xlu0 %1811
      %1813 = vrot.lane.b32.xlu0 %v836, 64
      %v1814 = vpop.permute.xlu0 %1813
      %1815 = vrot.lane.b32.xlu0 %v838, 64
      %v1816 = vpop.permute.xlu0 %1815
      %1817 = vrot.lane.b32.xlu0 %v840, 64
      %v1818 = vpop.permute.xlu0 %1817
      %1819 = vrot.lane.b32.xlu0 %v842, 64
      %v1820 = vpop.permute.xlu0 %1819
      %1821 = vrot.lane.b32.xlu0 %v844, 64
      %v1822 = vpop.permute.xlu0 %1821
      %1823 = vrot.lane.b32.xlu0 %v846, 64
      %v1824 = vpop.permute.xlu0 %1823
      %1825 = vrot.lane.b32.xlu0 %v848, 64
      %v1826 = vpop.permute.xlu0 %1825
      %1827 = vrot.lane.b32.xlu0 %v850, 64
      %v1828 = vpop.permute.xlu0 %1827
      %1829 = vrot.lane.b32.xlu0 %v852, 64
      %v1830 = vpop.permute.xlu0 %1829
      %1831 = vrot.lane.b32.xlu0 %v854, 64
      %v1832 = vpop.permute.xlu0 %1831
      %1833 = vrot.lane.b32.xlu0 %v856, 64
      %v1834 = vpop.permute.xlu0 %1833
      %1835 = vrot.lane.b32.xlu0 %v858, 64
      %v1836 = vpop.permute.xlu0 %1835
      %1837 = vrot.lane.b32.xlu0 %v860, 64
      %v1838 = vpop.permute.xlu0 %1837
      %1839 = vrot.lane.b32.xlu0 %v862, 64
      %v1840 = vpop.permute.xlu0 %1839
      %1841 = vrot.lane.b32.xlu0 %v864, 64
      %v1842 = vpop.permute.xlu0 %1841
      %1843 = vrot.lane.b32.xlu0 %v866, 64
      %v1844 = vpop.permute.xlu0 %1843
      %1845 = vrot.lane.b32.xlu0 %v868, 64
      %v1846 = vpop.permute.xlu0 %1845
      %1847 = vrot.lane.b32.xlu0 %v870, 64
      %v1848 = vpop.permute.xlu0 %1847
      %1849 = vrot.lane.b32.xlu0 %v1313, 64
      %v1850 = vpop.permute.xlu0 %1849
      %1851 = vrot.lane.b32.xlu0 %v1315, 64
      %v1852 = vpop.permute.xlu0 %1851
      %1853 = vrot.lane.b32.xlu0 %v1317, 64
      %v1854 = vpop.permute.xlu0 %1853
      %1855 = vrot.lane.b32.xlu0 %v1760, 64
      %v1856 = vpop.permute.xlu0 %1855
      %1857 = vrot.lane.b32.xlu0 %v1762, 64
      %v1858 = vpop.permute.xlu0 %1857
      %1859 = vrot.lane.b32.xlu0 %v1764, 64
      %v1860 = vpop.permute.xlu0 %1859
      %vm1909 = vcmask 64512
      %v1910 = vsel %vm1909, %v427, %v630
      %v1911 = vsel %vm1909, %v428, %v632
      %v1912 = vsel %vm1909, %v429, %v634
      %v1913 = vsel %vm1909, %v430, %v636
      %v1914 = vsel %vm1909, %v431, %v638
      %v1915 = vsel %vm1909, %v432, %v640
      %v1916 = vsel %vm1909, %v433, %v642
      %v1917 = vsel %vm1909, %v434, %v644
      %v1918 = vsel %vm1909, %v435, %v646
      %v1919 = vsel %vm1909, %v436, %v648
      %v1920 = vsel %vm1909, %v437, %v650
      %v1921 = vsel %vm1909, %v438, %v652
      %v1922 = vsel %vm1909, %v439, %v654
      %v1923 = vsel %vm1909, %v440, %v656
      %v1924 = vsel %vm1909, %v441, %v658
      %v1925 = vsel %vm1909, %v442, %v660
      %v1926 = vsel %vm1909, %v443, %v662
      %v1927 = vsel %vm1909, %v444, %v664
      %v1928 = vsel %vm1909, %v445, %v666
      %v1929 = vsel %vm1909, %v446, %v668
      %v1930 = vsel %vm1909, %v447, %v670
      %v1931 = vsel %vm1909, %v448, %v672
      %v1932 = vsel %vm1909, %v449, %v674
      %v1933 = vsel %vm1909, %v450, %v676
      %v1934 = vsel %vm1909, %v451, %v678
      %v1935 = vsel %vm1909, %v452, %v680
      %v1936 = vsel %vm1909, %v453, %v682
      %v1937 = vsel %vm1909, %v454, %v684
      %v1938 = vsel %vm1909, %v455, %v686
      %v1939 = vsel %vm1909, %v456, %v688
      %v1940 = vsel %vm1909, %v457, %v690
      %v1941 = vsel %vm1909, %v458, %v692
      %v1942 = vsel %vm1909, %v459, %v694
      %v1943 = vsel %vm1909, %v460, %v696
      %v1944 = vsel %vm1909, %v461, %v698
      %v1945 = vsel %vm1909, %v462, %v700
      %v1946 = vsel %vm1909, %v463, %v702
      %v1947 = vsel %vm1909, %v464, %v704
      %v1948 = vsel %vm1909, %v465, %v706
      %v1949 = vsel %vm1909, %v466, %v708
      %v1950 = vsel %vm1909, %v467, %v710
      %v1951 = vsel %vm1909, %v468, %v712
      %v1952 = vsel %vm1909, %v469, %v714
      %v1953 = vsel %vm1909, %v470, %v716
      %v1954 = vsel %vm1909, %v471, %v718
      %v1955 = vsel %vm1909, %v472, %v720
      %v1956 = vsel %vm1909, %v473, %v722
      %v1957 = vsel %vm1909, %v474, %v724
      %vm1958 = vcmask 130048
      %v1959 = vsel %vm1958, %v1910, %v872
      %v1960 = vsel %vm1958, %v1911, %v874
      %v1961 = vsel %vm1958, %v1912, %v876
      %v1962 = vsel %vm1958, %v1913, %v878
      %v1963 = vsel %vm1958, %v1914, %v880
      %v1964 = vsel %vm1958, %v1915, %v882
      %v1965 = vsel %vm1958, %v1916, %v884
      %v1966 = vsel %vm1958, %v1917, %v886
      %v1967 = vsel %vm1958, %v1918, %v888
      %v1968 = vsel %vm1958, %v1919, %v890
      %v1969 = vsel %vm1958, %v1920, %v892
      %v1970 = vsel %vm1958, %v1921, %v894
      %v1971 = vsel %vm1958, %v1922, %v896
      %v1972 = vsel %vm1958, %v1923, %v898
      %v1973 = vsel %vm1958, %v1924, %v900
      %v1974 = vsel %vm1958, %v1925, %v902
      %v1975 = vsel %vm1958, %v1926, %v904
      %v1976 = vsel %vm1958, %v1927, %v906
      %v1977 = vsel %vm1958, %v1928, %v908
      %v1978 = vsel %vm1958, %v1929, %v910
      %v1979 = vsel %vm1958, %v1930, %v912
      %v1980 = vsel %vm1958, %v1931, %v914
      %v1981 = vsel %vm1958, %v1932, %v916
      %v1982 = vsel %vm1958, %v1933, %v918
      %v1983 = vsel %vm1958, %v1934, %v920
      %v1984 = vsel %vm1958, %v1935, %v922
      %v1985 = vsel %vm1958, %v1936, %v924
      %v1986 = vsel %vm1958, %v1937, %v926
      %v1987 = vsel %vm1958, %v1938, %v928
      %v1988 = vsel %vm1958, %v1939, %v930
      %v1989 = vsel %vm1958, %v1940, %v932
      %v1990 = vsel %vm1958, %v1941, %v934
      %v1991 = vsel %vm1958, %v1942, %v936
      %v1992 = vsel %vm1958, %v1943, %v938
      %v1993 = vsel %vm1958, %v1944, %v940
      %v1994 = vsel %vm1958, %v1945, %v942
      %v1995 = vsel %vm1958, %v1946, %v944
      %v1996 = vsel %vm1958, %v1947, %v946
      %v1997 = vsel %vm1958, %v1948, %v948
      %v1998 = vsel %vm1958, %v1949, %v950
      %v1999 = vsel %vm1958, %v1950, %v952
      %v2000 = vsel %vm1958, %v1951, %v954
      %v2001 = vsel %vm1958, %v1952, %v956
      %v2002 = vsel %vm1958, %v1953, %v958
      %v2003 = vsel %vm1958, %v1954, %v960
      %v2004 = vsel %vm1958, %v1955, %v962
      %v2005 = vsel %vm1958, %v1956, %v964
      %v2006 = vsel %vm1958, %v1957, %v966
      %vm2007 = vcmask 195584
      %v2008 = vsel %vm2007, %v1959, %v1018
      %v2009 = vsel %vm2007, %v1960, %v1020
      %v2010 = vsel %vm2007, %v1961, %v1022
      %v2011 = vsel %vm2007, %v1962, %v1024
      %v2012 = vsel %vm2007, %v1963, %v1026
      %v2013 = vsel %vm2007, %v1964, %v1028
      %v2014 = vsel %vm2007, %v1965, %v1030
      %v2015 = vsel %vm2007, %v1966, %v1032
      %v2016 = vsel %vm2007, %v1967, %v1034
      %v2017 = vsel %vm2007, %v1968, %v1036
      %v2018 = vsel %vm2007, %v1969, %v1038
      %v2019 = vsel %vm2007, %v1970, %v1040
      %v2020 = vsel %vm2007, %v1971, %v1042
      %v2021 = vsel %vm2007, %v1972, %v1044
      %v2022 = vsel %vm2007, %v1973, %v1046
      %v2023 = vsel %vm2007, %v1974, %v1048
      %v2024 = vsel %vm2007, %v1975, %v1050
      %v2025 = vsel %vm2007, %v1976, %v1052
      %v2026 = vsel %vm2007, %v1977, %v1054
      %v2027 = vsel %vm2007, %v1978, %v1056
      %v2028 = vsel %vm2007, %v1979, %v1058
      %v2029 = vsel %vm2007, %v1980, %v1060
      %v2030 = vsel %vm2007, %v1981, %v1062
      %v2031 = vsel %vm2007, %v1982, %v1064
      %v2032 = vsel %vm2007, %v1983, %v1066
      %v2033 = vsel %vm2007, %v1984, %v1068
      %v2034 = vsel %vm2007, %v1985, %v1070
      %v2035 = vsel %vm2007, %v1986, %v1072
      %v2036 = vsel %vm2007, %v1987, %v1074
      %v2037 = vsel %vm2007, %v1988, %v1076
      %v2038 = vsel %vm2007, %v1989, %v1078
      %v2039 = vsel %vm2007, %v1990, %v1080
      %v2040 = vsel %vm2007, %v1991, %v1082
      %v2041 = vsel %vm2007, %v1992, %v1084
      %v2042 = vsel %vm2007, %v1993, %v1086
      %v2043 = vsel %vm2007, %v1994, %v1088
      %v2044 = vsel %vm2007, %v1995, %v1090
      %v2045 = vsel %vm2007, %v1996, %v1092
      %v2046 = vsel %vm2007, %v1997, %v1094
      %v2047 = vsel %vm2007, %v1998, %v1096
      %v2048 = vsel %vm2007, %v1999, %v1098
      %v2049 = vsel %vm2007, %v2000, %v1100
      %v2050 = vsel %vm2007, %v2001, %v1102
      %v2051 = vsel %vm2007, %v2002, %v1104
      %v2052 = vsel %vm2007, %v2003, %v1106
      %v2053 = vsel %vm2007, %v2004, %v1108
      %v2054 = vsel %vm2007, %v2005, %v1110
      %v2055 = vsel %vm2007, %v2006, %v1112
      %vm2056 = vcmask 261120
      %v2057 = vsel %vm2056, %v2008, %v1169
      %v2058 = vsel %vm2056, %v2009, %v1171
      %v2059 = vsel %vm2056, %v2010, %v1173
      %v2060 = vsel %vm2056, %v2011, %v1175
      %v2061 = vsel %vm2056, %v2012, %v1177
      %v2062 = vsel %vm2056, %v2013, %v1179
      %v2063 = vsel %vm2056, %v2014, %v1181
      %v2064 = vsel %vm2056, %v2015, %v1183
      %v2065 = vsel %vm2056, %v2016, %v1185
      %v2066 = vsel %vm2056, %v2017, %v1187
      %v2067 = vsel %vm2056, %v2018, %v1189
      %v2068 = vsel %vm2056, %v2019, %v1191
      %v2069 = vsel %vm2056, %v2020, %v1193
      %v2070 = vsel %vm2056, %v2021, %v1195
      %v2071 = vsel %vm2056, %v2022, %v1197
      %v2072 = vsel %vm2056, %v2023, %v1199
      %v2073 = vsel %vm2056, %v2024, %v1201
      %v2074 = vsel %vm2056, %v2025, %v1203
      %v2075 = vsel %vm2056, %v2026, %v1205
      %v2076 = vsel %vm2056, %v2027, %v1207
      %v2077 = vsel %vm2056, %v2028, %v1209
      %v2078 = vsel %vm2056, %v2029, %v1211
      %v2079 = vsel %vm2056, %v2030, %v1213
      %v2080 = vsel %vm2056, %v2031, %v1215
      %v2081 = vsel %vm2056, %v2032, %v1217
      %v2082 = vsel %vm2056, %v2033, %v1219
      %v2083 = vsel %vm2056, %v2034, %v1221
      %v2084 = vsel %vm2056, %v2035, %v1223
      %v2085 = vsel %vm2056, %v2036, %v1225
      %v2086 = vsel %vm2056, %v2037, %v1227
      %v2087 = vsel %vm2056, %v2038, %v1229
      %v2088 = vsel %vm2056, %v2039, %v1231
      %v2089 = vsel %vm2056, %v2040, %v1233
      %v2090 = vsel %vm2056, %v2041, %v1235
      %v2091 = vsel %vm2056, %v2042, %v1237
      %v2092 = vsel %vm2056, %v2043, %v1239
      %v2093 = vsel %vm2056, %v2044, %v1241
      %v2094 = vsel %vm2056, %v2045, %v1243
      %v2095 = vsel %vm2056, %v2046, %v1245
      %v2096 = vsel %vm2056, %v2047, %v1247
      %v2097 = vsel %vm2056, %v2048, %v1249
      %v2098 = vsel %vm2056, %v2049, %v1251
      %v2099 = vsel %vm2056, %v2050, %v1253
      %v2100 = vsel %vm2056, %v2051, %v1255
      %v2101 = vsel %vm2056, %v2052, %v1257
      %v2102 = vsel %vm2056, %v2053, %v1259
      %v2103 = vsel %vm2056, %v2054, %v1261
      %v2104 = vsel %vm2056, %v2055, %v1263
      %vm2105 = vcmask 326656
      %v2106 = vsel %vm2105, %v2057, %v1319
      %v2107 = vsel %vm2105, %v2058, %v1321
      %v2108 = vsel %vm2105, %v2059, %v1323
      %v2109 = vsel %vm2105, %v2060, %v1325
      %v2110 = vsel %vm2105, %v2061, %v1327
      %v2111 = vsel %vm2105, %v2062, %v1329
      %v2112 = vsel %vm2105, %v2063, %v1331
      %v2113 = vsel %vm2105, %v2064, %v1333
      %v2114 = vsel %vm2105, %v2065, %v1335
      %v2115 = vsel %vm2105, %v2066, %v1337
      %v2116 = vsel %vm2105, %v2067, %v1339
      %v2117 = vsel %vm2105, %v2068, %v1341
      %v2118 = vsel %vm2105, %v2069, %v1343
      %v2119 = vsel %vm2105, %v2070, %v1345
      %v2120 = vsel %vm2105, %v2071, %v1347
      %v2121 = vsel %vm2105, %v2072, %v1349
      %v2122 = vsel %vm2105, %v2073, %v1351
      %v2123 = vsel %vm2105, %v2074, %v1353
      %v2124 = vsel %vm2105, %v2075, %v1355
      %v2125 = vsel %vm2105, %v2076, %v1357
      %v2126 = vsel %vm2105, %v2077, %v1359
      %v2127 = vsel %vm2105, %v2078, %v1361
      %v2128 = vsel %vm2105, %v2079, %v1363
      %v2129 = vsel %vm2105, %v2080, %v1365
      %v2130 = vsel %vm2105, %v2081, %v1367
      %v2131 = vsel %vm2105, %v2082, %v1369
      %v2132 = vsel %vm2105, %v2083, %v1371
      %v2133 = vsel %vm2105, %v2084, %v1373
      %v2134 = vsel %vm2105, %v2085, %v1375
      %v2135 = vsel %vm2105, %v2086, %v1377
      %v2136 = vsel %vm2105, %v2087, %v1379
      %v2137 = vsel %vm2105, %v2088, %v1381
      %v2138 = vsel %vm2105, %v2089, %v1383
      %v2139 = vsel %vm2105, %v2090, %v1385
      %v2140 = vsel %vm2105, %v2091, %v1387
      %v2141 = vsel %vm2105, %v2092, %v1389
      %v2142 = vsel %vm2105, %v2093, %v1391
      %v2143 = vsel %vm2105, %v2094, %v1393
      %v2144 = vsel %vm2105, %v2095, %v1395
      %v2145 = vsel %vm2105, %v2096, %v1397
      %v2146 = vsel %vm2105, %v2097, %v1399
      %v2147 = vsel %vm2105, %v2098, %v1401
      %v2148 = vsel %vm2105, %v2099, %v1403
      %v2149 = vsel %vm2105, %v2100, %v1405
      %v2150 = vsel %vm2105, %v2101, %v1407
      %v2151 = vsel %vm2105, %v2102, %v1409
      %v2152 = vsel %vm2105, %v2103, %v1411
      %v2153 = vsel %vm2105, %v2104, %v1413
      %vm2154 = vcmask 392192
      %v2155 = vsel %vm2154, %v2106, %v1465
      %v2156 = vsel %vm2154, %v2107, %v1467
      %v2157 = vsel %vm2154, %v2108, %v1469
      %v2158 = vsel %vm2154, %v2109, %v1471
      %v2159 = vsel %vm2154, %v2110, %v1473
      %v2160 = vsel %vm2154, %v2111, %v1475
      %v2161 = vsel %vm2154, %v2112, %v1477
      %v2162 = vsel %vm2154, %v2113, %v1479
      %v2163 = vsel %vm2154, %v2114, %v1481
      %v2164 = vsel %vm2154, %v2115, %v1483
      %v2165 = vsel %vm2154, %v2116, %v1485
      %v2166 = vsel %vm2154, %v2117, %v1487
      %v2167 = vsel %vm2154, %v2118, %v1489
      %v2168 = vsel %vm2154, %v2119, %v1491
      %v2169 = vsel %vm2154, %v2120, %v1493
      %v2170 = vsel %vm2154, %v2121, %v1495
      %v2171 = vsel %vm2154, %v2122, %v1497
      %v2172 = vsel %vm2154, %v2123, %v1499
      %v2173 = vsel %vm2154, %v2124, %v1501
      %v2174 = vsel %vm2154, %v2125, %v1503
      %v2175 = vsel %vm2154, %v2126, %v1505
      %v2176 = vsel %vm2154, %v2127, %v1507
      %v2177 = vsel %vm2154, %v2128, %v1509
      %v2178 = vsel %vm2154, %v2129, %v1511
      %v2179 = vsel %vm2154, %v2130, %v1513
      %v2180 = vsel %vm2154, %v2131, %v1515
      %v2181 = vsel %vm2154, %v2132, %v1517
      %v2182 = vsel %vm2154, %v2133, %v1519
      %v2183 = vsel %vm2154, %v2134, %v1521
      %v2184 = vsel %vm2154, %v2135, %v1523
      %v2185 = vsel %vm2154, %v2136, %v1525
      %v2186 = vsel %vm2154, %v2137, %v1527
      %v2187 = vsel %vm2154, %v2138, %v1529
      %v2188 = vsel %vm2154, %v2139, %v1531
      %v2189 = vsel %vm2154, %v2140, %v1533
      %v2190 = vsel %vm2154, %v2141, %v1535
      %v2191 = vsel %vm2154, %v2142, %v1537
      %v2192 = vsel %vm2154, %v2143, %v1539
      %v2193 = vsel %vm2154, %v2144, %v1541
      %v2194 = vsel %vm2154, %v2145, %v1543
      %v2195 = vsel %vm2154, %v2146, %v1545
      %v2196 = vsel %vm2154, %v2147, %v1547
      %v2197 = vsel %vm2154, %v2148, %v1549
      %v2198 = vsel %vm2154, %v2149, %v1551
      %v2199 = vsel %vm2154, %v2150, %v1553
      %v2200 = vsel %vm2154, %v2151, %v1555
      %v2201 = vsel %vm2154, %v2152, %v1557
      %v2202 = vsel %vm2154, %v2153, %v1559
      %vm2203 = vcmask 457728
      %v2204 = vsel %vm2203, %v2155, %v1616
      %v2205 = vsel %vm2203, %v2156, %v1618
      %v2206 = vsel %vm2203, %v2157, %v1620
      %v2207 = vsel %vm2203, %v2158, %v1622
      %v2208 = vsel %vm2203, %v2159, %v1624
      %v2209 = vsel %vm2203, %v2160, %v1626
      %v2210 = vsel %vm2203, %v2161, %v1628
      %v2211 = vsel %vm2203, %v2162, %v1630
      %v2212 = vsel %vm2203, %v2163, %v1632
      %v2213 = vsel %vm2203, %v2164, %v1634
      %v2214 = vsel %vm2203, %v2165, %v1636
      %v2215 = vsel %vm2203, %v2166, %v1638
      %v2216 = vsel %vm2203, %v2167, %v1640
      %v2217 = vsel %vm2203, %v2168, %v1642
      %v2218 = vsel %vm2203, %v2169, %v1644
      %v2219 = vsel %vm2203, %v2170, %v1646
      %v2220 = vsel %vm2203, %v2171, %v1648
      %v2221 = vsel %vm2203, %v2172, %v1650
      %v2222 = vsel %vm2203, %v2173, %v1652
      %v2223 = vsel %vm2203, %v2174, %v1654
      %v2224 = vsel %vm2203, %v2175, %v1656
      %v2225 = vsel %vm2203, %v2176, %v1658
      %v2226 = vsel %vm2203, %v2177, %v1660
      %v2227 = vsel %vm2203, %v2178, %v1662
      %v2228 = vsel %vm2203, %v2179, %v1664
      %v2229 = vsel %vm2203, %v2180, %v1666
      %v2230 = vsel %vm2203, %v2181, %v1668
      %v2231 = vsel %vm2203, %v2182, %v1670
      %v2232 = vsel %vm2203, %v2183, %v1672
      %v2233 = vsel %vm2203, %v2184, %v1674
      %v2234 = vsel %vm2203, %v2185, %v1676
      %v2235 = vsel %vm2203, %v2186, %v1678
      %v2236 = vsel %vm2203, %v2187, %v1680
      %v2237 = vsel %vm2203, %v2188, %v1682
      %v2238 = vsel %vm2203, %v2189, %v1684
      %v2239 = vsel %vm2203, %v2190, %v1686
      %v2240 = vsel %vm2203, %v2191, %v1688
      %v2241 = vsel %vm2203, %v2192, %v1690
      %v2242 = vsel %vm2203, %v2193, %v1692
      %v2243 = vsel %vm2203, %v2194, %v1694
      %v2244 = vsel %vm2203, %v2195, %v1696
      %v2245 = vsel %vm2203, %v2196, %v1698
      %v2246 = vsel %vm2203, %v2197, %v1700
      %v2247 = vsel %vm2203, %v2198, %v1702
      %v2248 = vsel %vm2203, %v2199, %v1704
      %v2249 = vsel %vm2203, %v2200, %v1706
      %v2250 = vsel %vm2203, %v2201, %v1708
      %v2251 = vsel %vm2203, %v2202, %v1710
      %vm2252 = vcmask 523264
      %v2253 = vsel %vm2252, %v2204, %v1766
      %v2254 = vsel %vm2252, %v2205, %v1768
      %v2255 = vsel %vm2252, %v2206, %v1770
      %v2256 = vsel %vm2252, %v2207, %v1772
      %v2257 = vsel %vm2252, %v2208, %v1774
      %v2258 = vsel %vm2252, %v2209, %v1776
      %v2259 = vsel %vm2252, %v2210, %v1778
      %v2260 = vsel %vm2252, %v2211, %v1780
      %v2261 = vsel %vm2252, %v2212, %v1782
      %v2262 = vsel %vm2252, %v2213, %v1784
      %v2263 = vsel %vm2252, %v2214, %v1786
      %v2264 = vsel %vm2252, %v2215, %v1788
      %v2265 = vsel %vm2252, %v2216, %v1790
      %v2266 = vsel %vm2252, %v2217, %v1792
      %v2267 = vsel %vm2252, %v2218, %v1794
      %v2268 = vsel %vm2252, %v2219, %v1796
      %v2269 = vsel %vm2252, %v2220, %v1798
      %v2270 = vsel %vm2252, %v2221, %v1800
      %v2271 = vsel %vm2252, %v2222, %v1802
      %v2272 = vsel %vm2252, %v2223, %v1804
      %v2273 = vsel %vm2252, %v2224, %v1806
      %v2274 = vsel %vm2252, %v2225, %v1808
      %v2275 = vsel %vm2252, %v2226, %v1810
      %v2276 = vsel %vm2252, %v2227, %v1812
      %v2277 = vsel %vm2252, %v2228, %v1814
      %v2278 = vsel %vm2252, %v2229, %v1816
      %v2279 = vsel %vm2252, %v2230, %v1818
      %v2280 = vsel %vm2252, %v2231, %v1820
      %v2281 = vsel %vm2252, %v2232, %v1822
      %v2282 = vsel %vm2252, %v2233, %v1824
      %v2283 = vsel %vm2252, %v2234, %v1826
      %v2284 = vsel %vm2252, %v2235, %v1828
      %v2285 = vsel %vm2252, %v2236, %v1830
      %v2286 = vsel %vm2252, %v2237, %v1832
      %v2287 = vsel %vm2252, %v2238, %v1834
      %v2288 = vsel %vm2252, %v2239, %v1836
      %v2289 = vsel %vm2252, %v2240, %v1838
      %v2290 = vsel %vm2252, %v2241, %v1840
      %v2291 = vsel %vm2252, %v2242, %v1842
      %v2292 = vsel %vm2252, %v2243, %v1844
      %v2293 = vsel %vm2252, %v2244, %v1846
      %v2294 = vsel %vm2252, %v2245, %v1848
      %v2295 = vsel %vm2252, %v2246, %v1850
      %v2296 = vsel %vm2252, %v2247, %v1852
      %v2297 = vsel %vm2252, %v2248, %v1854
      %v2298 = vsel %vm2252, %v2249, %v1856
      %v2299 = vsel %vm2252, %v2250, %v1858
      %v2300 = vsel %vm2252, %v2251, %v1860
      %v2301 = vpack.c.bf16 %v2254, %v2253
      %v2302 = vpack.c.bf16 %v2256, %v2255
      %v2303 = vpack.c.bf16 %v2258, %v2257
      %v2304 = vpack.c.bf16 %v2260, %v2259
      %v2305 = vpack.c.bf16 %v2262, %v2261
      %v2306 = vpack.c.bf16 %v2264, %v2263
      %v2307 = vpack.c.bf16 %v2266, %v2265
      %v2308 = vpack.c.bf16 %v2268, %v2267
      %v2309 = vpack.c.bf16 %v2270, %v2269
      %v2310 = vpack.c.bf16 %v2272, %v2271
      %v2311 = vpack.c.bf16 %v2274, %v2273
      %v2312 = vpack.c.bf16 %v2276, %v2275
      %v2313 = vpack.c.bf16 %v2278, %v2277
      %v2314 = vpack.c.bf16 %v2280, %v2279
      %v2315 = vpack.c.bf16 %v2282, %v2281
      %v2316 = vpack.c.bf16 %v2284, %v2283
      %v2317 = vpack.c.bf16 %v2286, %v2285
      %v2318 = vpack.c.bf16 %v2288, %v2287
      %v2319 = vpack.c.bf16 %v2290, %v2289
      %v2320 = vpack.c.bf16 %v2292, %v2291
      %v2321 = vpack.c.bf16 %v2294, %v2293
      %v2322 = vpack.c.bf16 %v2296, %v2295
      %v2323 = vpack.c.bf16 %v2298, %v2297
      %v2324 = vpack.c.bf16 %v2300, %v2299
      %v2325 = vld [vmem:[%s1] sm:$0xf]
      %v2326 = vld [vmem:[%s1 + $0x4] sm:$0xf]
      %v2327 = vld [vmem:[%s1 + $0x8] sm:$0xf]
      %v2328 = vld [vmem:[%s1 + $0xc] sm:$0xf]
      %v2329 = vld [vmem:[%s1 + $0x10] sm:$0xf]
      %v2330 = vld [vmem:[%s1 + $0x14] sm:$0xf]
      %v2331 = vld [vmem:[%s1 + $0x18] sm:$0xf]
      %v2332 = vld [vmem:[%s1 + $0x1c] sm:$0xf]
      %v2333 = vld [vmem:[%s1 + $0x20] sm:$0xf]
      %v2343 = vunpack.c.l.b16 %v2325
      %v2344 = vunpack.c.l.b16 %v2326
      %v2345 = vunpack.c.l.b16 %v2327
      %v2346 = vunpack.c.l.b16 %v2328
      %v2347 = vunpack.c.l.b16 %v2329
      %v2348 = vunpack.c.l.b16 %v2330
      %v2349 = vunpack.c.l.b16 %v2331
      %v2350 = vunpack.c.l.b16 %v2332
      %v2351 = vunpack.c.l.b16 %v2333
      %v2352 = vpack.c.b16 %v2344, %v2343
      %v2353 = vpack.c.b16 %v2346, %v2345
      %v2354 = vpack.c.b16 %v2348, %v2347
      %v2355 = vpack.c.b16 %v2350, %v2349
      %v2356 = vpack.c.b16 %v2351, %v2351
      %vm2361 = vcmask 588800
      %v2363 = vsel %vm2361, %v2301, 0
      %v2366 = vsel %vm2361, %v2302, 0
      %v2369 = vsel %vm2361, %v2303, 0
      %v2372 = vsel %vm2361, %v2304, 0
      %v2375 = vsel %vm2361, %v2305, 0
      %v2378 = vsel %vm2361, %v2306, 0
      %v2381 = vsel %vm2361, %v2307, 0
      %v2384 = vsel %vm2361, %v2308, 0
      %v2387 = vsel %vm2361, %v2309, 0
      %v2390 = vsel %vm2361, %v2310, 0
      %v2393 = vsel %vm2361, %v2311, 0
      %v2396 = vsel %vm2361, %v2312, 0
      %v2399 = vsel %vm2361, %v2313, 0
      %v2402 = vsel %vm2361, %v2314, 0
      %v2405 = vsel %vm2361, %v2315, 0
      %v2408 = vsel %vm2361, %v2316, 0
      %v2411 = vsel %vm2361, %v2317, 0
      %v2414 = vsel %vm2361, %v2318, 0
      %v2417 = vsel %vm2361, %v2319, 0
      %v2420 = vsel %vm2361, %v2320, 0
      %v2423 = vsel %vm2361, %v2321, 0
      %v2426 = vsel %vm2361, %v2322, 0
      %v2429 = vsel %vm2361, %v2323, 0
      %v2432 = vsel %vm2361, %v2324, 0
      %vm2434 = vcmask 1043456
      %v2436 = vsel %vm2434, %v2356, 0
      %2438 = vmatprep.subr.bf16.mxu0 0
      %2439 = vmatpush1.bf16.msra.mxu0 %v2352
      %2440 = vmatprep.subr.bf16.mxu0 0
      %2441 = vmatpush1.bf16.msra.mxu0 %v2353
      %2442 = vmatprep.subr.bf16.mxu0 0
      %2443 = vmatpush1.bf16.msra.mxu0 %v2354
      %2444 = vmatprep.subr.bf16.mxu0 0
      %2445 = vmatpush1.bf16.msra.mxu0 %v2355
      %2446 = vmatprep.subr.bf16.mxu0 0
      %2447 = vmatpush1.bf16.msra.mxu0 %v2436
      %2448 = vmatprep.subr.bf16.mxu0 0
      %2449 = vmatpush1.bf16.msra.mxu0 0
      %2450 = vmatprep.subr.bf16.mxu0 0
      %2451 = vmatpush1.bf16.msra.mxu0 0
      %2452 = vmatprep.subr.bf16.mxu0 0
      %2453 = vmatpush1.bf16.msra.mxu0 0
      %2454 = vmatprep.subr.bf16.mxu0 0
      %2455 = vmatpush1.bf16.msra.mxu0 0
      %2456 = vmatprep.subr.bf16.mxu0 0
      %2457 = vmatpush1.bf16.msra.mxu0 0
      %2458 = vmatprep.subr.bf16.mxu0 0
      %2459 = vmatpush1.bf16.msra.mxu0 0
      %2460 = vmatprep.subr.bf16.mxu0 0
      %2461 = vmatpush1.bf16.msra.mxu0 0
      %2462 = vmatprep.subr.bf16.mxu0 0
      %2463 = vmatpush1.bf16.msra.mxu0 0
      %2464 = vmatprep.subr.bf16.mxu0 0
      %2465 = vmatpush1.bf16.msra.mxu0 0
      %2466 = vmatprep.subr.bf16.mxu0 0
      %2467 = vmatpush1.bf16.msra.mxu0 0
      %2468 = vmatprep.subr.bf16.mxu0 0
      %2469 = vmatpush1.bf16.msra.mxu0 0
      %2470 = vmatprep.mubr.bf16.mxu0 0
      %2471 = vmatmul.mubr.bf16.gmra.mrb[0].mxu0 %v2363
      %v2472 = vpop.f32.mrb[0].mxu0
      %v2473 = vadd.f32 0.0, %v2472
      %v2474 = vpop.f32.mrb[0].mxu0
      %v2475 = vpop.f32.mrb[0].mxu0
      %v2476 = vadd.f32 0.0, %v2475
      %v2477 = vpop.f32.mrb[0].mxu0
      %2478 = vmatprep.mubr.bf16.mxu0 0
      %2479 = vmatmul.mubr.bf16.gmra.mrb[0].mxu0 %v2366
      %v2480 = vpop.f32.mrb[0].mxu0
      %v2481 = vadd.f32 0.0, %v2480
      %v2482 = vpop.f32.mrb[0].mxu0
      %v2483 = vpop.f32.mrb[0].mxu0
      %v2484 = vadd.f32 0.0, %v2483
      %v2485 = vpop.f32.mrb[0].mxu0
      %2486 = vmatprep.mubr.bf16.mxu0 0
      %2487 = vmatmul.mubr.bf16.gmra.mrb[0].mxu0 %v2369
      %v2488 = vpop.f32.mrb[0].mxu0
      %v2489 = vadd.f32 0.0, %v2488
      %v2490 = vpop.f32.mrb[0].mxu0
      %v2491 = vpop.f32.mrb[0].mxu0
      %v2492 = vadd.f32 0.0, %v2491
      %v2493 = vpop.f32.mrb[0].mxu0
      %2494 = vmatprep.mubr.bf16.mxu0 0
      %2495 = vmatmul.mubr.bf16.gmra.mrb[0].mxu0 %v2372
      %v2496 = vpop.f32.mrb[0].mxu0
      %v2497 = vadd.f32 0.0, %v2496
      %v2498 = vpop.f32.mrb[0].mxu0
      %v2499 = vpop.f32.mrb[0].mxu0
      %v2500 = vadd.f32 0.0, %v2499
      %v2501 = vpop.f32.mrb[0].mxu0
      %2502 = vmatprep.mubr.bf16.mxu0 0
      %2503 = vmatmul.mubr.bf16.gmra.mrb[0].mxu0 %v2375
      %v2504 = vpop.f32.mrb[0].mxu0
      %v2505 = vadd.f32 0.0, %v2504
      %v2506 = vpop.f32.mrb[0].mxu0
      %v2507 = vpop.f32.mrb[0].mxu0
      %v2508 = vadd.f32 0.0, %v2507
      %v2509 = vpop.f32.mrb[0].mxu0
      %2510 = vmatprep.mubr.bf16.mxu0 0
      %2511 = vmatmul.mubr.bf16.gmra.mrb[0].mxu0 %v2378
      %v2512 = vpop.f32.mrb[0].mxu0
      %v2513 = vadd.f32 0.0, %v2512
      %v2514 = vpop.f32.mrb[0].mxu0
      %v2515 = vpop.f32.mrb[0].mxu0
      %v2516 = vadd.f32 0.0, %v2515
      %v2517 = vpop.f32.mrb[0].mxu0
      %2518 = vmatprep.mubr.bf16.mxu0 0
      %2519 = vmatmul.mubr.bf16.gmra.mrb[0].mxu0 %v2381
      %v2520 = vpop.f32.mrb[0].mxu0
      %v2521 = vadd.f32 0.0, %v2520
      %v2522 = vpop.f32.mrb[0].mxu0
      %v2523 = vpop.f32.mrb[0].mxu0
      %v2524 = vadd.f32 0.0, %v2523
      %v2525 = vpop.f32.mrb[0].mxu0
      %2526 = vmatprep.mubr.bf16.mxu0 0
      %2527 = vmatmul.mubr.bf16.gmra.mrb[0].mxu0 %v2384
      %v2528 = vpop.f32.mrb[0].mxu0
      %v2529 = vadd.f32 0.0, %v2528
      %v2530 = vpop.f32.mrb[0].mxu0
      %v2531 = vpop.f32.mrb[0].mxu0
      %v2532 = vadd.f32 0.0, %v2531
      %v2533 = vpop.f32.mrb[0].mxu0
      %2534 = vmatprep.mubr.bf16.mxu0 0
      %2535 = vmatmul.mubr.bf16.gmra.mrb[0].mxu0 %v2387
      %v2536 = vpop.f32.mrb[0].mxu0
      %v2537 = vadd.f32 0.0, %v2536
      %v2538 = vpop.f32.mrb[0].mxu0
      %v2539 = vpop.f32.mrb[0].mxu0
      %v2540 = vadd.f32 0.0, %v2539
      %v2541 = vpop.f32.mrb[0].mxu0
      %2542 = vmatprep.mubr.bf16.mxu0 0
      %2543 = vmatmul.mubr.bf16.gmra.mrb[0].mxu0 %v2390
      %v2544 = vpop.f32.mrb[0].mxu0
      %v2545 = vadd.f32 0.0, %v2544
      %v2546 = vpop.f32.mrb[0].mxu0
      %v2547 = vpop.f32.mrb[0].mxu0
      %v2548 = vadd.f32 0.0, %v2547
      %v2549 = vpop.f32.mrb[0].mxu0
      %2550 = vmatprep.mubr.bf16.mxu0 0
      %2551 = vmatmul.mubr.bf16.gmra.mrb[0].mxu0 %v2393
      %v2552 = vpop.f32.mrb[0].mxu0
      %v2553 = vadd.f32 0.0, %v2552
      %v2554 = vpop.f32.mrb[0].mxu0
      %v2555 = vpop.f32.mrb[0].mxu0
      %v2556 = vadd.f32 0.0, %v2555
      %v2557 = vpop.f32.mrb[0].mxu0
      %2558 = vmatprep.mubr.bf16.mxu0 0
      %2559 = vmatmul.mubr.bf16.gmra.mrb[0].mxu0 %v2396
      %v2560 = vpop.f32.mrb[0].mxu0
      %v2561 = vadd.f32 0.0, %v2560
      %v2562 = vpop.f32.mrb[0].mxu0
      %v2563 = vpop.f32.mrb[0].mxu0
      %v2564 = vadd.f32 0.0, %v2563
      %v2565 = vpop.f32.mrb[0].mxu0
      %2566 = vmatprep.mubr.bf16.mxu0 0
      %2567 = vmatmul.mubr.bf16.gmra.mrb[0].mxu0 %v2399
      %v2568 = vpop.f32.mrb[0].mxu0
      %v2569 = vadd.f32 0.0, %v2568
      %v2570 = vpop.f32.mrb[0].mxu0
      %v2571 = vpop.f32.mrb[0].mxu0
      %v2572 = vadd.f32 0.0, %v2571
      %v2573 = vpop.f32.mrb[0].mxu0
      %2574 = vmatprep.mubr.bf16.mxu0 0
      %2575 = vmatmul.mubr.bf16.gmra.mrb[0].mxu0 %v2402
      %v2576 = vpop.f32.mrb[0].mxu0
      %v2577 = vadd.f32 0.0, %v2576
      %v2578 = vpop.f32.mrb[0].mxu0
      %v2579 = vpop.f32.mrb[0].mxu0
      %v2580 = vadd.f32 0.0, %v2579
      %v2581 = vpop.f32.mrb[0].mxu0
      %2582 = vmatprep.mubr.bf16.mxu0 0
      %2583 = vmatmul.mubr.bf16.gmra.mrb[0].mxu0 %v2405
      %v2584 = vpop.f32.mrb[0].mxu0
      %v2585 = vadd.f32 0.0, %v2584
      %v2586 = vpop.f32.mrb[0].mxu0
      %v2587 = vpop.f32.mrb[0].mxu0
      %v2588 = vadd.f32 0.0, %v2587
      %v2589 = vpop.f32.mrb[0].mxu0
      %2590 = vmatprep.mubr.bf16.mxu0 0
      %2591 = vmatmul.mubr.bf16.gmra.mrb[0].mxu0 %v2408
      %v2592 = vpop.f32.mrb[0].mxu0
      %v2593 = vadd.f32 0.0, %v2592
      %v2594 = vpop.f32.mrb[0].mxu0
      %v2595 = vpop.f32.mrb[0].mxu0
      %v2596 = vadd.f32 0.0, %v2595
      %v2597 = vpop.f32.mrb[0].mxu0
      %2598 = vmatprep.mubr.bf16.mxu0 0
      %2599 = vmatmul.mubr.bf16.gmra.mrb[0].mxu0 %v2411
      %v2600 = vpop.f32.mrb[0].mxu0
      %v2601 = vadd.f32 0.0, %v2600
      %v2602 = vpop.f32.mrb[0].mxu0
      %v2603 = vpop.f32.mrb[0].mxu0
      %v2604 = vadd.f32 0.0, %v2603
      %v2605 = vpop.f32.mrb[0].mxu0
      %2606 = vmatprep.mubr.bf16.mxu0 0
      %2607 = vmatmul.mubr.bf16.gmra.mrb[0].mxu0 %v2414
      %v2608 = vpop.f32.mrb[0].mxu0
      %v2609 = vadd.f32 0.0, %v2608
      %v2610 = vpop.f32.mrb[0].mxu0
      %v2611 = vpop.f32.mrb[0].mxu0
      %v2612 = vadd.f32 0.0, %v2611
      %v2613 = vpop.f32.mrb[0].mxu0
      %2614 = vmatprep.mubr.bf16.mxu0 0
      %2615 = vmatmul.mubr.bf16.gmra.mrb[0].mxu0 %v2417
      %v2616 = vpop.f32.mrb[0].mxu0
      %v2617 = vadd.f32 0.0, %v2616
      %v2618 = vpop.f32.mrb[0].mxu0
      %v2619 = vpop.f32.mrb[0].mxu0
      %v2620 = vadd.f32 0.0, %v2619
      %v2621 = vpop.f32.mrb[0].mxu0
      %2622 = vmatprep.mubr.bf16.mxu0 0
      %2623 = vmatmul.mubr.bf16.gmra.mrb[0].mxu0 %v2420
      %v2624 = vpop.f32.mrb[0].mxu0
      %v2625 = vadd.f32 0.0, %v2624
      %v2626 = vpop.f32.mrb[0].mxu0
      %v2627 = vpop.f32.mrb[0].mxu0
      %v2628 = vadd.f32 0.0, %v2627
      %v2629 = vpop.f32.mrb[0].mxu0
      %2630 = vmatprep.mubr.bf16.mxu0 0
      %2631 = vmatmul.mubr.bf16.gmra.mrb[0].mxu0 %v2423
      %v2632 = vpop.f32.mrb[0].mxu0
      %v2633 = vadd.f32 0.0, %v2632
      %v2634 = vpop.f32.mrb[0].mxu0
      %v2635 = vpop.f32.mrb[0].mxu0
      %v2636 = vadd.f32 0.0, %v2635
      %v2637 = vpop.f32.mrb[0].mxu0
      %2638 = vmatprep.mubr.bf16.mxu0 0
      %2639 = vmatmul.mubr.bf16.gmra.mrb[0].mxu0 %v2426
      %v2640 = vpop.f32.mrb[0].mxu0
      %v2641 = vadd.f32 0.0, %v2640
      %v2642 = vpop.f32.mrb[0].mxu0
      %v2643 = vpop.f32.mrb[0].mxu0
      %v2644 = vadd.f32 0.0, %v2643
      %v2645 = vpop.f32.mrb[0].mxu0
      %2646 = vmatprep.mubr.bf16.mxu0 0
      %2647 = vmatmul.mubr.bf16.gmra.mrb[0].mxu0 %v2429
      %v2648 = vpop.f32.mrb[0].mxu0
      %v2649 = vadd.f32 0.0, %v2648
      %v2650 = vpop.f32.mrb[0].mxu0
      %v2651 = vpop.f32.mrb[0].mxu0
      %v2652 = vadd.f32 0.0, %v2651
      %v2653 = vpop.f32.mrb[0].mxu0
      %2654 = vmatprep.mubr.bf16.mxu0 0
      %2655 = vmatmul.mubr.bf16.gmra.mrb[0].mxu0 %v2432
      %v2656 = vpop.f32.mrb[0].mxu0
      %v2657 = vadd.f32 0.0, %v2656
      %v2658 = vpop.f32.mrb[0].mxu0
      %v2659 = vpop.f32.mrb[0].mxu0
      %v2660 = vadd.f32 0.0, %v2659
      %v2661 = vpop.f32.mrb[0].mxu0
      %2662 = vdwg.mxu0
      %v2663 = vmax.f32 %v2473, 0.0
      %v2664 = vmax.f32 %v2476, 0.0
      %v2665 = vmax.f32 %v2481, 0.0
      %v2666 = vmax.f32 %v2484, 0.0
      %v2667 = vmax.f32 %v2489, 0.0
      %v2668 = vmax.f32 %v2492, 0.0
      %v2669 = vmax.f32 %v2497, 0.0
      %v2670 = vmax.f32 %v2500, 0.0
      %v2671 = vmax.f32 %v2505, 0.0
      %v2672 = vmax.f32 %v2508, 0.0
      %v2673 = vmax.f32 %v2513, 0.0
      %v2674 = vmax.f32 %v2516, 0.0
      %v2675 = vmax.f32 %v2521, 0.0
      %v2676 = vmax.f32 %v2524, 0.0
      %v2677 = vmax.f32 %v2529, 0.0
      %v2678 = vmax.f32 %v2532, 0.0
      %v2679 = vmax.f32 %v2537, 0.0
      %v2680 = vmax.f32 %v2540, 0.0
      %v2681 = vmax.f32 %v2545, 0.0
      %v2682 = vmax.f32 %v2548, 0.0
      %v2683 = vmax.f32 %v2553, 0.0
      %v2684 = vmax.f32 %v2556, 0.0
      %v2685 = vmax.f32 %v2561, 0.0
      %v2686 = vmax.f32 %v2564, 0.0
      %v2687 = vmax.f32 %v2569, 0.0
      %v2688 = vmax.f32 %v2572, 0.0
      %v2689 = vmax.f32 %v2577, 0.0
      %v2690 = vmax.f32 %v2580, 0.0
      %v2691 = vmax.f32 %v2585, 0.0
      %v2692 = vmax.f32 %v2588, 0.0
      %v2693 = vmax.f32 %v2593, 0.0
      %v2694 = vmax.f32 %v2596, 0.0
      %v2695 = vmax.f32 %v2601, 0.0
      %v2696 = vmax.f32 %v2604, 0.0
      %v2697 = vmax.f32 %v2609, 0.0
      %v2698 = vmax.f32 %v2612, 0.0
      %v2699 = vmax.f32 %v2617, 0.0
      %v2700 = vmax.f32 %v2620, 0.0
      %v2701 = vmax.f32 %v2625, 0.0
      %v2702 = vmax.f32 %v2628, 0.0
      %v2703 = vmax.f32 %v2633, 0.0
      %v2704 = vmax.f32 %v2636, 0.0
      %v2705 = vmax.f32 %v2641, 0.0
      %v2706 = vmax.f32 %v2644, 0.0
      %v2707 = vmax.f32 %v2649, 0.0
      %v2708 = vmax.f32 %v2652, 0.0
      %v2709 = vmax.f32 %v2657, 0.0
      %v2710 = vmax.f32 %v2660, 0.0
      %v2711 = vld [vmem:[%s2] sm:$0x1]
      %v2713 = vlaneseq
      %v2714 = vshrl.u32 %v2713, 7
      %v2715 = vsub.s32 0, %v2714
      %v2716 = vrot.slane %v2711, %v2715
      %v2718 = vmul.f32 %v2663, %v2716
      %v2719 = vmul.f32 %v2664, %v2716
      %v2720 = vmul.f32 %v2665, %v2716
      %v2721 = vmul.f32 %v2666, %v2716
      %v2722 = vmul.f32 %v2667, %v2716
      %v2723 = vmul.f32 %v2668, %v2716
      %v2724 = vmul.f32 %v2669, %v2716
      %v2725 = vmul.f32 %v2670, %v2716
      %v2726 = vmul.f32 %v2671, %v2716
      %v2727 = vmul.f32 %v2672, %v2716
      %v2728 = vmul.f32 %v2673, %v2716
      %v2729 = vmul.f32 %v2674, %v2716
      %v2730 = vmul.f32 %v2675, %v2716
      %v2731 = vmul.f32 %v2676, %v2716
      %v2732 = vmul.f32 %v2677, %v2716
      %v2733 = vmul.f32 %v2678, %v2716
      %v2734 = vmul.f32 %v2679, %v2716
      %v2735 = vmul.f32 %v2680, %v2716
      %v2736 = vmul.f32 %v2681, %v2716
      %v2737 = vmul.f32 %v2682, %v2716
      %v2738 = vmul.f32 %v2683, %v2716
      %v2739 = vmul.f32 %v2684, %v2716
      %v2740 = vmul.f32 %v2685, %v2716
      %v2741 = vmul.f32 %v2686, %v2716
      %v2742 = vmul.f32 %v2687, %v2716
      %v2743 = vmul.f32 %v2688, %v2716
      %v2744 = vmul.f32 %v2689, %v2716
      %v2745 = vmul.f32 %v2690, %v2716
      %v2746 = vmul.f32 %v2691, %v2716
      %v2747 = vmul.f32 %v2692, %v2716
      %v2748 = vmul.f32 %v2693, %v2716
      %v2749 = vmul.f32 %v2694, %v2716
      %v2750 = vmul.f32 %v2695, %v2716
      %v2751 = vmul.f32 %v2696, %v2716
      %v2752 = vmul.f32 %v2697, %v2716
      %v2753 = vmul.f32 %v2698, %v2716
      %v2754 = vmul.f32 %v2699, %v2716
      %v2755 = vmul.f32 %v2700, %v2716
      %v2756 = vmul.f32 %v2701, %v2716
      %v2757 = vmul.f32 %v2702, %v2716
      %v2758 = vmul.f32 %v2703, %v2716
      %v2759 = vmul.f32 %v2704, %v2716
      %v2760 = vmul.f32 %v2705, %v2716
      %v2761 = vmul.f32 %v2706, %v2716
      %v2762 = vmul.f32 %v2707, %v2716
      %v2763 = vmul.f32 %v2708, %v2716
      %v2764 = vmul.f32 %v2709, %v2716
      %v2765 = vmul.f32 %v2710, %v2716
      %v2766 = vld [vmem:[%s3] sm:$0x1]
      %v2768 = vlaneseq
      %v2769 = vshrl.u32 %v2768, 7
      %v2770 = vsub.s32 0, %v2769
      %v2771 = vrot.slane %v2766, %v2770
      %v2773 = vadd.f32 %v2718, %v2771
      %v2774 = vadd.f32 %v2719, %v2771
      %v2775 = vadd.f32 %v2720, %v2771
      %v2776 = vadd.f32 %v2721, %v2771
      %v2777 = vadd.f32 %v2722, %v2771
      %v2778 = vadd.f32 %v2723, %v2771
      %v2779 = vadd.f32 %v2724, %v2771
      %v2780 = vadd.f32 %v2725, %v2771
      %v2781 = vadd.f32 %v2726, %v2771
      %v2782 = vadd.f32 %v2727, %v2771
      %v2783 = vadd.f32 %v2728, %v2771
      %v2784 = vadd.f32 %v2729, %v2771
      %v2785 = vadd.f32 %v2730, %v2771
      %v2786 = vadd.f32 %v2731, %v2771
      %v2787 = vadd.f32 %v2732, %v2771
      %v2788 = vadd.f32 %v2733, %v2771
      %v2789 = vadd.f32 %v2734, %v2771
      %v2790 = vadd.f32 %v2735, %v2771
      %v2791 = vadd.f32 %v2736, %v2771
      %v2792 = vadd.f32 %v2737, %v2771
      %v2793 = vadd.f32 %v2738, %v2771
      %v2794 = vadd.f32 %v2739, %v2771
      %v2795 = vadd.f32 %v2740, %v2771
      %v2796 = vadd.f32 %v2741, %v2771
      %v2797 = vadd.f32 %v2742, %v2771
      %v2798 = vadd.f32 %v2743, %v2771
      %v2799 = vadd.f32 %v2744, %v2771
      %v2800 = vadd.f32 %v2745, %v2771
      %v2801 = vadd.f32 %v2746, %v2771
      %v2802 = vadd.f32 %v2747, %v2771
      %v2803 = vadd.f32 %v2748, %v2771
      %v2804 = vadd.f32 %v2749, %v2771
      %v2805 = vadd.f32 %v2750, %v2771
      %v2806 = vadd.f32 %v2751, %v2771
      %v2807 = vadd.f32 %v2752, %v2771
      %v2808 = vadd.f32 %v2753, %v2771
      %v2809 = vadd.f32 %v2754, %v2771
      %v2810 = vadd.f32 %v2755, %v2771
      %v2811 = vadd.f32 %v2756, %v2771
      %v2812 = vadd.f32 %v2757, %v2771
      %v2813 = vadd.f32 %v2758, %v2771
      %v2814 = vadd.f32 %v2759, %v2771
      %v2815 = vadd.f32 %v2760, %v2771
      %v2816 = vadd.f32 %v2761, %v2771
      %v2817 = vadd.f32 %v2762, %v2771
      %v2818 = vadd.f32 %v2763, %v2771
      %v2819 = vadd.f32 %v2764, %v2771
      %v2820 = vadd.f32 %v2765, %v2771
      %v2821 = vld [vmem:[%s7] sm:$0xff]
      %v2822 = vld [vmem:[%s7 + $0x8] sm:$0xff]
      %v2823 = vld [vmem:[%s7 + $0x10] sm:$0xff]
      %v2824 = vld [vmem:[%s7 + $0x18] sm:$0xff]
      %v2825 = vld [vmem:[%s7 + $0x20] sm:$0xff]
      %v2826 = vld [vmem:[%s7 + $0x28] sm:$0xff]
      %v2827 = vld [vmem:[%s7 + $0x30] sm:$0xff]
      %v2828 = vld [vmem:[%s7 + $0x38] sm:$0xff]
      %v2829 = vld [vmem:[%s7 + $0x40] sm:$0xff]
      %v2830 = vld [vmem:[%s7 + $0x48] sm:$0xff]
      %v2831 = vld [vmem:[%s7 + $0x50] sm:$0xff]
      %v2832 = vld [vmem:[%s7 + $0x58] sm:$0xff]
      %v2833 = vld [vmem:[%s7 + $0x60] sm:$0xff]
      %v2834 = vld [vmem:[%s7 + $0x68] sm:$0xff]
      %v2835 = vld [vmem:[%s7 + $0x70] sm:$0xff]
      %v2836 = vld [vmem:[%s7 + $0x78] sm:$0xff]
      %v2837 = vld [vmem:[%s7 + $0x80] sm:$0xff]
      %v2838 = vld [vmem:[%s7 + $0x88] sm:$0xff]
      %v2839 = vld [vmem:[%s7 + $0x90] sm:$0xff]
      %v2840 = vld [vmem:[%s7 + $0x98] sm:$0xff]
      %v2841 = vld [vmem:[%s7 + $0xa0] sm:$0xff]
      %v2842 = vld [vmem:[%s7 + $0xa8] sm:$0xff]
      %v2843 = vld [vmem:[%s7 + $0xb0] sm:$0xff]
      %v2844 = vld [vmem:[%s7 + $0xb8] sm:$0xff]
      %v2845 = vld [vmem:[%s7 + $0xc0] sm:$0xff]
      %v2846 = vld [vmem:[%s7 + $0xc8] sm:$0xff]
      %v2847 = vld [vmem:[%s7 + $0xd0] sm:$0xff]
      %v2848 = vld [vmem:[%s7 + $0xd8] sm:$0xff]
      %v2849 = vld [vmem:[%s7 + $0xe0] sm:$0xff]
      %v2850 = vld [vmem:[%s7 + $0xe8] sm:$0xff]
      %v2851 = vld [vmem:[%s7 + $0xf0] sm:$0xff]
      %v2852 = vld [vmem:[%s7 + $0xf8] sm:$0xff]
      %v2853 = vld [vmem:[%s7 + $0x100] sm:$0xff]
      %v2854 = vld [vmem:[%s7 + $0x108] sm:$0xff]
      %v2855 = vld [vmem:[%s7 + $0x110] sm:$0xff]
      %v2856 = vld [vmem:[%s7 + $0x118] sm:$0xff]
      %v2857 = vld [vmem:[%s7 + $0x120] sm:$0xff]
      %v2858 = vld [vmem:[%s7 + $0x128] sm:$0xff]
      %v2859 = vld [vmem:[%s7 + $0x130] sm:$0xff]
      %v2860 = vld [vmem:[%s7 + $0x138] sm:$0xff]
      %v2861 = vld [vmem:[%s7 + $0x140] sm:$0xff]
      %v2862 = vld [vmem:[%s7 + $0x148] sm:$0xff]
      %v2863 = vld [vmem:[%s7 + $0x150] sm:$0xff]
      %v2864 = vld [vmem:[%s7 + $0x158] sm:$0xff]
      %v2865 = vld [vmem:[%s7 + $0x160] sm:$0xff]
      %v2866 = vld [vmem:[%s7 + $0x168] sm:$0xff]
      %v2867 = vld [vmem:[%s7 + $0x170] sm:$0xff]
      %v2868 = vld [vmem:[%s7 + $0x178] sm:$0xff]
      %2870 = vset.pattern.permute.xlu0 0
      %2871 = vperm.xlu0 %2870, %v2821
      %v2872 = vpop.permute.xlu0 %2871
      %2875 = vset.pattern.permute.xlu0 0
      %2876 = vperm.xlu0 %2875, %v2822
      %v2877 = vpop.permute.xlu0 %2876
      %2880 = vset.pattern.permute.xlu0 0
      %2881 = vperm.xlu0 %2880, %v2823
      %v2882 = vpop.permute.xlu0 %2881
      %2885 = vset.pattern.permute.xlu0 0
      %2886 = vperm.xlu0 %2885, %v2824
      %v2887 = vpop.permute.xlu0 %2886
      %2890 = vset.pattern.permute.xlu0 0
      %2891 = vperm.xlu0 %2890, %v2825
      %v2892 = vpop.permute.xlu0 %2891
      %2895 = vset.pattern.permute.xlu0 0
      %2896 = vperm.xlu0 %2895, %v2826
      %v2897 = vpop.permute.xlu0 %2896
      %2900 = vset.pattern.permute.xlu0 0
      %2901 = vperm.xlu0 %2900, %v2827
      %v2902 = vpop.permute.xlu0 %2901
      %2905 = vset.pattern.permute.xlu0 0
      %2906 = vperm.xlu0 %2905, %v2828
      %v2907 = vpop.permute.xlu0 %2906
      %2910 = vset.pattern.permute.xlu0 0
      %2911 = vperm.xlu0 %2910, %v2829
      %v2912 = vpop.permute.xlu0 %2911
      %2915 = vset.pattern.permute.xlu0 0
      %2916 = vperm.xlu0 %2915, %v2830
      %v2917 = vpop.permute.xlu0 %2916
      %2920 = vset.pattern.permute.xlu0 0
      %2921 = vperm.xlu0 %2920, %v2831
      %v2922 = vpop.permute.xlu0 %2921
      %2925 = vset.pattern.permute.xlu0 0
      %2926 = vperm.xlu0 %2925, %v2832
      %v2927 = vpop.permute.xlu0 %2926
      %2930 = vset.pattern.permute.xlu0 0
      %2931 = vperm.xlu0 %2930, %v2833
      %v2932 = vpop.permute.xlu0 %2931
      %2935 = vset.pattern.permute.xlu0 0
      %2936 = vperm.xlu0 %2935, %v2834
      %v2937 = vpop.permute.xlu0 %2936
      %2940 = vset.pattern.permute.xlu0 0
      %2941 = vperm.xlu0 %2940, %v2835
      %v2942 = vpop.permute.xlu0 %2941
      %2945 = vset.pattern.permute.xlu0 0
      %2946 = vperm.xlu0 %2945, %v2836
      %v2947 = vpop.permute.xlu0 %2946
      %2950 = vset.pattern.permute.xlu0 0
      %2951 = vperm.xlu0 %2950, %v2837
      %v2952 = vpop.permute.xlu0 %2951
      %2955 = vset.pattern.permute.xlu0 0
      %2956 = vperm.xlu0 %2955, %v2838
      %v2957 = vpop.permute.xlu0 %2956
      %2960 = vset.pattern.permute.xlu0 0
      %2961 = vperm.xlu0 %2960, %v2839
      %v2962 = vpop.permute.xlu0 %2961
      %2965 = vset.pattern.permute.xlu0 0
      %2966 = vperm.xlu0 %2965, %v2840
      %v2967 = vpop.permute.xlu0 %2966
      %2970 = vset.pattern.permute.xlu0 0
      %2971 = vperm.xlu0 %2970, %v2841
      %v2972 = vpop.permute.xlu0 %2971
      %2975 = vset.pattern.permute.xlu0 0
      %2976 = vperm.xlu0 %2975, %v2842
      %v2977 = vpop.permute.xlu0 %2976
      %2980 = vset.pattern.permute.xlu0 0
      %2981 = vperm.xlu0 %2980, %v2843
      %v2982 = vpop.permute.xlu0 %2981
      %2985 = vset.pattern.permute.xlu0 0
      %2986 = vperm.xlu0 %2985, %v2844
      %v2987 = vpop.permute.xlu0 %2986
      %2990 = vset.pattern.permute.xlu0 0
      %2991 = vperm.xlu0 %2990, %v2845
      %v2992 = vpop.permute.xlu0 %2991
      %2995 = vset.pattern.permute.xlu0 0
      %2996 = vperm.xlu0 %2995, %v2846
      %v2997 = vpop.permute.xlu0 %2996
      %3000 = vset.pattern.permute.xlu0 0
      %3001 = vperm.xlu0 %3000, %v2847
      %v3002 = vpop.permute.xlu0 %3001
      %3005 = vset.pattern.permute.xlu0 0
      %3006 = vperm.xlu0 %3005, %v2848
      %v3007 = vpop.permute.xlu0 %3006
      %3010 = vset.pattern.permute.xlu0 0
      %3011 = vperm.xlu0 %3010, %v2849
      %v3012 = vpop.permute.xlu0 %3011
      %3015 = vset.pattern.permute.xlu0 0
      %3016 = vperm.xlu0 %3015, %v2850
      %v3017 = vpop.permute.xlu0 %3016
      %3020 = vset.pattern.permute.xlu0 0
      %3021 = vperm.xlu0 %3020, %v2851
      %v3022 = vpop.permute.xlu0 %3021
      %3025 = vset.pattern.permute.xlu0 0
      %3026 = vperm.xlu0 %3025, %v2852
      %v3027 = vpop.permute.xlu0 %3026
      %3030 = vset.pattern.permute.xlu0 0
      %3031 = vperm.xlu0 %3030, %v2853
      %v3032 = vpop.permute.xlu0 %3031
      %3035 = vset.pattern.permute.xlu0 0
      %3036 = vperm.xlu0 %3035, %v2854
      %v3037 = vpop.permute.xlu0 %3036
      %3040 = vset.pattern.permute.xlu0 0
      %3041 = vperm.xlu0 %3040, %v2855
      %v3042 = vpop.permute.xlu0 %3041
      %3045 = vset.pattern.permute.xlu0 0
      %3046 = vperm.xlu0 %3045, %v2856
      %v3047 = vpop.permute.xlu0 %3046
      %3050 = vset.pattern.permute.xlu0 0
      %3051 = vperm.xlu0 %3050, %v2857
      %v3052 = vpop.permute.xlu0 %3051
      %3055 = vset.pattern.permute.xlu0 0
      %3056 = vperm.xlu0 %3055, %v2858
      %v3057 = vpop.permute.xlu0 %3056
      %3060 = vset.pattern.permute.xlu0 0
      %3061 = vperm.xlu0 %3060, %v2859
      %v3062 = vpop.permute.xlu0 %3061
      %3065 = vset.pattern.permute.xlu0 0
      %3066 = vperm.xlu0 %3065, %v2860
      %v3067 = vpop.permute.xlu0 %3066
      %3070 = vset.pattern.permute.xlu0 0
      %3071 = vperm.xlu0 %3070, %v2861
      %v3072 = vpop.permute.xlu0 %3071
      %3075 = vset.pattern.permute.xlu0 0
      %3076 = vperm.xlu0 %3075, %v2862
      %v3077 = vpop.permute.xlu0 %3076
      %3080 = vset.pattern.permute.xlu0 0
      %3081 = vperm.xlu0 %3080, %v2863
      %v3082 = vpop.permute.xlu0 %3081
      %3085 = vset.pattern.permute.xlu0 0
      %3086 = vperm.xlu0 %3085, %v2864
      %v3087 = vpop.permute.xlu0 %3086
      %3090 = vset.pattern.permute.xlu0 0
      %3091 = vperm.xlu0 %3090, %v2865
      %v3092 = vpop.permute.xlu0 %3091
      %3095 = vset.pattern.permute.xlu0 0
      %3096 = vperm.xlu0 %3095, %v2866
      %v3097 = vpop.permute.xlu0 %3096
      %3100 = vset.pattern.permute.xlu0 0
      %3101 = vperm.xlu0 %3100, %v2867
      %v3102 = vpop.permute.xlu0 %3101
      %3105 = vset.pattern.permute.xlu0 0
      %3106 = vperm.xlu0 %3105, %v2868
      %v3107 = vpop.permute.xlu0 %3106
      %v3109 = vmul.f32 %v2773, %v2872
      %v3110 = vmul.f32 %v2774, %v2877
      %v3111 = vmul.f32 %v2775, %v2882
      %v3112 = vmul.f32 %v2776, %v2887
      %v3113 = vmul.f32 %v2777, %v2892
      %v3114 = vmul.f32 %v2778, %v2897
      %v3115 = vmul.f32 %v2779, %v2902
      %v3116 = vmul.f32 %v2780, %v2907
      %v3117 = vmul.f32 %v2781, %v2912
      %v3118 = vmul.f32 %v2782, %v2917
      %v3119 = vmul.f32 %v2783, %v2922
      %v3120 = vmul.f32 %v2784, %v2927
      %v3121 = vmul.f32 %v2785, %v2932
      %v3122 = vmul.f32 %v2786, %v2937
      %v3123 = vmul.f32 %v2787, %v2942
      %v3124 = vmul.f32 %v2788, %v2947
      %v3125 = vmul.f32 %v2789, %v2952
      %v3126 = vmul.f32 %v2790, %v2957
      %v3127 = vmul.f32 %v2791, %v2962
      %v3128 = vmul.f32 %v2792, %v2967
      %v3129 = vmul.f32 %v2793, %v2972
      %v3130 = vmul.f32 %v2794, %v2977
      %v3131 = vmul.f32 %v2795, %v2982
      %v3132 = vmul.f32 %v2796, %v2987
      %v3133 = vmul.f32 %v2797, %v2992
      %v3134 = vmul.f32 %v2798, %v2997
      %v3135 = vmul.f32 %v2799, %v3002
      %v3136 = vmul.f32 %v2800, %v3007
      %v3137 = vmul.f32 %v2801, %v3012
      %v3138 = vmul.f32 %v2802, %v3017
      %v3139 = vmul.f32 %v2803, %v3022
      %v3140 = vmul.f32 %v2804, %v3027
      %v3141 = vmul.f32 %v2805, %v3032
      %v3142 = vmul.f32 %v2806, %v3037
      %v3143 = vmul.f32 %v2807, %v3042
      %v3144 = vmul.f32 %v2808, %v3047
      %v3145 = vmul.f32 %v2809, %v3052
      %v3146 = vmul.f32 %v2810, %v3057
      %v3147 = vmul.f32 %v2811, %v3062
      %v3148 = vmul.f32 %v2812, %v3067
      %v3149 = vmul.f32 %v2813, %v3072
      %v3150 = vmul.f32 %v2814, %v3077
      %v3151 = vmul.f32 %v2815, %v3082
      %v3152 = vmul.f32 %v2816, %v3087
      %v3153 = vmul.f32 %v2817, %v3092
      %v3154 = vmul.f32 %v2818, %v3097
      %v3155 = vmul.f32 %v2819, %v3102
      %v3156 = vmul.f32 %v2820, %v3107
      %3157 = vst.msk [vmem:[#allocation2] sm:$0xff] %vm1958, 0.0
      %3158 = vst.msk [vmem:[#allocation2 + $0x8] sm:$0xff] %vm1958, 0.0
      %3159 = vst.msk [vmem:[#allocation2 + $0x10] sm:$0xff] %vm1958, 0.0
      %3160 = vst.msk [vmem:[#allocation2 + $0x18] sm:$0xff] %vm1958, 0.0
      %3161 = vst.msk [vmem:[#allocation2 + $0x20] sm:$0xff] %vm1958, 0.0
      %3162 = vst.msk [vmem:[#allocation2 + $0x28] sm:$0xff] %vm1958, 0.0
      %3163 = vst.msk [vmem:[#allocation2 + $0x30] sm:$0xff] %vm1958, 0.0
      %3164 = vst.msk [vmem:[#allocation2 + $0x38] sm:$0xff] %vm1958, 0.0
      %3165 = vst.msk [vmem:[#allocation2 + $0x40] sm:$0xff] %vm1958, 0.0
      %3166 = vst.msk [vmem:[#allocation2 + $0x48] sm:$0xff] %vm1958, 0.0
      %3167 = vst.msk [vmem:[#allocation2 + $0x50] sm:$0xff] %vm1958, 0.0
      %3168 = vst.msk [vmem:[#allocation2 + $0x58] sm:$0xff] %vm1958, 0.0
      %3169 = vst.msk [vmem:[#allocation2 + $0x60] sm:$0xff] %vm1958, 0.0
      %3170 = vst.msk [vmem:[#allocation2 + $0x68] sm:$0xff] %vm1958, 0.0
      %3171 = vst.msk [vmem:[#allocation2 + $0x70] sm:$0xff] %vm1958, 0.0
      %3172 = vst.msk [vmem:[#allocation2 + $0x78] sm:$0xff] %vm1958, 0.0
      %3173 = vst.msk [vmem:[#allocation2 + $0x80] sm:$0xff] %vm1958, 0.0
      %3174 = vst.msk [vmem:[#allocation2 + $0x88] sm:$0xff] %vm1958, 0.0
      %3175 = vst.msk [vmem:[#allocation2 + $0x90] sm:$0xff] %vm1958, 0.0
      %3176 = vst.msk [vmem:[#allocation2 + $0x98] sm:$0xff] %vm1958, 0.0
      %3177 = vst.msk [vmem:[#allocation2 + $0xa0] sm:$0xff] %vm1958, 0.0
      %3178 = vst.msk [vmem:[#allocation2 + $0xa8] sm:$0xff] %vm1958, 0.0
      %3179 = vst.msk [vmem:[#allocation2 + $0xb0] sm:$0xff] %vm1958, 0.0
      %3180 = vst.msk [vmem:[#allocation2 + $0xb8] sm:$0xff] %vm1958, 0.0
      %3181 = vst.msk [vmem:[#allocation2 + $0xc0] sm:$0xff] %vm1958, 0.0
      %3182 = vst.msk [vmem:[#allocation2 + $0xc8] sm:$0xff] %vm1958, 0.0
      %3183 = vst.msk [vmem:[#allocation2 + $0xd0] sm:$0xff] %vm1958, 0.0
      %3184 = vst.msk [vmem:[#allocation2 + $0xd8] sm:$0xff] %vm1958, 0.0
      %3185 = vst.msk [vmem:[#allocation2 + $0xe0] sm:$0xff] %vm1958, 0.0
      %3186 = vst.msk [vmem:[#allocation2 + $0xe8] sm:$0xff] %vm1958, 0.0
      %3187 = vst.msk [vmem:[#allocation2 + $0xf0] sm:$0xff] %vm1958, 0.0
      %3188 = vst.msk [vmem:[#allocation2 + $0xf8] sm:$0xff] %vm1958, 0.0
      %3189 = vst.msk [vmem:[#allocation2 + $0x100] sm:$0xff] %vm1958, 0.0
      %3190 = vst.msk [vmem:[#allocation2 + $0x108] sm:$0xff] %vm1958, 0.0
      %3191 = vst.msk [vmem:[#allocation2 + $0x110] sm:$0xff] %vm1958, 0.0
      %3192 = vst.msk [vmem:[#allocation2 + $0x118] sm:$0xff] %vm1958, 0.0
      %3193 = vst.msk [vmem:[#allocation2 + $0x120] sm:$0xff] %vm1958, 0.0
      %3194 = vst.msk [vmem:[#allocation2 + $0x128] sm:$0xff] %vm1958, 0.0
      %3195 = vst.msk [vmem:[#allocation2 + $0x130] sm:$0xff] %vm1958, 0.0
      %3196 = vst.msk [vmem:[#allocation2 + $0x138] sm:$0xff] %vm1958, 0.0
      %3197 = vst.msk [vmem:[#allocation2 + $0x140] sm:$0xff] %vm1958, 0.0
      %3198 = vst.msk [vmem:[#allocation2 + $0x148] sm:$0xff] %vm1958, 0.0
      %3199 = vst.msk [vmem:[#allocation2 + $0x150] sm:$0xff] %vm1958, 0.0
      %3200 = vst.msk [vmem:[#allocation2 + $0x158] sm:$0xff] %vm1958, 0.0
      %3201 = vst.msk [vmem:[#allocation2 + $0x160] sm:$0xff] %vm1958, 0.0
      %3202 = vst.msk [vmem:[#allocation2 + $0x168] sm:$0xff] %vm1958, 0.0
      %3203 = vst.msk [vmem:[#allocation2 + $0x170] sm:$0xff] %vm1958, 0.0
      %3204 = vst.msk [vmem:[#allocation2 + $0x178] sm:$0xff] %vm1958, 0.0
      %3205 = vst.msk [vmem:[#allocation2 + $0x180] sm:$0xff] %vm1958, 0.0
      %3206 = vst.msk [vmem:[#allocation2 + $0x188] sm:$0xff] %vm1958, 0.0
      %3207 = vst.msk [vmem:[#allocation2 + $0x190] sm:$0xff] %vm1958, 0.0
      %3208 = vst.msk [vmem:[#allocation2 + $0x198] sm:$0xff] %vm1958, 0.0
      %3209 = vst.msk [vmem:[#allocation2 + $0x1a0] sm:$0xff] %vm1958, 0.0
      %3210 = vst.msk [vmem:[#allocation2 + $0x1a8] sm:$0xff] %vm1958, 0.0
      %3211 = vst.msk [vmem:[#allocation2 + $0x1b0] sm:$0xff] %vm1958, 0.0
      %3212 = vst.msk [vmem:[#allocation2 + $0x19] sm:$0xff] %vm1958, %v3109
      %3213 = vst.msk [vmem:[#allocation2 + $0x21] sm:$0xff] %vm1958, %v3110
      %3214 = vst.msk [vmem:[#allocation2 + $0x29] sm:$0xff] %vm1958, %v3111
      %3215 = vst.msk [vmem:[#allocation2 + $0x31] sm:$0xff] %vm1958, %v3112
      %3216 = vst.msk [vmem:[#allocation2 + $0x39] sm:$0xff] %vm1958, %v3113
      %3217 = vst.msk [vmem:[#allocation2 + $0x41] sm:$0xff] %vm1958, %v3114
      %3218 = vst.msk [vmem:[#allocation2 + $0x49] sm:$0xff] %vm1958, %v3115
      %3219 = vst.msk [vmem:[#allocation2 + $0x51] sm:$0xff] %vm1958, %v3116
      %3220 = vst.msk [vmem:[#allocation2 + $0x59] sm:$0xff] %vm1958, %v3117
      %3221 = vst.msk [vmem:[#allocation2 + $0x61] sm:$0xff] %vm1958, %v3118
      %3222 = vst.msk [vmem:[#allocation2 + $0x69] sm:$0xff] %vm1958, %v3119
      %3223 = vst.msk [vmem:[#allocation2 + $0x71] sm:$0xff] %vm1958, %v3120
      %3224 = vst.msk [vmem:[#allocation2 + $0x79] sm:$0xff] %vm1958, %v3121
      %3225 = vst.msk [vmem:[#allocation2 + $0x81] sm:$0xff] %vm1958, %v3122
      %3226 = vst.msk [vmem:[#allocation2 + $0x89] sm:$0xff] %vm1958, %v3123
      %3227 = vst.msk [vmem:[#allocation2 + $0x91] sm:$0xff] %vm1958, %v3124
      %3228 = vst.msk [vmem:[#allocation2 + $0x99] sm:$0xff] %vm1958, %v3125
      %3229 = vst.msk [vmem:[#allocation2 + $0xa1] sm:$0xff] %vm1958, %v3126
      %3230 = vst.msk [vmem:[#allocation2 + $0xa9] sm:$0xff] %vm1958, %v3127
      %3231 = vst.msk [vmem:[#allocation2 + $0xb1] sm:$0xff] %vm1958, %v3128
      %3232 = vst.msk [vmem:[#allocation2 + $0xb9] sm:$0xff] %vm1958, %v3129
      %3233 = vst.msk [vmem:[#allocation2 + $0xc1] sm:$0xff] %vm1958, %v3130
      %3234 = vst.msk [vmem:[#allocation2 + $0xc9] sm:$0xff] %vm1958, %v3131
      %3235 = vst.msk [vmem:[#allocation2 + $0xd1] sm:$0xff] %vm1958, %v3132
      %3236 = vst.msk [vmem:[#allocation2 + $0xd9] sm:$0xff] %vm1958, %v3133
      %3237 = vst.msk [vmem:[#allocation2 + $0xe1] sm:$0xff] %vm1958, %v3134
      %3238 = vst.msk [vmem:[#allocation2 + $0xe9] sm:$0xff] %vm1958, %v3135
      %3239 = vst.msk [vmem:[#allocation2 + $0xf1] sm:$0xff] %vm1958, %v3136
      %3240 = vst.msk [vmem:[#allocation2 + $0xf9] sm:$0xff] %vm1958, %v3137
      %3241 = vst.msk [vmem:[#allocation2 + $0x101] sm:$0xff] %vm1958, %v3138
      %3242 = vst.msk [vmem:[#allocation2 + $0x109] sm:$0xff] %vm1958, %v3139
      %3243 = vst.msk [vmem:[#allocation2 + $0x111] sm:$0xff] %vm1958, %v3140
      %3244 = vst.msk [vmem:[#allocation2 + $0x119] sm:$0xff] %vm1958, %v3141
      %3245 = vst.msk [vmem:[#allocation2 + $0x121] sm:$0xff] %vm1958, %v3142
      %3246 = vst.msk [vmem:[#allocation2 + $0x129] sm:$0xff] %vm1958, %v3143
      %3247 = vst.msk [vmem:[#allocation2 + $0x131] sm:$0xff] %vm1958, %v3144
      %3248 = vst.msk [vmem:[#allocation2 + $0x139] sm:$0xff] %vm1958, %v3145
      %3249 = vst.msk [vmem:[#allocation2 + $0x141] sm:$0xff] %vm1958, %v3146
      %3250 = vst.msk [vmem:[#allocation2 + $0x149] sm:$0xff] %vm1958, %v3147
      %3251 = vst.msk [vmem:[#allocation2 + $0x151] sm:$0xff] %vm1958, %v3148
      %3252 = vst.msk [vmem:[#allocation2 + $0x159] sm:$0xff] %vm1958, %v3149
      %3253 = vst.msk [vmem:[#allocation2 + $0x161] sm:$0xff] %vm1958, %v3150
      %3254 = vst.msk [vmem:[#allocation2 + $0x169] sm:$0xff] %vm1958, %v3151
      %3255 = vst.msk [vmem:[#allocation2 + $0x171] sm:$0xff] %vm1958, %v3152
      %3256 = vst.msk [vmem:[#allocation2 + $0x179] sm:$0xff] %vm1958, %v3153
      %3257 = vst.msk [vmem:[#allocation2 + $0x181] sm:$0xff] %vm1958, %v3154
      %3258 = vst.msk [vmem:[#allocation2 + $0x189] sm:$0xff] %vm1958, %v3155
      %3259 = vst.msk [vmem:[#allocation2 + $0x191] sm:$0xff] %vm1958, %v3156
      %v3260 = vld [vmem:[#allocation2] sm:$0xff]
      %v3261 = vld [vmem:[#allocation2 + $0x8] sm:$0xff]
      %v3262 = vld [vmem:[#allocation2 + $0x10] sm:$0xff]
      %v3263 = vld [vmem:[#allocation2 + $0x18] sm:$0xff]
      %v3264 = vld [vmem:[#allocation2 + $0x20] sm:$0xff]
      %v3265 = vld [vmem:[#allocation2 + $0x28] sm:$0xff]
      %v3266 = vld [vmem:[#allocation2 + $0x30] sm:$0xff]
      %v3267 = vld [vmem:[#allocation2 + $0x38] sm:$0xff]
      %v3268 = vld [vmem:[#allocation2 + $0x40] sm:$0xff]
      %v3269 = vld [vmem:[#allocation2 + $0x48] sm:$0xff]
      %v3270 = vld [vmem:[#allocation2 + $0x50] sm:$0xff]
      %v3271 = vld [vmem:[#allocation2 + $0x58] sm:$0xff]
      %v3272 = vld [vmem:[#allocation2 + $0x60] sm:$0xff]
      %v3273 = vld [vmem:[#allocation2 + $0x68] sm:$0xff]
      %v3274 = vld [vmem:[#allocation2 + $0x70] sm:$0xff]
      %v3275 = vld [vmem:[#allocation2 + $0x78] sm:$0xff]
      %v3276 = vld [vmem:[#allocation2 + $0x80] sm:$0xff]
      %v3277 = vld [vmem:[#allocation2 + $0x88] sm:$0xff]
      %v3278 = vld [vmem:[#allocation2 + $0x90] sm:$0xff]
      %v3279 = vld [vmem:[#allocation2 + $0x98] sm:$0xff]
      %v3280 = vld [vmem:[#allocation2 + $0xa0] sm:$0xff]
      %v3281 = vld [vmem:[#allocation2 + $0xa8] sm:$0xff]
      %v3282 = vld [vmem:[#allocation2 + $0xb0] sm:$0xff]
      %v3283 = vld [vmem:[#allocation2 + $0xb8] sm:$0xff]
      %v3284 = vld [vmem:[#allocation2 + $0xc0] sm:$0xff]
      %v3285 = vld [vmem:[#allocation2 + $0xc8] sm:$0xff]
      %v3286 = vld [vmem:[#allocation2 + $0xd0] sm:$0xff]
      %v3287 = vld [vmem:[#allocation2 + $0xd8] sm:$0xff]
      %v3288 = vld [vmem:[#allocation2 + $0xe0] sm:$0xff]
      %v3289 = vld [vmem:[#allocation2 + $0xe8] sm:$0xff]
      %v3290 = vld [vmem:[#allocation2 + $0xf0] sm:$0xff]
      %v3291 = vld [vmem:[#allocation2 + $0xf8] sm:$0xff]
      %v3292 = vld [vmem:[#allocation2 + $0x100] sm:$0xff]
      %v3293 = vld [vmem:[#allocation2 + $0x108] sm:$0xff]
      %v3294 = vld [vmem:[#allocation2 + $0x110] sm:$0xff]
      %v3295 = vld [vmem:[#allocation2 + $0x118] sm:$0xff]
      %v3296 = vld [vmem:[#allocation2 + $0x120] sm:$0xff]
      %v3297 = vld [vmem:[#allocation2 + $0x128] sm:$0xff]
      %v3298 = vld [vmem:[#allocation2 + $0x130] sm:$0xff]
      %v3299 = vld [vmem:[#allocation2 + $0x138] sm:$0xff]
      %v3300 = vld [vmem:[#allocation2 + $0x140] sm:$0xff]
      %v3301 = vld [vmem:[#allocation2 + $0x148] sm:$0xff]
      %v3302 = vld [vmem:[#allocation2 + $0x150] sm:$0xff]
      %v3303 = vld [vmem:[#allocation2 + $0x158] sm:$0xff]
      %v3304 = vld [vmem:[#allocation2 + $0x160] sm:$0xff]
      %v3305 = vld [vmem:[#allocation2 + $0x168] sm:$0xff]
      %v3306 = vld [vmem:[#allocation2 + $0x170] sm:$0xff]
      %v3307 = vld [vmem:[#allocation2 + $0x178] sm:$0xff]
      %v3308 = vld [vmem:[#allocation2 + $0x180] sm:$0xff]
      %v3309 = vld [vmem:[#allocation2 + $0x188] sm:$0xff]
      %v3310 = vld [vmem:[#allocation2 + $0x190] sm:$0xff]
      %v3311 = vld [vmem:[#allocation2 + $0x198] sm:$0xff]
      %v3312 = vld [vmem:[#allocation2 + $0x1a0] sm:$0xff]
      %v3313 = vld [vmem:[#allocation2 + $0x1a8] sm:$0xff]
      %v3314 = vld [vmem:[#allocation2 + $0x1b0] sm:$0xff]
      %v3364 = vrot.slane %v3260, 1
      %v3365 = vrot.slane %v3261, 1
      %v3366 = vsel %vm531, %v3364, %v3365
      %v3367 = vrot.slane %v3262, 1
      %v3368 = vsel %vm531, %v3365, %v3367
      %v3369 = vrot.slane %v3263, 1
      %v3370 = vsel %vm531, %v3367, %v3369
      %v3371 = vrot.slane %v3264, 1
      %v3372 = vsel %vm531, %v3369, %v3371
      %v3373 = vrot.slane %v3265, 1
      %v3374 = vsel %vm531, %v3371, %v3373
      %v3375 = vrot.slane %v3266, 1
      %v3376 = vsel %vm531, %v3373, %v3375
      %v3377 = vrot.slane %v3267, 1
      %v3378 = vsel %vm531, %v3375, %v3377
      %v3379 = vrot.slane %v3268, 1
      %v3380 = vsel %vm531, %v3377, %v3379
      %v3381 = vrot.slane %v3269, 1
      %v3382 = vsel %vm531, %v3379, %v3381
      %v3383 = vrot.slane %v3270, 1
      %v3384 = vsel %vm531, %v3381, %v3383
      %v3385 = vrot.slane %v3271, 1
      %v3386 = vsel %vm531, %v3383, %v3385
      %v3387 = vrot.slane %v3272, 1
      %v3388 = vsel %vm531, %v3385, %v3387
      %v3389 = vrot.slane %v3273, 1
      %v3390 = vsel %vm531, %v3387, %v3389
      %v3391 = vrot.slane %v3274, 1
      %v3392 = vsel %vm531, %v3389, %v3391
      %v3393 = vrot.slane %v3275, 1
      %v3394 = vsel %vm531, %v3391, %v3393
      %v3395 = vrot.slane %v3276, 1
      %v3396 = vsel %vm531, %v3393, %v3395
      %v3397 = vrot.slane %v3277, 1
      %v3398 = vsel %vm531, %v3395, %v3397
      %v3399 = vrot.slane %v3278, 1
      %v3400 = vsel %vm531, %v3397, %v3399
      %v3401 = vrot.slane %v3279, 1
      %v3402 = vsel %vm531, %v3399, %v3401
      %v3403 = vrot.slane %v3280, 1
      %v3404 = vsel %vm531, %v3401, %v3403
      %v3405 = vrot.slane %v3281, 1
      %v3406 = vsel %vm531, %v3403, %v3405
      %v3407 = vrot.slane %v3282, 1
      %v3408 = vsel %vm531, %v3405, %v3407
      %v3409 = vrot.slane %v3283, 1
      %v3410 = vsel %vm531, %v3407, %v3409
      %v3411 = vrot.slane %v3284, 1
      %v3412 = vsel %vm531, %v3409, %v3411
      %v3413 = vrot.slane %v3285, 1
      %v3414 = vsel %vm531, %v3411, %v3413
      %v3415 = vrot.slane %v3286, 1
      %v3416 = vsel %vm531, %v3413, %v3415
      %v3417 = vrot.slane %v3287, 1
      %v3418 = vsel %vm531, %v3415, %v3417
      %v3419 = vrot.slane %v3288, 1
      %v3420 = vsel %vm531, %v3417, %v3419
      %v3421 = vrot.slane %v3289, 1
      %v3422 = vsel %vm531, %v3419, %v3421
      %v3423 = vrot.slane %v3290, 1
      %v3424 = vsel %vm531, %v3421, %v3423
      %v3425 = vrot.slane %v3291, 1
      %v3426 = vsel %vm531, %v3423, %v3425
      %v3427 = vrot.slane %v3292, 1
      %v3428 = vsel %vm531, %v3425, %v3427
      %v3429 = vrot.slane %v3293, 1
      %v3430 = vsel %vm531, %v3427, %v3429
      %v3431 = vrot.slane %v3294, 1
      %v3432 = vsel %vm531, %v3429, %v3431
      %v3433 = vrot.slane %v3295, 1
      %v3434 = vsel %vm531, %v3431, %v3433
      %v3435 = vrot.slane %v3296, 1
      %v3436 = vsel %vm531, %v3433, %v3435
      %v3437 = vrot.slane %v3297, 1
      %v3438 = vsel %vm531, %v3435, %v3437
      %v3439 = vrot.slane %v3298, 1
      %v3440 = vsel %vm531, %v3437, %v3439
      %v3441 = vrot.slane %v3299, 1
      %v3442 = vsel %vm531, %v3439, %v3441
      %v3443 = vrot.slane %v3300, 1
      %v3444 = vsel %vm531, %v3441, %v3443
      %v3445 = vrot.slane %v3301, 1
      %v3446 = vsel %vm531, %v3443, %v3445
      %v3447 = vrot.slane %v3302, 1
      %v3448 = vsel %vm531, %v3445, %v3447
      %v3449 = vrot.slane %v3303, 1
      %v3450 = vsel %vm531, %v3447, %v3449
      %v3451 = vrot.slane %v3304, 1
      %v3452 = vsel %vm531, %v3449, %v3451
      %v3453 = vrot.slane %v3305, 1
      %v3454 = vsel %vm531, %v3451, %v3453
      %v3455 = vrot.slane %v3306, 1
      %v3456 = vsel %vm531, %v3453, %v3455
      %v3457 = vrot.slane %v3307, 1
      %v3458 = vsel %vm531, %v3455, %v3457
      %v3459 = vrot.slane %v3308, 1
      %v3460 = vsel %vm531, %v3457, %v3459
      %3461 = vrot.lane.b32.xlu0 %v3366, 16
      %v3462 = vpop.permute.xlu0 %3461
      %3463 = vrot.lane.b32.xlu0 %v3368, 16
      %v3464 = vpop.permute.xlu0 %3463
      %3465 = vrot.lane.b32.xlu0 %v3370, 16
      %v3466 = vpop.permute.xlu0 %3465
      %3467 = vrot.lane.b32.xlu0 %v3372, 16
      %v3468 = vpop.permute.xlu0 %3467
      %3469 = vrot.lane.b32.xlu0 %v3374, 16
      %v3470 = vpop.permute.xlu0 %3469
      %3471 = vrot.lane.b32.xlu0 %v3376, 16
      %v3472 = vpop.permute.xlu0 %3471
      %3473 = vrot.lane.b32.xlu0 %v3378, 16
      %v3474 = vpop.permute.xlu0 %3473
      %3475 = vrot.lane.b32.xlu0 %v3380, 16
      %v3476 = vpop.permute.xlu0 %3475
      %3477 = vrot.lane.b32.xlu0 %v3382, 16
      %v3478 = vpop.permute.xlu0 %3477
      %3479 = vrot.lane.b32.xlu0 %v3384, 16
      %v3480 = vpop.permute.xlu0 %3479
      %3481 = vrot.lane.b32.xlu0 %v3386, 16
      %v3482 = vpop.permute.xlu0 %3481
      %3483 = vrot.lane.b32.xlu0 %v3388, 16
      %v3484 = vpop.permute.xlu0 %3483
      %3485 = vrot.lane.b32.xlu0 %v3390, 16
      %v3486 = vpop.permute.xlu0 %3485
      %3487 = vrot.lane.b32.xlu0 %v3392, 16
      %v3488 = vpop.permute.xlu0 %3487
      %3489 = vrot.lane.b32.xlu0 %v3394, 16
      %v3490 = vpop.permute.xlu0 %3489
      %3491 = vrot.lane.b32.xlu0 %v3396, 16
      %v3492 = vpop.permute.xlu0 %3491
      %3493 = vrot.lane.b32.xlu0 %v3398, 16
      %v3494 = vpop.permute.xlu0 %3493
      %3495 = vrot.lane.b32.xlu0 %v3400, 16
      %v3496 = vpop.permute.xlu0 %3495
      %3497 = vrot.lane.b32.xlu0 %v3402, 16
      %v3498 = vpop.permute.xlu0 %3497
      %3499 = vrot.lane.b32.xlu0 %v3404, 16
      %v3500 = vpop.permute.xlu0 %3499
      %3501 = vrot.lane.b32.xlu0 %v3406, 16
      %v3502 = vpop.permute.xlu0 %3501
      %3503 = vrot.lane.b32.xlu0 %v3408, 16
      %v3504 = vpop.permute.xlu0 %3503
      %3505 = vrot.lane.b32.xlu0 %v3410, 16
      %v3506 = vpop.permute.xlu0 %3505
      %3507 = vrot.lane.b32.xlu0 %v3412, 16
      %v3508 = vpop.permute.xlu0 %3507
      %3509 = vrot.lane.b32.xlu0 %v3414, 16
      %v3510 = vpop.permute.xlu0 %3509
      %3511 = vrot.lane.b32.xlu0 %v3416, 16
      %v3512 = vpop.permute.xlu0 %3511
      %3513 = vrot.lane.b32.xlu0 %v3418, 16
      %v3514 = vpop.permute.xlu0 %3513
      %3515 = vrot.lane.b32.xlu0 %v3420, 16
      %v3516 = vpop.permute.xlu0 %3515
      %3517 = vrot.lane.b32.xlu0 %v3422, 16
      %v3518 = vpop.permute.xlu0 %3517
      %3519 = vrot.lane.b32.xlu0 %v3424, 16
      %v3520 = vpop.permute.xlu0 %3519
      %3521 = vrot.lane.b32.xlu0 %v3426, 16
      %v3522 = vpop.permute.xlu0 %3521
      %3523 = vrot.lane.b32.xlu0 %v3428, 16
      %v3524 = vpop.permute.xlu0 %3523
      %3525 = vrot.lane.b32.xlu0 %v3430, 16
      %v3526 = vpop.permute.xlu0 %3525
      %3527 = vrot.lane.b32.xlu0 %v3432, 16
      %v3528 = vpop.permute.xlu0 %3527
      %3529 = vrot.lane.b32.xlu0 %v3434, 16
      %v3530 = vpop.permute.xlu0 %3529
      %3531 = vrot.lane.b32.xlu0 %v3436, 16
      %v3532 = vpop.permute.xlu0 %3531
      %3533 = vrot.lane.b32.xlu0 %v3438, 16
      %v3534 = vpop.permute.xlu0 %3533
      %3535 = vrot.lane.b32.xlu0 %v3440, 16
      %v3536 = vpop.permute.xlu0 %3535
      %3537 = vrot.lane.b32.xlu0 %v3442, 16
      %v3538 = vpop.permute.xlu0 %3537
      %3539 = vrot.lane.b32.xlu0 %v3444, 16
      %v3540 = vpop.permute.xlu0 %3539
      %3541 = vrot.lane.b32.xlu0 %v3446, 16
      %v3542 = vpop.permute.xlu0 %3541
      %3543 = vrot.lane.b32.xlu0 %v3448, 16
      %v3544 = vpop.permute.xlu0 %3543
      %3545 = vrot.lane.b32.xlu0 %v3450, 16
      %v3546 = vpop.permute.xlu0 %3545
      %3547 = vrot.lane.b32.xlu0 %v3452, 16
      %v3548 = vpop.permute.xlu0 %3547
      %3549 = vrot.lane.b32.xlu0 %v3454, 16
      %v3550 = vpop.permute.xlu0 %3549
      %3551 = vrot.lane.b32.xlu0 %v3456, 16
      %v3552 = vpop.permute.xlu0 %3551
      %3553 = vrot.lane.b32.xlu0 %v3458, 16
      %v3554 = vpop.permute.xlu0 %3553
      %3555 = vrot.lane.b32.xlu0 %v3460, 16
      %v3556 = vpop.permute.xlu0 %3555
      %v3605 = vrot.slane %v3260, 2
      %v3606 = vrot.slane %v3261, 2
      %v3607 = vsel %vm773, %v3605, %v3606
      %v3608 = vrot.slane %v3262, 2
      %v3609 = vsel %vm773, %v3606, %v3608
      %v3610 = vrot.slane %v3263, 2
      %v3611 = vsel %vm773, %v3608, %v3610
      %v3612 = vrot.slane %v3264, 2
      %v3613 = vsel %vm773, %v3610, %v3612
      %v3614 = vrot.slane %v3265, 2
      %v3615 = vsel %vm773, %v3612, %v3614
      %v3616 = vrot.slane %v3266, 2
      %v3617 = vsel %vm773, %v3614, %v3616
      %v3618 = vrot.slane %v3267, 2
      %v3619 = vsel %vm773, %v3616, %v3618
      %v3620 = vrot.slane %v3268, 2
      %v3621 = vsel %vm773, %v3618, %v3620
      %v3622 = vrot.slane %v3269, 2
      %v3623 = vsel %vm773, %v3620, %v3622
      %v3624 = vrot.slane %v3270, 2
      %v3625 = vsel %vm773, %v3622, %v3624
      %v3626 = vrot.slane %v3271, 2
      %v3627 = vsel %vm773, %v3624, %v3626
      %v3628 = vrot.slane %v3272, 2
      %v3629 = vsel %vm773, %v3626, %v3628
      %v3630 = vrot.slane %v3273, 2
      %v3631 = vsel %vm773, %v3628, %v3630
      %v3632 = vrot.slane %v3274, 2
      %v3633 = vsel %vm773, %v3630, %v3632
      %v3634 = vrot.slane %v3275, 2
      %v3635 = vsel %vm773, %v3632, %v3634
      %v3636 = vrot.slane %v3276, 2
      %v3637 = vsel %vm773, %v3634, %v3636
      %v3638 = vrot.slane %v3277, 2
      %v3639 = vsel %vm773, %v3636, %v3638
      %v3640 = vrot.slane %v3278, 2
      %v3641 = vsel %vm773, %v3638, %v3640
      %v3642 = vrot.slane %v3279, 2
      %v3643 = vsel %vm773, %v3640, %v3642
      %v3644 = vrot.slane %v3280, 2
      %v3645 = vsel %vm773, %v3642, %v3644
      %v3646 = vrot.slane %v3281, 2
      %v3647 = vsel %vm773, %v3644, %v3646
      %v3648 = vrot.slane %v3282, 2
      %v3649 = vsel %vm773, %v3646, %v3648
      %v3650 = vrot.slane %v3283, 2
      %v3651 = vsel %vm773, %v3648, %v3650
      %v3652 = vrot.slane %v3284, 2
      %v3653 = vsel %vm773, %v3650, %v3652
      %v3654 = vrot.slane %v3285, 2
      %v3655 = vsel %vm773, %v3652, %v3654
      %v3656 = vrot.slane %v3286, 2
      %v3657 = vsel %vm773, %v3654, %v3656
      %v3658 = vrot.slane %v3287, 2
      %v3659 = vsel %vm773, %v3656, %v3658
      %v3660 = vrot.slane %v3288, 2
      %v3661 = vsel %vm773, %v3658, %v3660
      %v3662 = vrot.slane %v3289, 2
      %v3663 = vsel %vm773, %v3660, %v3662
      %v3664 = vrot.slane %v3290, 2
      %v3665 = vsel %vm773, %v3662, %v3664
      %v3666 = vrot.slane %v3291, 2
      %v3667 = vsel %vm773, %v3664, %v3666
      %v3668 = vrot.slane %v3292, 2
      %v3669 = vsel %vm773, %v3666, %v3668
      %v3670 = vrot.slane %v3293, 2
      %v3671 = vsel %vm773, %v3668, %v3670
      %v3672 = vrot.slane %v3294, 2
      %v3673 = vsel %vm773, %v3670, %v3672
      %v3674 = vrot.slane %v3295, 2
      %v3675 = vsel %vm773, %v3672, %v3674
      %v3676 = vrot.slane %v3296, 2
      %v3677 = vsel %vm773, %v3674, %v3676
      %v3678 = vrot.slane %v3297, 2
      %v3679 = vsel %vm773, %v3676, %v3678
      %v3680 = vrot.slane %v3298, 2
      %v3681 = vsel %vm773, %v3678, %v3680
      %v3682 = vrot.slane %v3299, 2
      %v3683 = vsel %vm773, %v3680, %v3682
      %v3684 = vrot.slane %v3300, 2
      %v3685 = vsel %vm773, %v3682, %v3684
      %v3686 = vrot.slane %v3301, 2
      %v3687 = vsel %vm773, %v3684, %v3686
      %v3688 = vrot.slane %v3302, 2
      %v3689 = vsel %vm773, %v3686, %v3688
      %v3690 = vrot.slane %v3303, 2
      %v3691 = vsel %vm773, %v3688, %v3690
      %v3692 = vrot.slane %v3304, 2
      %v3693 = vsel %vm773, %v3690, %v3692
      %v3694 = vrot.slane %v3305, 2
      %v3695 = vsel %vm773, %v3692, %v3694
      %v3696 = vrot.slane %v3306, 2
      %v3697 = vsel %vm773, %v3694, %v3696
      %v3698 = vrot.slane %v3307, 2
      %v3699 = vsel %vm773, %v3696, %v3698
      %v3700 = vrot.slane %v3308, 2
      %v3701 = vsel %vm773, %v3698, %v3700
      %3702 = vrot.lane.b32.xlu0 %v3607, 32
      %v3703 = vpop.permute.xlu0 %3702
      %3704 = vrot.lane.b32.xlu0 %v3609, 32
      %v3705 = vpop.permute.xlu0 %3704
      %3706 = vrot.lane.b32.xlu0 %v3611, 32
      %v3707 = vpop.permute.xlu0 %3706
      %3708 = vrot.lane.b32.xlu0 %v3613, 32
      %v3709 = vpop.permute.xlu0 %3708
      %3710 = vrot.lane.b32.xlu0 %v3615, 32
      %v3711 = vpop.permute.xlu0 %3710
      %3712 = vrot.lane.b32.xlu0 %v3617, 32
      %v3713 = vpop.permute.xlu0 %3712
      %3714 = vrot.lane.b32.xlu0 %v3619, 32
      %v3715 = vpop.permute.xlu0 %3714
      %3716 = vrot.lane.b32.xlu0 %v3621, 32
      %v3717 = vpop.permute.xlu0 %3716
      %3718 = vrot.lane.b32.xlu0 %v3623, 32
      %v3719 = vpop.permute.xlu0 %3718
      %3720 = vrot.lane.b32.xlu0 %v3625, 32
      %v3721 = vpop.permute.xlu0 %3720
      %3722 = vrot.lane.b32.xlu0 %v3627, 32
      %v3723 = vpop.permute.xlu0 %3722
      %3724 = vrot.lane.b32.xlu0 %v3629, 32
      %v3725 = vpop.permute.xlu0 %3724
      %3726 = vrot.lane.b32.xlu0 %v3631, 32
      %v3727 = vpop.permute.xlu0 %3726
      %3728 = vrot.lane.b32.xlu0 %v3633, 32
      %v3729 = vpop.permute.xlu0 %3728
      %3730 = vrot.lane.b32.xlu0 %v3635, 32
      %v3731 = vpop.permute.xlu0 %3730
      %3732 = vrot.lane.b32.xlu0 %v3637, 32
      %v3733 = vpop.permute.xlu0 %3732
      %3734 = vrot.lane.b32.xlu0 %v3639, 32
      %v3735 = vpop.permute.xlu0 %3734
      %3736 = vrot.lane.b32.xlu0 %v3641, 32
      %v3737 = vpop.permute.xlu0 %3736
      %3738 = vrot.lane.b32.xlu0 %v3643, 32
      %v3739 = vpop.permute.xlu0 %3738
      %3740 = vrot.lane.b32.xlu0 %v3645, 32
      %v3741 = vpop.permute.xlu0 %3740
      %3742 = vrot.lane.b32.xlu0 %v3647, 32
      %v3743 = vpop.permute.xlu0 %3742
      %3744 = vrot.lane.b32.xlu0 %v3649, 32
      %v3745 = vpop.permute.xlu0 %3744
      %3746 = vrot.lane.b32.xlu0 %v3651, 32
      %v3747 = vpop.permute.xlu0 %3746
      %3748 = vrot.lane.b32.xlu0 %v3653, 32
      %v3749 = vpop.permute.xlu0 %3748
      %3750 = vrot.lane.b32.xlu0 %v3655, 32
      %v3751 = vpop.permute.xlu0 %3750
      %3752 = vrot.lane.b32.xlu0 %v3657, 32
      %v3753 = vpop.permute.xlu0 %3752
      %3754 = vrot.lane.b32.xlu0 %v3659, 32
      %v3755 = vpop.permute.xlu0 %3754
      %3756 = vrot.lane.b32.xlu0 %v3661, 32
      %v3757 = vpop.permute.xlu0 %3756
      %3758 = vrot.lane.b32.xlu0 %v3663, 32
      %v3759 = vpop.permute.xlu0 %3758
      %3760 = vrot.lane.b32.xlu0 %v3665, 32
      %v3761 = vpop.permute.xlu0 %3760
      %3762 = vrot.lane.b32.xlu0 %v3667, 32
      %v3763 = vpop.permute.xlu0 %3762
      %3764 = vrot.lane.b32.xlu0 %v3669, 32
      %v3765 = vpop.permute.xlu0 %3764
      %3766 = vrot.lane.b32.xlu0 %v3671, 32
      %v3767 = vpop.permute.xlu0 %3766
      %3768 = vrot.lane.b32.xlu0 %v3673, 32
      %v3769 = vpop.permute.xlu0 %3768
      %3770 = vrot.lane.b32.xlu0 %v3675, 32
      %v3771 = vpop.permute.xlu0 %3770
      %3772 = vrot.lane.b32.xlu0 %v3677, 32
      %v3773 = vpop.permute.xlu0 %3772
      %3774 = vrot.lane.b32.xlu0 %v3679, 32
      %v3775 = vpop.permute.xlu0 %3774
      %3776 = vrot.lane.b32.xlu0 %v3681, 32
      %v3777 = vpop.permute.xlu0 %3776
      %3778 = vrot.lane.b32.xlu0 %v3683, 32
      %v3779 = vpop.permute.xlu0 %3778
      %3780 = vrot.lane.b32.xlu0 %v3685, 32
      %v3781 = vpop.permute.xlu0 %3780
      %3782 = vrot.lane.b32.xlu0 %v3687, 32
      %v3783 = vpop.permute.xlu0 %3782
      %3784 = vrot.lane.b32.xlu0 %v3689, 32
      %v3785 = vpop.permute.xlu0 %3784
      %3786 = vrot.lane.b32.xlu0 %v3691, 32
      %v3787 = vpop.permute.xlu0 %3786
      %3788 = vrot.lane.b32.xlu0 %v3693, 32
      %v3789 = vpop.permute.xlu0 %3788
      %3790 = vrot.lane.b32.xlu0 %v3695, 32
      %v3791 = vpop.permute.xlu0 %3790
      %3792 = vrot.lane.b32.xlu0 %v3697, 32
      %v3793 = vpop.permute.xlu0 %3792
      %3794 = vrot.lane.b32.xlu0 %v3699, 32
      %v3795 = vpop.permute.xlu0 %3794
      %3796 = vrot.lane.b32.xlu0 %v3701, 32
      %v3797 = vpop.permute.xlu0 %3796
      %3848 = vrot.lane.b32.xlu0 %v3263, 48
      %v3849 = vpop.permute.xlu0 %3848
      %3850 = vrot.lane.b32.xlu0 %v3264, 48
      %v3851 = vpop.permute.xlu0 %3850
      %3852 = vrot.lane.b32.xlu0 %v3265, 48
      %v3853 = vpop.permute.xlu0 %3852
      %3854 = vrot.lane.b32.xlu0 %v3266, 48
      %v3855 = vpop.permute.xlu0 %3854
      %3856 = vrot.lane.b32.xlu0 %v3267, 48
      %v3857 = vpop.permute.xlu0 %3856
      %3858 = vrot.lane.b32.xlu0 %v3268, 48
      %v3859 = vpop.permute.xlu0 %3858
      %3860 = vrot.lane.b32.xlu0 %v3269, 48
      %v3861 = vpop.permute.xlu0 %3860
      %3862 = vrot.lane.b32.xlu0 %v3270, 48
      %v3863 = vpop.permute.xlu0 %3862
      %3864 = vrot.lane.b32.xlu0 %v3271, 48
      %v3865 = vpop.permute.xlu0 %3864
      %3866 = vrot.lane.b32.xlu0 %v3272, 48
      %v3867 = vpop.permute.xlu0 %3866
      %3868 = vrot.lane.b32.xlu0 %v3273, 48
      %v3869 = vpop.permute.xlu0 %3868
      %3870 = vrot.lane.b32.xlu0 %v3274, 48
      %v3871 = vpop.permute.xlu0 %3870
      %3872 = vrot.lane.b32.xlu0 %v3275, 48
      %v3873 = vpop.permute.xlu0 %3872
      %3874 = vrot.lane.b32.xlu0 %v3276, 48
      %v3875 = vpop.permute.xlu0 %3874
      %3876 = vrot.lane.b32.xlu0 %v3277, 48
      %v3877 = vpop.permute.xlu0 %3876
      %3878 = vrot.lane.b32.xlu0 %v3278, 48
      %v3879 = vpop.permute.xlu0 %3878
      %3880 = vrot.lane.b32.xlu0 %v3279, 48
      %v3881 = vpop.permute.xlu0 %3880
      %3882 = vrot.lane.b32.xlu0 %v3280, 48
      %v3883 = vpop.permute.xlu0 %3882
      %3884 = vrot.lane.b32.xlu0 %v3281, 48
      %v3885 = vpop.permute.xlu0 %3884
      %3886 = vrot.lane.b32.xlu0 %v3282, 48
      %v3887 = vpop.permute.xlu0 %3886
      %3888 = vrot.lane.b32.xlu0 %v3283, 48
      %v3889 = vpop.permute.xlu0 %3888
      %3890 = vrot.lane.b32.xlu0 %v3284, 48
      %v3891 = vpop.permute.xlu0 %3890
      %3892 = vrot.lane.b32.xlu0 %v3285, 48
      %v3893 = vpop.permute.xlu0 %3892
      %3894 = vrot.lane.b32.xlu0 %v3286, 48
      %v3895 = vpop.permute.xlu0 %3894
      %3896 = vrot.lane.b32.xlu0 %v3287, 48
      %v3897 = vpop.permute.xlu0 %3896
      %3898 = vrot.lane.b32.xlu0 %v3288, 48
      %v3899 = vpop.permute.xlu0 %3898
      %3900 = vrot.lane.b32.xlu0 %v3289, 48
      %v3901 = vpop.permute.xlu0 %3900
      %3902 = vrot.lane.b32.xlu0 %v3290, 48
      %v3903 = vpop.permute.xlu0 %3902
      %3904 = vrot.lane.b32.xlu0 %v3291, 48
      %v3905 = vpop.permute.xlu0 %3904
      %3906 = vrot.lane.b32.xlu0 %v3292, 48
      %v3907 = vpop.permute.xlu0 %3906
      %3908 = vrot.lane.b32.xlu0 %v3293, 48
      %v3909 = vpop.permute.xlu0 %3908
      %3910 = vrot.lane.b32.xlu0 %v3294, 48
      %v3911 = vpop.permute.xlu0 %3910
      %3912 = vrot.lane.b32.xlu0 %v3295, 48
      %v3913 = vpop.permute.xlu0 %3912
      %3914 = vrot.lane.b32.xlu0 %v3296, 48
      %v3915 = vpop.permute.xlu0 %3914
      %3916 = vrot.lane.b32.xlu0 %v3297, 48
      %v3917 = vpop.permute.xlu0 %3916
      %3918 = vrot.lane.b32.xlu0 %v3298, 48
      %v3919 = vpop.permute.xlu0 %3918
      %3920 = vrot.lane.b32.xlu0 %v3299, 48
      %v3921 = vpop.permute.xlu0 %3920
      %3922 = vrot.lane.b32.xlu0 %v3300, 48
      %v3923 = vpop.permute.xlu0 %3922
      %3924 = vrot.lane.b32.xlu0 %v3301, 48
      %v3925 = vpop.permute.xlu0 %3924
      %3926 = vrot.lane.b32.xlu0 %v3302, 48
      %v3927 = vpop.permute.xlu0 %3926
      %3928 = vrot.lane.b32.xlu0 %v3303, 48
      %v3929 = vpop.permute.xlu0 %3928
      %3930 = vrot.lane.b32.xlu0 %v3304, 48
      %v3931 = vpop.permute.xlu0 %3930
      %3932 = vrot.lane.b32.xlu0 %v3305, 48
      %v3933 = vpop.permute.xlu0 %3932
      %3934 = vrot.lane.b32.xlu0 %v3306, 48
      %v3935 = vpop.permute.xlu0 %3934
      %3936 = vrot.lane.b32.xlu0 %v3307, 48
      %v3937 = vpop.permute.xlu0 %3936
      %3938 = vrot.lane.b32.xlu0 %v3308, 48
      %v3939 = vpop.permute.xlu0 %3938
      %3940 = vrot.lane.b32.xlu0 %v3309, 48
      %v3941 = vpop.permute.xlu0 %3940
      %3942 = vrot.lane.b32.xlu0 %v3310, 48
      %v3943 = vpop.permute.xlu0 %3942
      %v3993 = vrot.slane %v3309, 1
      %v3994 = vsel %vm531, %v3459, %v3993
      %v3995 = vrot.slane %v3310, 1
      %v3996 = vsel %vm531, %v3993, %v3995
      %v3997 = vrot.slane %v3311, 1
      %v3998 = vsel %vm531, %v3995, %v3997
      %3999 = vrot.lane.b32.xlu0 %v3372, 64
      %v4000 = vpop.permute.xlu0 %3999
      %4001 = vrot.lane.b32.xlu0 %v3374, 64
      %v4002 = vpop.permute.xlu0 %4001
      %4003 = vrot.lane.b32.xlu0 %v3376, 64
      %v4004 = vpop.permute.xlu0 %4003
      %4005 = vrot.lane.b32.xlu0 %v3378, 64
      %v4006 = vpop.permute.xlu0 %4005
      %4007 = vrot.lane.b32.xlu0 %v3380, 64
      %v4008 = vpop.permute.xlu0 %4007
      %4009 = vrot.lane.b32.xlu0 %v3382, 64
      %v4010 = vpop.permute.xlu0 %4009
      %4011 = vrot.lane.b32.xlu0 %v3384, 64
      %v4012 = vpop.permute.xlu0 %4011
      %4013 = vrot.lane.b32.xlu0 %v3386, 64
      %v4014 = vpop.permute.xlu0 %4013
      %4015 = vrot.lane.b32.xlu0 %v3388, 64
      %v4016 = vpop.permute.xlu0 %4015
      %4017 = vrot.lane.b32.xlu0 %v3390, 64
      %v4018 = vpop.permute.xlu0 %4017
      %4019 = vrot.lane.b32.xlu0 %v3392, 64
      %v4020 = vpop.permute.xlu0 %4019
      %4021 = vrot.lane.b32.xlu0 %v3394, 64
      %v4022 = vpop.permute.xlu0 %4021
      %4023 = vrot.lane.b32.xlu0 %v3396, 64
      %v4024 = vpop.permute.xlu0 %4023
      %4025 = vrot.lane.b32.xlu0 %v3398, 64
      %v4026 = vpop.permute.xlu0 %4025
      %4027 = vrot.lane.b32.xlu0 %v3400, 64
      %v4028 = vpop.permute.xlu0 %4027
      %4029 = vrot.lane.b32.xlu0 %v3402, 64
      %v4030 = vpop.permute.xlu0 %4029
      %4031 = vrot.lane.b32.xlu0 %v3404, 64
      %v4032 = vpop.permute.xlu0 %4031
      %4033 = vrot.lane.b32.xlu0 %v3406, 64
      %v4034 = vpop.permute.xlu0 %4033
      %4035 = vrot.lane.b32.xlu0 %v3408, 64
      %v4036 = vpop.permute.xlu0 %4035
      %4037 = vrot.lane.b32.xlu0 %v3410, 64
      %v4038 = vpop.permute.xlu0 %4037
      %4039 = vrot.lane.b32.xlu0 %v3412, 64
      %v4040 = vpop.permute.xlu0 %4039
      %4041 = vrot.lane.b32.xlu0 %v3414, 64
      %v4042 = vpop.permute.xlu0 %4041
      %4043 = vrot.lane.b32.xlu0 %v3416, 64
      %v4044 = vpop.permute.xlu0 %4043
      %4045 = vrot.lane.b32.xlu0 %v3418, 64
      %v4046 = vpop.permute.xlu0 %4045
      %4047 = vrot.lane.b32.xlu0 %v3420, 64
      %v4048 = vpop.permute.xlu0 %4047
      %4049 = vrot.lane.b32.xlu0 %v3422, 64
      %v4050 = vpop.permute.xlu0 %4049
      %4051 = vrot.lane.b32.xlu0 %v3424, 64
      %v4052 = vpop.permute.xlu0 %4051
      %4053 = vrot.lane.b32.xlu0 %v3426, 64
      %v4054 = vpop.permute.xlu0 %4053
      %4055 = vrot.lane.b32.xlu0 %v3428, 64
      %v4056 = vpop.permute.xlu0 %4055
      %4057 = vrot.lane.b32.xlu0 %v3430, 64
      %v4058 = vpop.permute.xlu0 %4057
      %4059 = vrot.lane.b32.xlu0 %v3432, 64
      %v4060 = vpop.permute.xlu0 %4059
      %4061 = vrot.lane.b32.xlu0 %v3434, 64
      %v4062 = vpop.permute.xlu0 %4061
      %4063 = vrot.lane.b32.xlu0 %v3436, 64
      %v4064 = vpop.permute.xlu0 %4063
      %4065 = vrot.lane.b32.xlu0 %v3438, 64
      %v4066 = vpop.permute.xlu0 %4065
      %4067 = vrot.lane.b32.xlu0 %v3440, 64
      %v4068 = vpop.permute.xlu0 %4067
      %4069 = vrot.lane.b32.xlu0 %v3442, 64
      %v4070 = vpop.permute.xlu0 %4069
      %4071 = vrot.lane.b32.xlu0 %v3444, 64
      %v4072 = vpop.permute.xlu0 %4071
      %4073 = vrot.lane.b32.xlu0 %v3446, 64
      %v4074 = vpop.permute.xlu0 %4073
      %4075 = vrot.lane.b32.xlu0 %v3448, 64
      %v4076 = vpop.permute.xlu0 %4075
      %4077 = vrot.lane.b32.xlu0 %v3450, 64
      %v4078 = vpop.permute.xlu0 %4077
      %4079 = vrot.lane.b32.xlu0 %v3452, 64
      %v4080 = vpop.permute.xlu0 %4079
      %4081 = vrot.lane.b32.xlu0 %v3454, 64
      %v4082 = vpop.permute.xlu0 %4081
      %4083 = vrot.lane.b32.xlu0 %v3456, 64
      %v4084 = vpop.permute.xlu0 %4083
      %4085 = vrot.lane.b32.xlu0 %v3458, 64
      %v4086 = vpop.permute.xlu0 %4085
      %4087 = vrot.lane.b32.xlu0 %v3460, 64
      %v4088 = vpop.permute.xlu0 %4087
      %4089 = vrot.lane.b32.xlu0 %v3994, 64
      %v4090 = vpop.permute.xlu0 %4089
      %4091 = vrot.lane.b32.xlu0 %v3996, 64
      %v4092 = vpop.permute.xlu0 %4091
      %4093 = vrot.lane.b32.xlu0 %v3998, 64
      %v4094 = vpop.permute.xlu0 %4093
      %v4143 = vrot.slane %v3309, 2
      %v4144 = vsel %vm773, %v3700, %v4143
      %v4145 = vrot.slane %v3310, 2
      %v4146 = vsel %vm773, %v4143, %v4145
      %v4147 = vrot.slane %v3311, 2
      %v4148 = vsel %vm773, %v4145, %v4147
      %4149 = vrot.lane.b32.xlu0 %v3613, 80
      %v4150 = vpop.permute.xlu0 %4149
      %4151 = vrot.lane.b32.xlu0 %v3615, 80
      %v4152 = vpop.permute.xlu0 %4151
      %4153 = vrot.lane.b32.xlu0 %v3617, 80
      %v4154 = vpop.permute.xlu0 %4153
      %4155 = vrot.lane.b32.xlu0 %v3619, 80
      %v4156 = vpop.permute.xlu0 %4155
      %4157 = vrot.lane.b32.xlu0 %v3621, 80
      %v4158 = vpop.permute.xlu0 %4157
      %4159 = vrot.lane.b32.xlu0 %v3623, 80
      %v4160 = vpop.permute.xlu0 %4159
      %4161 = vrot.lane.b32.xlu0 %v3625, 80
      %v4162 = vpop.permute.xlu0 %4161
      %4163 = vrot.lane.b32.xlu0 %v3627, 80
      %v4164 = vpop.permute.xlu0 %4163
      %4165 = vrot.lane.b32.xlu0 %v3629, 80
      %v4166 = vpop.permute.xlu0 %4165
      %4167 = vrot.lane.b32.xlu0 %v3631, 80
      %v4168 = vpop.permute.xlu0 %4167
      %4169 = vrot.lane.b32.xlu0 %v3633, 80
      %v4170 = vpop.permute.xlu0 %4169
      %4171 = vrot.lane.b32.xlu0 %v3635, 80
      %v4172 = vpop.permute.xlu0 %4171
      %4173 = vrot.lane.b32.xlu0 %v3637, 80
      %v4174 = vpop.permute.xlu0 %4173
      %4175 = vrot.lane.b32.xlu0 %v3639, 80
      %v4176 = vpop.permute.xlu0 %4175
      %4177 = vrot.lane.b32.xlu0 %v3641, 80
      %v4178 = vpop.permute.xlu0 %4177
      %4179 = vrot.lane.b32.xlu0 %v3643, 80
      %v4180 = vpop.permute.xlu0 %4179
      %4181 = vrot.lane.b32.xlu0 %v3645, 80
      %v4182 = vpop.permute.xlu0 %4181
      %4183 = vrot.lane.b32.xlu0 %v3647, 80
      %v4184 = vpop.permute.xlu0 %4183
      %4185 = vrot.lane.b32.xlu0 %v3649, 80
      %v4186 = vpop.permute.xlu0 %4185
      %4187 = vrot.lane.b32.xlu0 %v3651, 80
      %v4188 = vpop.permute.xlu0 %4187
      %4189 = vrot.lane.b32.xlu0 %v3653, 80
      %v4190 = vpop.permute.xlu0 %4189
      %4191 = vrot.lane.b32.xlu0 %v3655, 80
      %v4192 = vpop.permute.xlu0 %4191
      %4193 = vrot.lane.b32.xlu0 %v3657, 80
      %v4194 = vpop.permute.xlu0 %4193
      %4195 = vrot.lane.b32.xlu0 %v3659, 80
      %v4196 = vpop.permute.xlu0 %4195
      %4197 = vrot.lane.b32.xlu0 %v3661, 80
      %v4198 = vpop.permute.xlu0 %4197
      %4199 = vrot.lane.b32.xlu0 %v3663, 80
      %v4200 = vpop.permute.xlu0 %4199
      %4201 = vrot.lane.b32.xlu0 %v3665, 80
      %v4202 = vpop.permute.xlu0 %4201
      %4203 = vrot.lane.b32.xlu0 %v3667, 80
      %v4204 = vpop.permute.xlu0 %4203
      %4205 = vrot.lane.b32.xlu0 %v3669, 80
      %v4206 = vpop.permute.xlu0 %4205
      %4207 = vrot.lane.b32.xlu0 %v3671, 80
      %v4208 = vpop.permute.xlu0 %4207
      %4209 = vrot.lane.b32.xlu0 %v3673, 80
      %v4210 = vpop.permute.xlu0 %4209
      %4211 = vrot.lane.b32.xlu0 %v3675, 80
      %v4212 = vpop.permute.xlu0 %4211
      %4213 = vrot.lane.b32.xlu0 %v3677, 80
      %v4214 = vpop.permute.xlu0 %4213
      %4215 = vrot.lane.b32.xlu0 %v3679, 80
      %v4216 = vpop.permute.xlu0 %4215
      %4217 = vrot.lane.b32.xlu0 %v3681, 80
      %v4218 = vpop.permute.xlu0 %4217
      %4219 = vrot.lane.b32.xlu0 %v3683, 80
      %v4220 = vpop.permute.xlu0 %4219
      %4221 = vrot.lane.b32.xlu0 %v3685, 80
      %v4222 = vpop.permute.xlu0 %4221
      %4223 = vrot.lane.b32.xlu0 %v3687, 80
      %v4224 = vpop.permute.xlu0 %4223
      %4225 = vrot.lane.b32.xlu0 %v3689, 80
      %v4226 = vpop.permute.xlu0 %4225
      %4227 = vrot.lane.b32.xlu0 %v3691, 80
      %v4228 = vpop.permute.xlu0 %4227
      %4229 = vrot.lane.b32.xlu0 %v3693, 80
      %v4230 = vpop.permute.xlu0 %4229
      %4231 = vrot.lane.b32.xlu0 %v3695, 80
      %v4232 = vpop.permute.xlu0 %4231
      %4233 = vrot.lane.b32.xlu0 %v3697, 80
      %v4234 = vpop.permute.xlu0 %4233
      %4235 = vrot.lane.b32.xlu0 %v3699, 80
      %v4236 = vpop.permute.xlu0 %4235
      %4237 = vrot.lane.b32.xlu0 %v3701, 80
      %v4238 = vpop.permute.xlu0 %4237
      %4239 = vrot.lane.b32.xlu0 %v4144, 80
      %v4240 = vpop.permute.xlu0 %4239
      %4241 = vrot.lane.b32.xlu0 %v4146, 80
      %v4242 = vpop.permute.xlu0 %4241
      %4243 = vrot.lane.b32.xlu0 %v4148, 80
      %v4244 = vpop.permute.xlu0 %4243
      %4295 = vrot.lane.b32.xlu0 %v3266, 96
      %v4296 = vpop.permute.xlu0 %4295
      %4297 = vrot.lane.b32.xlu0 %v3267, 96
      %v4298 = vpop.permute.xlu0 %4297
      %4299 = vrot.lane.b32.xlu0 %v3268, 96
      %v4300 = vpop.permute.xlu0 %4299
      %4301 = vrot.lane.b32.xlu0 %v3269, 96
      %v4302 = vpop.permute.xlu0 %4301
      %4303 = vrot.lane.b32.xlu0 %v3270, 96
      %v4304 = vpop.permute.xlu0 %4303
      %4305 = vrot.lane.b32.xlu0 %v3271, 96
      %v4306 = vpop.permute.xlu0 %4305
      %4307 = vrot.lane.b32.xlu0 %v3272, 96
      %v4308 = vpop.permute.xlu0 %4307
      %4309 = vrot.lane.b32.xlu0 %v3273, 96
      %v4310 = vpop.permute.xlu0 %4309
      %4311 = vrot.lane.b32.xlu0 %v3274, 96
      %v4312 = vpop.permute.xlu0 %4311
      %4313 = vrot.lane.b32.xlu0 %v3275, 96
      %v4314 = vpop.permute.xlu0 %4313
      %4315 = vrot.lane.b32.xlu0 %v3276, 96
      %v4316 = vpop.permute.xlu0 %4315
      %4317 = vrot.lane.b32.xlu0 %v3277, 96
      %v4318 = vpop.permute.xlu0 %4317
      %4319 = vrot.lane.b32.xlu0 %v3278, 96
      %v4320 = vpop.permute.xlu0 %4319
      %4321 = vrot.lane.b32.xlu0 %v3279, 96
      %v4322 = vpop.permute.xlu0 %4321
      %4323 = vrot.lane.b32.xlu0 %v3280, 96
      %v4324 = vpop.permute.xlu0 %4323
      %4325 = vrot.lane.b32.xlu0 %v3281, 96
      %v4326 = vpop.permute.xlu0 %4325
      %4327 = vrot.lane.b32.xlu0 %v3282, 96
      %v4328 = vpop.permute.xlu0 %4327
      %4329 = vrot.lane.b32.xlu0 %v3283, 96
      %v4330 = vpop.permute.xlu0 %4329
      %4331 = vrot.lane.b32.xlu0 %v3284, 96
      %v4332 = vpop.permute.xlu0 %4331
      %4333 = vrot.lane.b32.xlu0 %v3285, 96
      %v4334 = vpop.permute.xlu0 %4333
      %4335 = vrot.lane.b32.xlu0 %v3286, 96
      %v4336 = vpop.permute.xlu0 %4335
      %4337 = vrot.lane.b32.xlu0 %v3287, 96
      %v4338 = vpop.permute.xlu0 %4337
      %4339 = vrot.lane.b32.xlu0 %v3288, 96
      %v4340 = vpop.permute.xlu0 %4339
      %4341 = vrot.lane.b32.xlu0 %v3289, 96
      %v4342 = vpop.permute.xlu0 %4341
      %4343 = vrot.lane.b32.xlu0 %v3290, 96
      %v4344 = vpop.permute.xlu0 %4343
      %4345 = vrot.lane.b32.xlu0 %v3291, 96
      %v4346 = vpop.permute.xlu0 %4345
      %4347 = vrot.lane.b32.xlu0 %v3292, 96
      %v4348 = vpop.permute.xlu0 %4347
      %4349 = vrot.lane.b32.xlu0 %v3293, 96
      %v4350 = vpop.permute.xlu0 %4349
      %4351 = vrot.lane.b32.xlu0 %v3294, 96
      %v4352 = vpop.permute.xlu0 %4351
      %4353 = vrot.lane.b32.xlu0 %v3295, 96
      %v4354 = vpop.permute.xlu0 %4353
      %4355 = vrot.lane.b32.xlu0 %v3296, 96
      %v4356 = vpop.permute.xlu0 %4355
      %4357 = vrot.lane.b32.xlu0 %v3297, 96
      %v4358 = vpop.permute.xlu0 %4357
      %4359 = vrot.lane.b32.xlu0 %v3298, 96
      %v4360 = vpop.permute.xlu0 %4359
      %4361 = vrot.lane.b32.xlu0 %v3299, 96
      %v4362 = vpop.permute.xlu0 %4361
      %4363 = vrot.lane.b32.xlu0 %v3300, 96
      %v4364 = vpop.permute.xlu0 %4363
      %4365 = vrot.lane.b32.xlu0 %v3301, 96
      %v4366 = vpop.permute.xlu0 %4365
      %4367 = vrot.lane.b32.xlu0 %v3302, 96
      %v4368 = vpop.permute.xlu0 %4367
      %4369 = vrot.lane.b32.xlu0 %v3303, 96
      %v4370 = vpop.permute.xlu0 %4369
      %4371 = vrot.lane.b32.xlu0 %v3304, 96
      %v4372 = vpop.permute.xlu0 %4371
      %4373 = vrot.lane.b32.xlu0 %v3305, 96
      %v4374 = vpop.permute.xlu0 %4373
      %4375 = vrot.lane.b32.xlu0 %v3306, 96
      %v4376 = vpop.permute.xlu0 %4375
      %4377 = vrot.lane.b32.xlu0 %v3307, 96
      %v4378 = vpop.permute.xlu0 %4377
      %4379 = vrot.lane.b32.xlu0 %v3308, 96
      %v4380 = vpop.permute.xlu0 %4379
      %4381 = vrot.lane.b32.xlu0 %v3309, 96
      %v4382 = vpop.permute.xlu0 %4381
      %4383 = vrot.lane.b32.xlu0 %v3310, 96
      %v4384 = vpop.permute.xlu0 %4383
      %4385 = vrot.lane.b32.xlu0 %v3311, 96
      %v4386 = vpop.permute.xlu0 %4385
      %4387 = vrot.lane.b32.xlu0 %v3312, 96
      %v4388 = vpop.permute.xlu0 %4387
      %4389 = vrot.lane.b32.xlu0 %v3313, 96
      %v4390 = vpop.permute.xlu0 %4389
      %v4440 = vrot.slane %v3312, 1
      %v4441 = vsel %vm531, %v3997, %v4440
      %v4442 = vrot.slane %v3313, 1
      %v4443 = vsel %vm531, %v4440, %v4442
      %v4444 = vrot.slane %v3314, 1
      %v4445 = vsel %vm531, %v4442, %v4444
      %4446 = vrot.lane.b32.xlu0 %v3378, 112
      %v4447 = vpop.permute.xlu0 %4446
      %4448 = vrot.lane.b32.xlu0 %v3380, 112
      %v4449 = vpop.permute.xlu0 %4448
      %4450 = vrot.lane.b32.xlu0 %v3382, 112
      %v4451 = vpop.permute.xlu0 %4450
      %4452 = vrot.lane.b32.xlu0 %v3384, 112
      %v4453 = vpop.permute.xlu0 %4452
      %4454 = vrot.lane.b32.xlu0 %v3386, 112
      %v4455 = vpop.permute.xlu0 %4454
      %4456 = vrot.lane.b32.xlu0 %v3388, 112
      %v4457 = vpop.permute.xlu0 %4456
      %4458 = vrot.lane.b32.xlu0 %v3390, 112
      %v4459 = vpop.permute.xlu0 %4458
      %4460 = vrot.lane.b32.xlu0 %v3392, 112
      %v4461 = vpop.permute.xlu0 %4460
      %4462 = vrot.lane.b32.xlu0 %v3394, 112
      %v4463 = vpop.permute.xlu0 %4462
      %4464 = vrot.lane.b32.xlu0 %v3396, 112
      %v4465 = vpop.permute.xlu0 %4464
      %4466 = vrot.lane.b32.xlu0 %v3398, 112
      %v4467 = vpop.permute.xlu0 %4466
      %4468 = vrot.lane.b32.xlu0 %v3400, 112
      %v4469 = vpop.permute.xlu0 %4468
      %4470 = vrot.lane.b32.xlu0 %v3402, 112
      %v4471 = vpop.permute.xlu0 %4470
      %4472 = vrot.lane.b32.xlu0 %v3404, 112
      %v4473 = vpop.permute.xlu0 %4472
      %4474 = vrot.lane.b32.xlu0 %v3406, 112
      %v4475 = vpop.permute.xlu0 %4474
      %4476 = vrot.lane.b32.xlu0 %v3408, 112
      %v4477 = vpop.permute.xlu0 %4476
      %4478 = vrot.lane.b32.xlu0 %v3410, 112
      %v4479 = vpop.permute.xlu0 %4478
      %4480 = vrot.lane.b32.xlu0 %v3412, 112
      %v4481 = vpop.permute.xlu0 %4480
      %4482 = vrot.lane.b32.xlu0 %v3414, 112
      %v4483 = vpop.permute.xlu0 %4482
      %4484 = vrot.lane.b32.xlu0 %v3416, 112
      %v4485 = vpop.permute.xlu0 %4484
      %4486 = vrot.lane.b32.xlu0 %v3418, 112
      %v4487 = vpop.permute.xlu0 %4486
      %4488 = vrot.lane.b32.xlu0 %v3420, 112
      %v4489 = vpop.permute.xlu0 %4488
      %4490 = vrot.lane.b32.xlu0 %v3422, 112
      %v4491 = vpop.permute.xlu0 %4490
      %4492 = vrot.lane.b32.xlu0 %v3424, 112
      %v4493 = vpop.permute.xlu0 %4492
      %4494 = vrot.lane.b32.xlu0 %v3426, 112
      %v4495 = vpop.permute.xlu0 %4494
      %4496 = vrot.lane.b32.xlu0 %v3428, 112
      %v4497 = vpop.permute.xlu0 %4496
      %4498 = vrot.lane.b32.xlu0 %v3430, 112
      %v4499 = vpop.permute.xlu0 %4498
      %4500 = vrot.lane.b32.xlu0 %v3432, 112
      %v4501 = vpop.permute.xlu0 %4500
      %4502 = vrot.lane.b32.xlu0 %v3434, 112
      %v4503 = vpop.permute.xlu0 %4502
      %4504 = vrot.lane.b32.xlu0 %v3436, 112
      %v4505 = vpop.permute.xlu0 %4504
      %4506 = vrot.lane.b32.xlu0 %v3438, 112
      %v4507 = vpop.permute.xlu0 %4506
      %4508 = vrot.lane.b32.xlu0 %v3440, 112
      %v4509 = vpop.permute.xlu0 %4508
      %4510 = vrot.lane.b32.xlu0 %v3442, 112
      %v4511 = vpop.permute.xlu0 %4510
      %4512 = vrot.lane.b32.xlu0 %v3444, 112
      %v4513 = vpop.permute.xlu0 %4512
      %4514 = vrot.lane.b32.xlu0 %v3446, 112
      %v4515 = vpop.permute.xlu0 %4514
      %4516 = vrot.lane.b32.xlu0 %v3448, 112
      %v4517 = vpop.permute.xlu0 %4516
      %4518 = vrot.lane.b32.xlu0 %v3450, 112
      %v4519 = vpop.permute.xlu0 %4518
      %4520 = vrot.lane.b32.xlu0 %v3452, 112
      %v4521 = vpop.permute.xlu0 %4520
      %4522 = vrot.lane.b32.xlu0 %v3454, 112
      %v4523 = vpop.permute.xlu0 %4522
      %4524 = vrot.lane.b32.xlu0 %v3456, 112
      %v4525 = vpop.permute.xlu0 %4524
      %4526 = vrot.lane.b32.xlu0 %v3458, 112
      %v4527 = vpop.permute.xlu0 %4526
      %4528 = vrot.lane.b32.xlu0 %v3460, 112
      %v4529 = vpop.permute.xlu0 %4528
      %4530 = vrot.lane.b32.xlu0 %v3994, 112
      %v4531 = vpop.permute.xlu0 %4530
      %4532 = vrot.lane.b32.xlu0 %v3996, 112
      %v4533 = vpop.permute.xlu0 %4532
      %4534 = vrot.lane.b32.xlu0 %v3998, 112
      %v4535 = vpop.permute.xlu0 %4534
      %4536 = vrot.lane.b32.xlu0 %v4441, 112
      %v4537 = vpop.permute.xlu0 %4536
      %4538 = vrot.lane.b32.xlu0 %v4443, 112
      %v4539 = vpop.permute.xlu0 %4538
      %4540 = vrot.lane.b32.xlu0 %v4445, 112
      %v4541 = vpop.permute.xlu0 %4540
      %v4590 = vrot.slane %v3312, 2
      %v4591 = vsel %vm773, %v4147, %v4590
      %v4592 = vrot.slane %v3313, 2
      %v4593 = vsel %vm773, %v4590, %v4592
      %v4594 = vrot.slane %v3314, 2
      %v4595 = vsel %vm773, %v4592, %v4594
      %v4644 = vsel %vm1958, %v3260, %v3462
      %v4645 = vsel %vm1958, %v3261, %v3464
      %v4646 = vsel %vm1958, %v3262, %v3466
      %v4647 = vsel %vm1958, %v3263, %v3468
      %v4648 = vsel %vm1958, %v3264, %v3470
      %v4649 = vsel %vm1958, %v3265, %v3472
      %v4650 = vsel %vm1958, %v3266, %v3474
      %v4651 = vsel %vm1958, %v3267, %v3476
      %v4652 = vsel %vm1958, %v3268, %v3478
      %v4653 = vsel %vm1958, %v3269, %v3480
      %v4654 = vsel %vm1958, %v3270, %v3482
      %v4655 = vsel %vm1958, %v3271, %v3484
      %v4656 = vsel %vm1958, %v3272, %v3486
      %v4657 = vsel %vm1958, %v3273, %v3488
      %v4658 = vsel %vm1958, %v3274, %v3490
      %v4659 = vsel %vm1958, %v3275, %v3492
      %v4660 = vsel %vm1958, %v3276, %v3494
      %v4661 = vsel %vm1958, %v3277, %v3496
      %v4662 = vsel %vm1958, %v3278, %v3498
      %v4663 = vsel %vm1958, %v3279, %v3500
      %v4664 = vsel %vm1958, %v3280, %v3502
      %v4665 = vsel %vm1958, %v3281, %v3504
      %v4666 = vsel %vm1958, %v3282, %v3506
      %v4667 = vsel %vm1958, %v3283, %v3508
      %v4668 = vsel %vm1958, %v3284, %v3510
      %v4669 = vsel %vm1958, %v3285, %v3512
      %v4670 = vsel %vm1958, %v3286, %v3514
      %v4671 = vsel %vm1958, %v3287, %v3516
      %v4672 = vsel %vm1958, %v3288, %v3518
      %v4673 = vsel %vm1958, %v3289, %v3520
      %v4674 = vsel %vm1958, %v3290, %v3522
      %v4675 = vsel %vm1958, %v3291, %v3524
      %v4676 = vsel %vm1958, %v3292, %v3526
      %v4677 = vsel %vm1958, %v3293, %v3528
      %v4678 = vsel %vm1958, %v3294, %v3530
      %v4679 = vsel %vm1958, %v3295, %v3532
      %v4680 = vsel %vm1958, %v3296, %v3534
      %v4681 = vsel %vm1958, %v3297, %v3536
      %v4682 = vsel %vm1958, %v3298, %v3538
      %v4683 = vsel %vm1958, %v3299, %v3540
      %v4684 = vsel %vm1958, %v3300, %v3542
      %v4685 = vsel %vm1958, %v3301, %v3544
      %v4686 = vsel %vm1958, %v3302, %v3546
      %v4687 = vsel %vm1958, %v3303, %v3548
      %v4688 = vsel %vm1958, %v3304, %v3550
      %v4689 = vsel %vm1958, %v3305, %v3552
      %v4690 = vsel %vm1958, %v3306, %v3554
      %v4691 = vsel %vm1958, %v3307, %v3556
      %v4692 = vsel %vm2056, %v4644, %v3703
      %v4693 = vsel %vm2056, %v4645, %v3705
      %v4694 = vsel %vm2056, %v4646, %v3707
      %v4695 = vsel %vm2056, %v4647, %v3709
      %v4696 = vsel %vm2056, %v4648, %v3711
      %v4697 = vsel %vm2056, %v4649, %v3713
      %v4698 = vsel %vm2056, %v4650, %v3715
      %v4699 = vsel %vm2056, %v4651, %v3717
      %v4700 = vsel %vm2056, %v4652, %v3719
      %v4701 = vsel %vm2056, %v4653, %v3721
      %v4702 = vsel %vm2056, %v4654, %v3723
      %v4703 = vsel %vm2056, %v4655, %v3725
      %v4704 = vsel %vm2056, %v4656, %v3727
      %v4705 = vsel %vm2056, %v4657, %v3729
      %v4706 = vsel %vm2056, %v4658, %v3731
      %v4707 = vsel %vm2056, %v4659, %v3733
      %v4708 = vsel %vm2056, %v4660, %v3735
      %v4709 = vsel %vm2056, %v4661, %v3737
      %v4710 = vsel %vm2056, %v4662, %v3739
      %v4711 = vsel %vm2056, %v4663, %v3741
      %v4712 = vsel %vm2056, %v4664, %v3743
      %v4713 = vsel %vm2056, %v4665, %v3745
      %v4714 = vsel %vm2056, %v4666, %v3747
      %v4715 = vsel %vm2056, %v4667, %v3749
      %v4716 = vsel %vm2056, %v4668, %v3751
      %v4717 = vsel %vm2056, %v4669, %v3753
      %v4718 = vsel %vm2056, %v4670, %v3755
      %v4719 = vsel %vm2056, %v4671, %v3757
      %v4720 = vsel %vm2056, %v4672, %v3759
      %v4721 = vsel %vm2056, %v4673, %v3761
      %v4722 = vsel %vm2056, %v4674, %v3763
      %v4723 = vsel %vm2056, %v4675, %v3765
      %v4724 = vsel %vm2056, %v4676, %v3767
      %v4725 = vsel %vm2056, %v4677, %v3769
      %v4726 = vsel %vm2056, %v4678, %v3771
      %v4727 = vsel %vm2056, %v4679, %v3773
      %v4728 = vsel %vm2056, %v4680, %v3775
      %v4729 = vsel %vm2056, %v4681, %v3777
      %v4730 = vsel %vm2056, %v4682, %v3779
      %v4731 = vsel %vm2056, %v4683, %v3781
      %v4732 = vsel %vm2056, %v4684, %v3783
      %v4733 = vsel %vm2056, %v4685, %v3785
      %v4734 = vsel %vm2056, %v4686, %v3787
      %v4735 = vsel %vm2056, %v4687, %v3789
      %v4736 = vsel %vm2056, %v4688, %v3791
      %v4737 = vsel %vm2056, %v4689, %v3793
      %v4738 = vsel %vm2056, %v4690, %v3795
      %v4739 = vsel %vm2056, %v4691, %v3797
      %v4740 = vsel %vm2154, %v4692, %v3849
      %v4741 = vsel %vm2154, %v4693, %v3851
      %v4742 = vsel %vm2154, %v4694, %v3853
      %v4743 = vsel %vm2154, %v4695, %v3855
      %v4744 = vsel %vm2154, %v4696, %v3857
      %v4745 = vsel %vm2154, %v4697, %v3859
      %v4746 = vsel %vm2154, %v4698, %v3861
      %v4747 = vsel %vm2154, %v4699, %v3863
      %v4748 = vsel %vm2154, %v4700, %v3865
      %v4749 = vsel %vm2154, %v4701, %v3867
      %v4750 = vsel %vm2154, %v4702, %v3869
      %v4751 = vsel %vm2154, %v4703, %v3871
      %v4752 = vsel %vm2154, %v4704, %v3873
      %v4753 = vsel %vm2154, %v4705, %v3875
      %v4754 = vsel %vm2154, %v4706, %v3877
      %v4755 = vsel %vm2154, %v4707, %v3879
      %v4756 = vsel %vm2154, %v4708, %v3881
      %v4757 = vsel %vm2154, %v4709, %v3883
      %v4758 = vsel %vm2154, %v4710, %v3885
      %v4759 = vsel %vm2154, %v4711, %v3887
      %v4760 = vsel %vm2154, %v4712, %v3889
      %v4761 = vsel %vm2154, %v4713, %v3891
      %v4762 = vsel %vm2154, %v4714, %v3893
      %v4763 = vsel %vm2154, %v4715, %v3895
      %v4764 = vsel %vm2154, %v4716, %v3897
      %v4765 = vsel %vm2154, %v4717, %v3899
      %v4766 = vsel %vm2154, %v4718, %v3901
      %v4767 = vsel %vm2154, %v4719, %v3903
      %v4768 = vsel %vm2154, %v4720, %v3905
      %v4769 = vsel %vm2154, %v4721, %v3907
      %v4770 = vsel %vm2154, %v4722, %v3909
      %v4771 = vsel %vm2154, %v4723, %v3911
      %v4772 = vsel %vm2154, %v4724, %v3913
      %v4773 = vsel %vm2154, %v4725, %v3915
      %v4774 = vsel %vm2154, %v4726, %v3917
      %v4775 = vsel %vm2154, %v4727, %v3919
      %v4776 = vsel %vm2154, %v4728, %v3921
      %v4777 = vsel %vm2154, %v4729, %v3923
      %v4778 = vsel %vm2154, %v4730, %v3925
      %v4779 = vsel %vm2154, %v4731, %v3927
      %v4780 = vsel %vm2154, %v4732, %v3929
      %v4781 = vsel %vm2154, %v4733, %v3931
      %v4782 = vsel %vm2154, %v4734, %v3933
      %v4783 = vsel %vm2154, %v4735, %v3935
      %v4784 = vsel %vm2154, %v4736, %v3937
      %v4785 = vsel %vm2154, %v4737, %v3939
      %v4786 = vsel %vm2154, %v4738, %v3941
      %v4787 = vsel %vm2154, %v4739, %v3943
      %v4788 = vsel %vm2252, %v4740, %v4000
      %v4789 = vsel %vm2252, %v4741, %v4002
      %v4790 = vsel %vm2252, %v4742, %v4004
      %v4791 = vsel %vm2252, %v4743, %v4006
      %v4792 = vsel %vm2252, %v4744, %v4008
      %v4793 = vsel %vm2252, %v4745, %v4010
      %v4794 = vsel %vm2252, %v4746, %v4012
      %v4795 = vsel %vm2252, %v4747, %v4014
      %v4796 = vsel %vm2252, %v4748, %v4016
      %v4797 = vsel %vm2252, %v4749, %v4018
      %v4798 = vsel %vm2252, %v4750, %v4020
      %v4799 = vsel %vm2252, %v4751, %v4022
      %v4800 = vsel %vm2252, %v4752, %v4024
      %v4801 = vsel %vm2252, %v4753, %v4026
      %v4802 = vsel %vm2252, %v4754, %v4028
      %v4803 = vsel %vm2252, %v4755, %v4030
      %v4804 = vsel %vm2252, %v4756, %v4032
      %v4805 = vsel %vm2252, %v4757, %v4034
      %v4806 = vsel %vm2252, %v4758, %v4036
      %v4807 = vsel %vm2252, %v4759, %v4038
      %v4808 = vsel %vm2252, %v4760, %v4040
      %v4809 = vsel %vm2252, %v4761, %v4042
      %v4810 = vsel %vm2252, %v4762, %v4044
      %v4811 = vsel %vm2252, %v4763, %v4046
      %v4812 = vsel %vm2252, %v4764, %v4048
      %v4813 = vsel %vm2252, %v4765, %v4050
      %v4814 = vsel %vm2252, %v4766, %v4052
      %v4815 = vsel %vm2252, %v4767, %v4054
      %v4816 = vsel %vm2252, %v4768, %v4056
      %v4817 = vsel %vm2252, %v4769, %v4058
      %v4818 = vsel %vm2252, %v4770, %v4060
      %v4819 = vsel %vm2252, %v4771, %v4062
      %v4820 = vsel %vm2252, %v4772, %v4064
      %v4821 = vsel %vm2252, %v4773, %v4066
      %v4822 = vsel %vm2252, %v4774, %v4068
      %v4823 = vsel %vm2252, %v4775, %v4070
      %v4824 = vsel %vm2252, %v4776, %v4072
      %v4825 = vsel %vm2252, %v4777, %v4074
      %v4826 = vsel %vm2252, %v4778, %v4076
      %v4827 = vsel %vm2252, %v4779, %v4078
      %v4828 = vsel %vm2252, %v4780, %v4080
      %v4829 = vsel %vm2252, %v4781, %v4082
      %v4830 = vsel %vm2252, %v4782, %v4084
      %v4831 = vsel %vm2252, %v4783, %v4086
      %v4832 = vsel %vm2252, %v4784, %v4088
      %v4833 = vsel %vm2252, %v4785, %v4090
      %v4834 = vsel %vm2252, %v4786, %v4092
      %v4835 = vsel %vm2252, %v4787, %v4094
      %vm4836 = vcmask 654336
      %v4837 = vsel %vm4836, %v4788, %v4150
      %v4838 = vsel %vm4836, %v4789, %v4152
      %v4839 = vsel %vm4836, %v4790, %v4154
      %v4840 = vsel %vm4836, %v4791, %v4156
      %v4841 = vsel %vm4836, %v4792, %v4158
      %v4842 = vsel %vm4836, %v4793, %v4160
      %v4843 = vsel %vm4836, %v4794, %v4162
      %v4844 = vsel %vm4836, %v4795, %v4164
      %v4845 = vsel %vm4836, %v4796, %v4166
      %v4846 = vsel %vm4836, %v4797, %v4168
      %v4847 = vsel %vm4836, %v4798, %v4170
      %v4848 = vsel %vm4836, %v4799, %v4172
      %v4849 = vsel %vm4836, %v4800, %v4174
      %v4850 = vsel %vm4836, %v4801, %v4176
      %v4851 = vsel %vm4836, %v4802, %v4178
      %v4852 = vsel %vm4836, %v4803, %v4180
      %v4853 = vsel %vm4836, %v4804, %v4182
      %v4854 = vsel %vm4836, %v4805, %v4184
      %v4855 = vsel %vm4836, %v4806, %v4186
      %v4856 = vsel %vm4836, %v4807, %v4188
      %v4857 = vsel %vm4836, %v4808, %v4190
      %v4858 = vsel %vm4836, %v4809, %v4192
      %v4859 = vsel %vm4836, %v4810, %v4194
      %v4860 = vsel %vm4836, %v4811, %v4196
      %v4861 = vsel %vm4836, %v4812, %v4198
      %v4862 = vsel %vm4836, %v4813, %v4200
      %v4863 = vsel %vm4836, %v4814, %v4202
      %v4864 = vsel %vm4836, %v4815, %v4204
      %v4865 = vsel %vm4836, %v4816, %v4206
      %v4866 = vsel %vm4836, %v4817, %v4208
      %v4867 = vsel %vm4836, %v4818, %v4210
      %v4868 = vsel %vm4836, %v4819, %v4212
      %v4869 = vsel %vm4836, %v4820, %v4214
      %v4870 = vsel %vm4836, %v4821, %v4216
      %v4871 = vsel %vm4836, %v4822, %v4218
      %v4872 = vsel %vm4836, %v4823, %v4220
      %v4873 = vsel %vm4836, %v4824, %v4222
      %v4874 = vsel %vm4836, %v4825, %v4224
      %v4875 = vsel %vm4836, %v4826, %v4226
      %v4876 = vsel %vm4836, %v4827, %v4228
      %v4877 = vsel %vm4836, %v4828, %v4230
      %v4878 = vsel %vm4836, %v4829, %v4232
      %v4879 = vsel %vm4836, %v4830, %v4234
      %v4880 = vsel %vm4836, %v4831, %v4236
      %v4881 = vsel %vm4836, %v4832, %v4238
      %v4882 = vsel %vm4836, %v4833, %v4240
      %v4883 = vsel %vm4836, %v4834, %v4242
      %v4884 = vsel %vm4836, %v4835, %v4244
      %vm4885 = vcmask 785408
      %v4886 = vsel %vm4885, %v4837, %v4296
      %v4887 = vsel %vm4885, %v4838, %v4298
      %v4888 = vsel %vm4885, %v4839, %v4300
      %v4889 = vsel %vm4885, %v4840, %v4302
      %v4890 = vsel %vm4885, %v4841, %v4304
      %v4891 = vsel %vm4885, %v4842, %v4306
      %v4892 = vsel %vm4885, %v4843, %v4308
      %v4893 = vsel %vm4885, %v4844, %v4310
      %v4894 = vsel %vm4885, %v4845, %v4312
      %v4895 = vsel %vm4885, %v4846, %v4314
      %v4896 = vsel %vm4885, %v4847, %v4316
      %v4897 = vsel %vm4885, %v4848, %v4318
      %v4898 = vsel %vm4885, %v4849, %v4320
      %v4899 = vsel %vm4885, %v4850, %v4322
      %v4900 = vsel %vm4885, %v4851, %v4324
      %v4901 = vsel %vm4885, %v4852, %v4326
      %v4902 = vsel %vm4885, %v4853, %v4328
      %v4903 = vsel %vm4885, %v4854, %v4330
      %v4904 = vsel %vm4885, %v4855, %v4332
      %v4905 = vsel %vm4885, %v4856, %v4334
      %v4906 = vsel %vm4885, %v4857, %v4336
      %v4907 = vsel %vm4885, %v4858, %v4338
      %v4908 = vsel %vm4885, %v4859, %v4340
      %v4909 = vsel %vm4885, %v4860, %v4342
      %v4910 = vsel %vm4885, %v4861, %v4344
      %v4911 = vsel %vm4885, %v4862, %v4346
      %v4912 = vsel %vm4885, %v4863, %v4348
      %v4913 = vsel %vm4885, %v4864, %v4350
      %v4914 = vsel %vm4885, %v4865, %v4352
      %v4915 = vsel %vm4885, %v4866, %v4354
      %v4916 = vsel %vm4885, %v4867, %v4356
      %v4917 = vsel %vm4885, %v4868, %v4358
      %v4918 = vsel %vm4885, %v4869, %v4360
      %v4919 = vsel %vm4885, %v4870, %v4362
      %v4920 = vsel %vm4885, %v4871, %v4364
      %v4921 = vsel %vm4885, %v4872, %v4366
      %v4922 = vsel %vm4885, %v4873, %v4368
      %v4923 = vsel %vm4885, %v4874, %v4370
      %v4924 = vsel %vm4885, %v4875, %v4372
      %v4925 = vsel %vm4885, %v4876, %v4374
      %v4926 = vsel %vm4885, %v4877, %v4376
      %v4927 = vsel %vm4885, %v4878, %v4378
      %v4928 = vsel %vm4885, %v4879, %v4380
      %v4929 = vsel %vm4885, %v4880, %v4382
      %v4930 = vsel %vm4885, %v4881, %v4384
      %v4931 = vsel %vm4885, %v4882, %v4386
      %v4932 = vsel %vm4885, %v4883, %v4388
      %v4933 = vsel %vm4885, %v4884, %v4390
      %vm4934 = vcmask 916480
      %v4935 = vsel %vm4934, %v4886, %v4447
      %v4936 = vsel %vm4934, %v4887, %v4449
      %v4937 = vsel %vm4934, %v4888, %v4451
      %v4938 = vsel %vm4934, %v4889, %v4453
      %v4939 = vsel %vm4934, %v4890, %v4455
      %v4940 = vsel %vm4934, %v4891, %v4457
      %v4941 = vsel %vm4934, %v4892, %v4459
      %v4942 = vsel %vm4934, %v4893, %v4461
      %v4943 = vsel %vm4934, %v4894, %v4463
      %v4944 = vsel %vm4934, %v4895, %v4465
      %v4945 = vsel %vm4934, %v4896, %v4467
      %v4946 = vsel %vm4934, %v4897, %v4469
      %v4947 = vsel %vm4934, %v4898, %v4471
      %v4948 = vsel %vm4934, %v4899, %v4473
      %v4949 = vsel %vm4934, %v4900, %v4475
      %v4950 = vsel %vm4934, %v4901, %v4477
      %v4951 = vsel %vm4934, %v4902, %v4479
      %v4952 = vsel %vm4934, %v4903, %v4481
      %v4953 = vsel %vm4934, %v4904, %v4483
      %v4954 = vsel %vm4934, %v4905, %v4485
      %v4955 = vsel %vm4934, %v4906, %v4487
      %v4956 = vsel %vm4934, %v4907, %v4489
      %v4957 = vsel %vm4934, %v4908, %v4491
      %v4958 = vsel %vm4934, %v4909, %v4493
      %v4959 = vsel %vm4934, %v4910, %v4495
      %v4960 = vsel %vm4934, %v4911, %v4497
      %v4961 = vsel %vm4934, %v4912, %v4499
      %v4962 = vsel %vm4934, %v4913, %v4501
      %v4963 = vsel %vm4934, %v4914, %v4503
      %v4964 = vsel %vm4934, %v4915, %v4505
      %v4965 = vsel %vm4934, %v4916, %v4507
      %v4966 = vsel %vm4934, %v4917, %v4509
      %v4967 = vsel %vm4934, %v4918, %v4511
      %v4968 = vsel %vm4934, %v4919, %v4513
      %v4969 = vsel %vm4934, %v4920, %v4515
      %v4970 = vsel %vm4934, %v4921, %v4517
      %v4971 = vsel %vm4934, %v4922, %v4519
      %v4972 = vsel %vm4934, %v4923, %v4521
      %v4973 = vsel %vm4934, %v4924, %v4523
      %v4974 = vsel %vm4934, %v4925, %v4525
      %v4975 = vsel %vm4934, %v4926, %v4527
      %v4976 = vsel %vm4934, %v4927, %v4529
      %v4977 = vsel %vm4934, %v4928, %v4531
      %v4978 = vsel %vm4934, %v4929, %v4533
      %v4979 = vsel %vm4934, %v4930, %v4535
      %v4980 = vsel %vm4934, %v4931, %v4537
      %v4981 = vsel %vm4934, %v4932, %v4539
      %v4982 = vsel %vm4934, %v4933, %v4541
      %v4983 = vpack.c.bf16 %v4936, %v4935
      %v4984 = vpack.c.bf16 %v3621, %v3619
      %v4985 = vpack.c.bf16 %v4938, %v4937
      %v4986 = vpack.c.bf16 %v3625, %v3623
      %v4987 = vpack.c.bf16 %v4940, %v4939
      %v4988 = vpack.c.bf16 %v3629, %v3627
      %v4989 = vpack.c.bf16 %v4942, %v4941
      %v4990 = vpack.c.bf16 %v3633, %v3631
      %v4991 = vpack.c.bf16 %v4944, %v4943
      %v4992 = vpack.c.bf16 %v3637, %v3635
      %v4993 = vpack.c.bf16 %v4946, %v4945
      %v4994 = vpack.c.bf16 %v3641, %v3639
      %v4995 = vpack.c.bf16 %v4948, %v4947
      %v4996 = vpack.c.bf16 %v3645, %v3643
      %v4997 = vpack.c.bf16 %v4950, %v4949
      %v4998 = vpack.c.bf16 %v3649, %v3647
      %v4999 = vpack.c.bf16 %v4952, %v4951
      %v5000 = vpack.c.bf16 %v3653, %v3651
      %v5001 = vpack.c.bf16 %v4954, %v4953
      %v5002 = vpack.c.bf16 %v3657, %v3655
      %v5003 = vpack.c.bf16 %v4956, %v4955
      %v5004 = vpack.c.bf16 %v3661, %v3659
      %v5005 = vpack.c.bf16 %v4958, %v4957
      %v5006 = vpack.c.bf16 %v3665, %v3663
      %v5007 = vpack.c.bf16 %v4960, %v4959
      %v5008 = vpack.c.bf16 %v3669, %v3667
      %v5009 = vpack.c.bf16 %v4962, %v4961
      %v5010 = vpack.c.bf16 %v3673, %v3671
      %v5011 = vpack.c.bf16 %v4964, %v4963
      %v5012 = vpack.c.bf16 %v3677, %v3675
      %v5013 = vpack.c.bf16 %v4966, %v4965
      %v5014 = vpack.c.bf16 %v3681, %v3679
      %v5015 = vpack.c.bf16 %v4968, %v4967
      %v5016 = vpack.c.bf16 %v3685, %v3683
      %v5017 = vpack.c.bf16 %v4970, %v4969
      %v5018 = vpack.c.bf16 %v3689, %v3687
      %v5019 = vpack.c.bf16 %v4972, %v4971
      %v5020 = vpack.c.bf16 %v3693, %v3691
      %v5021 = vpack.c.bf16 %v4974, %v4973
      %v5022 = vpack.c.bf16 %v3697, %v3695
      %v5023 = vpack.c.bf16 %v4976, %v4975
      %v5024 = vpack.c.bf16 %v3701, %v3699
      %v5025 = vpack.c.bf16 %v4978, %v4977
      %v5026 = vpack.c.bf16 %v4146, %v4144
      %v5027 = vpack.c.bf16 %v4980, %v4979
      %v5028 = vpack.c.bf16 %v4591, %v4148
      %v5029 = vpack.c.bf16 %v4982, %v4981
      %v5030 = vpack.c.bf16 %v4595, %v4593
      %v5031 = vld [vmem:[%s356] sm:$0xf]
      %v5032 = vld [vmem:[%s356 + $0x4] sm:$0xf]
      %v5033 = vld [vmem:[%s356 + $0x8] sm:$0xf]
      %v5034 = vld [vmem:[%s356 + $0xc] sm:$0xf]
      %v5035 = vld [vmem:[%s356 + $0x10] sm:$0xf]
      %v5036 = vld [vmem:[%s356 + $0x14] sm:$0xf]
      %v5037 = vld [vmem:[%s356 + $0x18] sm:$0xf]
      %v5038 = vld [vmem:[%s356 + $0x1c] sm:$0xf]
      %v5039 = vld [vmem:[%s356 + $0x20] sm:$0xf]
      %v5040 = vld [vmem:[%s356 + $0x24] sm:$0xf]
      %v5041 = vld [vmem:[%s356 + $0x28] sm:$0xf]
      %v5042 = vld [vmem:[%s356 + $0x2c] sm:$0xf]
      %v5043 = vld [vmem:[%s356 + $0x30] sm:$0xf]
      %v5044 = vld [vmem:[%s356 + $0x34] sm:$0xf]
      %v5045 = vld [vmem:[%s356 + $0x38] sm:$0xf]
      %v5046 = vld [vmem:[%s356 + $0x3c] sm:$0xf]
      %v5047 = vld [vmem:[%s356 + $0x40] sm:$0xf]
      %v5048 = vld [vmem:[%s356 + $0x44] sm:$0xf]
      %v5067 = vunpack.c.l.b16 %v5031
      %v5068 = vunpack.c.l.b16 %v5032
      %v5069 = vunpack.c.l.b16 %v5033
      %v5070 = vunpack.c.l.b16 %v5034
      %v5071 = vunpack.c.l.b16 %v5035
      %v5072 = vunpack.c.l.b16 %v5036
      %v5073 = vunpack.c.l.b16 %v5037
      %v5074 = vunpack.c.l.b16 %v5038
      %v5075 = vunpack.c.l.b16 %v5039
      %v5076 = vunpack.c.l.b16 %v5040
      %v5077 = vunpack.c.l.b16 %v5041
      %v5078 = vunpack.c.l.b16 %v5042
      %v5079 = vunpack.c.l.b16 %v5043
      %v5080 = vunpack.c.l.b16 %v5044
      %v5081 = vunpack.c.l.b16 %v5045
      %v5082 = vunpack.c.l.b16 %v5046
      %v5083 = vunpack.c.l.b16 %v5047
      %v5084 = vunpack.c.l.b16 %v5048
      %v5085 = vpack.c.b16 %v5068, %v5067
      %v5086 = vpack.c.b16 %v5070, %v5069
      %v5087 = vpack.c.b16 %v5072, %v5071
      %v5088 = vpack.c.b16 %v5074, %v5073
      %v5089 = vpack.c.b16 %v5076, %v5075
      %v5090 = vpack.c.b16 %v5078, %v5077
      %v5091 = vpack.c.b16 %v5080, %v5079
      %v5092 = vpack.c.b16 %v5082, %v5081
      %v5093 = vpack.c.b16 %v5084, %v5083
      %v5104 = vsel %vm1958, %v4984, 0
      %v5107 = vsel %vm1958, %v4986, 0
      %v5110 = vsel %vm1958, %v4988, 0
      %v5113 = vsel %vm1958, %v4990, 0
      %v5116 = vsel %vm1958, %v4992, 0
      %v5119 = vsel %vm1958, %v4994, 0
      %v5122 = vsel %vm1958, %v4996, 0
      %v5125 = vsel %vm1958, %v4998, 0
      %v5128 = vsel %vm1958, %v5000, 0
      %v5131 = vsel %vm1958, %v5002, 0
      %v5134 = vsel %vm1958, %v5004, 0
      %v5137 = vsel %vm1958, %v5006, 0
      %v5140 = vsel %vm1958, %v5008, 0
      %v5143 = vsel %vm1958, %v5010, 0
      %v5146 = vsel %vm1958, %v5012, 0
      %v5149 = vsel %vm1958, %v5014, 0
      %v5152 = vsel %vm1958, %v5016, 0
      %v5155 = vsel %vm1958, %v5018, 0
      %v5158 = vsel %vm1958, %v5020, 0
      %v5161 = vsel %vm1958, %v5022, 0
      %v5164 = vsel %vm1958, %v5024, 0
      %v5167 = vsel %vm1958, %v5026, 0
      %v5170 = vsel %vm1958, %v5028, 0
      %v5173 = vsel %vm1958, %v5030, 0
      %5175 = vmatprep.subr.bf16.mxu0 0
      %5176 = vmatpush1.bf16.msra.mxu0 %v5085
      %5177 = vmatprep.subr.bf16.mxu0 0
      %5178 = vmatpush1.bf16.msra.mxu0 %v5086
      %5179 = vmatprep.subr.bf16.mxu0 0
      %5180 = vmatpush1.bf16.msra.mxu0 %v5087
      %5181 = vmatprep.subr.bf16.mxu0 0
      %5182 = vmatpush1.bf16.msra.mxu0 %v5088
      %5183 = vmatprep.subr.bf16.mxu0 0
      %5184 = vmatpush1.bf16.msra.mxu0 %v5089
      %5185 = vmatprep.subr.bf16.mxu0 0
      %5186 = vmatpush1.bf16.msra.mxu0 %v5090
      %5187 = vmatprep.subr.bf16.mxu0 0
      %5188 = vmatpush1.bf16.msra.mxu0 %v5091
      %5189 = vmatprep.subr.bf16.mxu0 0
      %5190 = vmatpush1.bf16.msra.mxu0 %v5092
      %5191 = vmatprep.subr.bf16.mxu0 0
      %5192 = vmatpush1.bf16.msra.mxu0 %v5093
      %5193 = vmatprep.subr.bf16.mxu0 0
      %5194 = vmatpush1.bf16.msra.mxu0 0
      %5195 = vmatprep.subr.bf16.mxu0 0
      %5196 = vmatpush1.bf16.msra.mxu0 0
      %5197 = vmatprep.subr.bf16.mxu0 0
      %5198 = vmatpush1.bf16.msra.mxu0 0
      %5199 = vmatprep.subr.bf16.mxu0 0
      %5200 = vmatpush1.bf16.msra.mxu0 0
      %5201 = vmatprep.subr.bf16.mxu0 0
      %5202 = vmatpush1.bf16.msra.mxu0 0
      %5203 = vmatprep.subr.bf16.mxu0 0
      %5204 = vmatpush1.bf16.msra.mxu0 0
      %5205 = vmatprep.subr.bf16.mxu0 0
      %5206 = vmatpush1.bf16.msra.mxu0 0
      %5207 = vmatprep.mubr.bf16.mxu0 %v5104
      %5208 = vmatmul.mubr.bf16.gmra.mrb[0].mxu0 %v4983
      %v5209 = vpop.f32.mrb[0].mxu0
      %v5210 = vadd.f32 0.0, %v5209
      %v5211 = vpop.f32.mrb[0].mxu0
      %v5212 = vpop.f32.mrb[0].mxu0
      %v5213 = vadd.f32 0.0, %v5212
      %v5214 = vpop.f32.mrb[0].mxu0
      %5215 = vmatprep.mubr.bf16.mxu0 %v5107
      %5216 = vmatmul.mubr.bf16.gmra.mrb[0].mxu0 %v4985
      %v5217 = vpop.f32.mrb[0].mxu0
      %v5218 = vadd.f32 0.0, %v5217
      %v5219 = vpop.f32.mrb[0].mxu0
      %v5220 = vpop.f32.mrb[0].mxu0
      %v5221 = vadd.f32 0.0, %v5220
      %v5222 = vpop.f32.mrb[0].mxu0
      %5223 = vmatprep.mubr.bf16.mxu0 %v5110
      %5224 = vmatmul.mubr.bf16.gmra.mrb[0].mxu0 %v4987
      %v5225 = vpop.f32.mrb[0].mxu0
      %v5226 = vadd.f32 0.0, %v5225
      %v5227 = vpop.f32.mrb[0].mxu0
      %v5228 = vpop.f32.mrb[0].mxu0
      %v5229 = vadd.f32 0.0, %v5228
      %v5230 = vpop.f32.mrb[0].mxu0
      %5231 = vmatprep.mubr.bf16.mxu0 %v5113
      %5232 = vmatmul.mubr.bf16.gmra.mrb[0].mxu0 %v4989
      %v5233 = vpop.f32.mrb[0].mxu0
      %v5234 = vadd.f32 0.0, %v5233
      %v5235 = vpop.f32.mrb[0].mxu0
      %v5236 = vpop.f32.mrb[0].mxu0
      %v5237 = vadd.f32 0.0, %v5236
      %v5238 = vpop.f32.mrb[0].mxu0
      %5239 = vmatprep.mubr.bf16.mxu0 %v5116
      %5240 = vmatmul.mubr.bf16.gmra.mrb[0].mxu0 %v4991
      %v5241 = vpop.f32.mrb[0].mxu0
      %v5242 = vadd.f32 0.0, %v5241
      %v5243 = vpop.f32.mrb[0].mxu0
      %v5244 = vpop.f32.mrb[0].mxu0
      %v5245 = vadd.f32 0.0, %v5244
      %v5246 = vpop.f32.mrb[0].mxu0
      %5247 = vmatprep.mubr.bf16.mxu0 %v5119
      %5248 = vmatmul.mubr.bf16.gmra.mrb[0].mxu0 %v4993
      %v5249 = vpop.f32.mrb[0].mxu0
      %v5250 = vadd.f32 0.0, %v5249
      %v5251 = vpop.f32.mrb[0].mxu0
      %v5252 = vpop.f32.mrb[0].mxu0
      %v5253 = vadd.f32 0.0, %v5252
      %v5254 = vpop.f32.mrb[0].mxu0
      %5255 = vmatprep.mubr.bf16.mxu0 %v5122
      %5256 = vmatmul.mubr.bf16.gmra.mrb[0].mxu0 %v4995
      %v5257 = vpop.f32.mrb[0].mxu0
      %v5258 = vadd.f32 0.0, %v5257
      %v5259 = vpop.f32.mrb[0].mxu0
      %v5260 = vpop.f32.mrb[0].mxu0
      %v5261 = vadd.f32 0.0, %v5260
      %v5262 = vpop.f32.mrb[0].mxu0
      %5263 = vmatprep.mubr.bf16.mxu0 %v5125
      %5264 = vmatmul.mubr.bf16.gmra.mrb[0].mxu0 %v4997
      %v5265 = vpop.f32.mrb[0].mxu0
      %v5266 = vadd.f32 0.0, %v5265
      %v5267 = vpop.f32.mrb[0].mxu0
      %v5268 = vpop.f32.mrb[0].mxu0
      %v5269 = vadd.f32 0.0, %v5268
      %v5270 = vpop.f32.mrb[0].mxu0
      %5271 = vmatprep.mubr.bf16.mxu0 %v5128
      %5272 = vmatmul.mubr.bf16.gmra.mrb[0].mxu0 %v4999
      %v5273 = vpop.f32.mrb[0].mxu0
      %v5274 = vadd.f32 0.0, %v5273
      %v5275 = vpop.f32.mrb[0].mxu0
      %v5276 = vpop.f32.mrb[0].mxu0
      %v5277 = vadd.f32 0.0, %v5276
      %v5278 = vpop.f32.mrb[0].mxu0
      %5279 = vmatprep.mubr.bf16.mxu0 %v5131
      %5280 = vmatmul.mubr.bf16.gmra.mrb[0].mxu0 %v5001
      %v5281 = vpop.f32.mrb[0].mxu0
      %v5282 = vadd.f32 0.0, %v5281
      %v5283 = vpop.f32.mrb[0].mxu0
      %v5284 = vpop.f32.mrb[0].mxu0
      %v5285 = vadd.f32 0.0, %v5284
      %v5286 = vpop.f32.mrb[0].mxu0
      %5287 = vmatprep.mubr.bf16.mxu0 %v5134
      %5288 = vmatmul.mubr.bf16.gmra.mrb[0].mxu0 %v5003
      %v5289 = vpop.f32.mrb[0].mxu0
      %v5290 = vadd.f32 0.0, %v5289
      %v5291 = vpop.f32.mrb[0].mxu0
      %v5292 = vpop.f32.mrb[0].mxu0
      %v5293 = vadd.f32 0.0, %v5292
      %v5294 = vpop.f32.mrb[0].mxu0
      %5295 = vmatprep.mubr.bf16.mxu0 %v5137
      %5296 = vmatmul.mubr.bf16.gmra.mrb[0].mxu0 %v5005
      %v5297 = vpop.f32.mrb[0].mxu0
      %v5298 = vadd.f32 0.0, %v5297
      %v5299 = vpop.f32.mrb[0].mxu0
      %v5300 = vpop.f32.mrb[0].mxu0
      %v5301 = vadd.f32 0.0, %v5300
      %v5302 = vpop.f32.mrb[0].mxu0
      %5303 = vmatprep.mubr.bf16.mxu0 %v5140
      %5304 = vmatmul.mubr.bf16.gmra.mrb[0].mxu0 %v5007
      %v5305 = vpop.f32.mrb[0].mxu0
      %v5306 = vadd.f32 0.0, %v5305
      %v5307 = vpop.f32.mrb[0].mxu0
      %v5308 = vpop.f32.mrb[0].mxu0
      %v5309 = vadd.f32 0.0, %v5308
      %v5310 = vpop.f32.mrb[0].mxu0
      %5311 = vmatprep.mubr.bf16.mxu0 %v5143
      %5312 = vmatmul.mubr.bf16.gmra.mrb[0].mxu0 %v5009
      %v5313 = vpop.f32.mrb[0].mxu0
      %v5314 = vadd.f32 0.0, %v5313
      %v5315 = vpop.f32.mrb[0].mxu0
      %v5316 = vpop.f32.mrb[0].mxu0
      %v5317 = vadd.f32 0.0, %v5316
      %v5318 = vpop.f32.mrb[0].mxu0
      %5319 = vmatprep.mubr.bf16.mxu0 %v5146
      %5320 = vmatmul.mubr.bf16.gmra.mrb[0].mxu0 %v5011
      %v5321 = vpop.f32.mrb[0].mxu0
      %v5322 = vadd.f32 0.0, %v5321
      %v5323 = vpop.f32.mrb[0].mxu0
      %v5324 = vpop.f32.mrb[0].mxu0
      %v5325 = vadd.f32 0.0, %v5324
      %v5326 = vpop.f32.mrb[0].mxu0
      %5327 = vmatprep.mubr.bf16.mxu0 %v5149
      %5328 = vmatmul.mubr.bf16.gmra.mrb[0].mxu0 %v5013
      %v5329 = vpop.f32.mrb[0].mxu0
      %v5330 = vadd.f32 0.0, %v5329
      %v5331 = vpop.f32.mrb[0].mxu0
      %v5332 = vpop.f32.mrb[0].mxu0
      %v5333 = vadd.f32 0.0, %v5332
      %v5334 = vpop.f32.mrb[0].mxu0
      %5335 = vmatprep.mubr.bf16.mxu0 %v5152
      %5336 = vmatmul.mubr.bf16.gmra.mrb[0].mxu0 %v5015
      %v5337 = vpop.f32.mrb[0].mxu0
      %v5338 = vadd.f32 0.0, %v5337
      %v5339 = vpop.f32.mrb[0].mxu0
      %v5340 = vpop.f32.mrb[0].mxu0
      %v5341 = vadd.f32 0.0, %v5340
      %v5342 = vpop.f32.mrb[0].mxu0
      %5343 = vmatprep.mubr.bf16.mxu0 %v5155
      %5344 = vmatmul.mubr.bf16.gmra.mrb[0].mxu0 %v5017
      %v5345 = vpop.f32.mrb[0].mxu0
      %v5346 = vadd.f32 0.0, %v5345
      %v5347 = vpop.f32.mrb[0].mxu0
      %v5348 = vpop.f32.mrb[0].mxu0
      %v5349 = vadd.f32 0.0, %v5348
      %v5350 = vpop.f32.mrb[0].mxu0
      %5351 = vmatprep.mubr.bf16.mxu0 %v5158
      %5352 = vmatmul.mubr.bf16.gmra.mrb[0].mxu0 %v5019
      %v5353 = vpop.f32.mrb[0].mxu0
      %v5354 = vadd.f32 0.0, %v5353
      %v5355 = vpop.f32.mrb[0].mxu0
      %v5356 = vpop.f32.mrb[0].mxu0
      %v5357 = vadd.f32 0.0, %v5356
      %v5358 = vpop.f32.mrb[0].mxu0
      %5359 = vmatprep.mubr.bf16.mxu0 %v5161
      %5360 = vmatmul.mubr.bf16.gmra.mrb[0].mxu0 %v5021
      %v5361 = vpop.f32.mrb[0].mxu0
      %v5362 = vadd.f32 0.0, %v5361
      %v5363 = vpop.f32.mrb[0].mxu0
      %v5364 = vpop.f32.mrb[0].mxu0
      %v5365 = vadd.f32 0.0, %v5364
      %v5366 = vpop.f32.mrb[0].mxu0
      %5367 = vmatprep.mubr.bf16.mxu0 %v5164
      %5368 = vmatmul.mubr.bf16.gmra.mrb[0].mxu0 %v5023
      %v5369 = vpop.f32.mrb[0].mxu0
      %v5370 = vadd.f32 0.0, %v5369
      %v5371 = vpop.f32.mrb[0].mxu0
      %v5372 = vpop.f32.mrb[0].mxu0
      %v5373 = vadd.f32 0.0, %v5372
      %v5374 = vpop.f32.mrb[0].mxu0
      %5375 = vmatprep.mubr.bf16.mxu0 %v5167
      %5376 = vmatmul.mubr.bf16.gmra.mrb[0].mxu0 %v5025
      %v5377 = vpop.f32.mrb[0].mxu0
      %v5378 = vadd.f32 0.0, %v5377
      %v5379 = vpop.f32.mrb[0].mxu0
      %v5380 = vpop.f32.mrb[0].mxu0
      %v5381 = vadd.f32 0.0, %v5380
      %v5382 = vpop.f32.mrb[0].mxu0
      %5383 = vmatprep.mubr.bf16.mxu0 %v5170
      %5384 = vmatmul.mubr.bf16.gmra.mrb[0].mxu0 %v5027
      %v5385 = vpop.f32.mrb[0].mxu0
      %v5386 = vadd.f32 0.0, %v5385
      %v5387 = vpop.f32.mrb[0].mxu0
      %v5388 = vpop.f32.mrb[0].mxu0
      %v5389 = vadd.f32 0.0, %v5388
      %v5390 = vpop.f32.mrb[0].mxu0
      %5391 = vmatprep.mubr.bf16.mxu0 %v5173
      %5392 = vmatmul.mubr.bf16.gmra.mrb[0].mxu0 %v5029
      %v5393 = vpop.f32.mrb[0].mxu0
      %v5394 = vadd.f32 0.0, %v5393
      %v5395 = vpop.f32.mrb[0].mxu0
      %v5396 = vpop.f32.mrb[0].mxu0
      %v5397 = vadd.f32 0.0, %v5396
      %v5398 = vpop.f32.mrb[0].mxu0
      %5399 = vdwg.mxu0
      %v5400 = vmax.f32 %v5210, 0.0
      %v5401 = vmax.f32 %v5213, 0.0
      %v5402 = vmax.f32 %v5218, 0.0
      %v5403 = vmax.f32 %v5221, 0.0
      %v5404 = vmax.f32 %v5226, 0.0
      %v5405 = vmax.f32 %v5229, 0.0
      %v5406 = vmax.f32 %v5234, 0.0
      %v5407 = vmax.f32 %v5237, 0.0
      %v5408 = vmax.f32 %v5242, 0.0
      %v5409 = vmax.f32 %v5245, 0.0
      %v5410 = vmax.f32 %v5250, 0.0
      %v5411 = vmax.f32 %v5253, 0.0
      %v5412 = vmax.f32 %v5258, 0.0
      %v5413 = vmax.f32 %v5261, 0.0
      %v5414 = vmax.f32 %v5266, 0.0
      %v5415 = vmax.f32 %v5269, 0.0
      %v5416 = vmax.f32 %v5274, 0.0
      %v5417 = vmax.f32 %v5277, 0.0
      %v5418 = vmax.f32 %v5282, 0.0
      %v5419 = vmax.f32 %v5285, 0.0
      %v5420 = vmax.f32 %v5290, 0.0
      %v5421 = vmax.f32 %v5293, 0.0
      %v5422 = vmax.f32 %v5298, 0.0
      %v5423 = vmax.f32 %v5301, 0.0
      %v5424 = vmax.f32 %v5306, 0.0
      %v5425 = vmax.f32 %v5309, 0.0
      %v5426 = vmax.f32 %v5314, 0.0
      %v5427 = vmax.f32 %v5317, 0.0
      %v5428 = vmax.f32 %v5322, 0.0
      %v5429 = vmax.f32 %v5325, 0.0
      %v5430 = vmax.f32 %v5330, 0.0
      %v5431 = vmax.f32 %v5333, 0.0
      %v5432 = vmax.f32 %v5338, 0.0
      %v5433 = vmax.f32 %v5341, 0.0
      %v5434 = vmax.f32 %v5346, 0.0
      %v5435 = vmax.f32 %v5349, 0.0
      %v5436 = vmax.f32 %v5354, 0.0
      %v5437 = vmax.f32 %v5357, 0.0
      %v5438 = vmax.f32 %v5362, 0.0
      %v5439 = vmax.f32 %v5365, 0.0
      %v5440 = vmax.f32 %v5370, 0.0
      %v5441 = vmax.f32 %v5373, 0.0
      %v5442 = vmax.f32 %v5378, 0.0
      %v5443 = vmax.f32 %v5381, 0.0
      %v5444 = vmax.f32 %v5386, 0.0
      %v5445 = vmax.f32 %v5389, 0.0
      %v5446 = vmax.f32 %v5394, 0.0
      %v5447 = vmax.f32 %v5397, 0.0
      %v5448 = vld [vmem:[%s359] sm:$0x1]
      %v5450 = vlaneseq
      %v5451 = vshrl.u32 %v5450, 7
      %v5452 = vsub.s32 0, %v5451
      %v5453 = vrot.slane %v5448, %v5452
      %v5455 = vmul.f32 %v5400, %v5453
      %v5456 = vmul.f32 %v5401, %v5453
      %v5457 = vmul.f32 %v5402, %v5453
      %v5458 = vmul.f32 %v5403, %v5453
      %v5459 = vmul.f32 %v5404, %v5453
      %v5460 = vmul.f32 %v5405, %v5453
      %v5461 = vmul.f32 %v5406, %v5453
      %v5462 = vmul.f32 %v5407, %v5453
      %v5463 = vmul.f32 %v5408, %v5453
      %v5464 = vmul.f32 %v5409, %v5453
      %v5465 = vmul.f32 %v5410, %v5453
      %v5466 = vmul.f32 %v5411, %v5453
      %v5467 = vmul.f32 %v5412, %v5453
      %v5468 = vmul.f32 %v5413, %v5453
      %v5469 = vmul.f32 %v5414, %v5453
      %v5470 = vmul.f32 %v5415, %v5453
      %v5471 = vmul.f32 %v5416, %v5453
      %v5472 = vmul.f32 %v5417, %v5453
      %v5473 = vmul.f32 %v5418, %v5453
      %v5474 = vmul.f32 %v5419, %v5453
      %v5475 = vmul.f32 %v5420, %v5453
      %v5476 = vmul.f32 %v5421, %v5453
      %v5477 = vmul.f32 %v5422, %v5453
      %v5478 = vmul.f32 %v5423, %v5453
      %v5479 = vmul.f32 %v5424, %v5453
      %v5480 = vmul.f32 %v5425, %v5453
      %v5481 = vmul.f32 %v5426, %v5453
      %v5482 = vmul.f32 %v5427, %v5453
      %v5483 = vmul.f32 %v5428, %v5453
      %v5484 = vmul.f32 %v5429, %v5453
      %v5485 = vmul.f32 %v5430, %v5453
      %v5486 = vmul.f32 %v5431, %v5453
      %v5487 = vmul.f32 %v5432, %v5453
      %v5488 = vmul.f32 %v5433, %v5453
      %v5489 = vmul.f32 %v5434, %v5453
      %v5490 = vmul.f32 %v5435, %v5453
      %v5491 = vmul.f32 %v5436, %v5453
      %v5492 = vmul.f32 %v5437, %v5453
      %v5493 = vmul.f32 %v5438, %v5453
      %v5494 = vmul.f32 %v5439, %v5453
      %v5495 = vmul.f32 %v5440, %v5453
      %v5496 = vmul.f32 %v5441, %v5453
      %v5497 = vmul.f32 %v5442, %v5453
      %v5498 = vmul.f32 %v5443, %v5453
      %v5499 = vmul.f32 %v5444, %v5453
      %v5500 = vmul.f32 %v5445, %v5453
      %v5501 = vmul.f32 %v5446, %v5453
      %v5502 = vmul.f32 %v5447, %v5453
      %v5503 = vld [vmem:[%s362] sm:$0x1]
      %v5505 = vlaneseq
      %v5506 = vshrl.u32 %v5505, 7
      %v5507 = vsub.s32 0, %v5506
      %v5508 = vrot.slane %v5503, %v5507
      %v5510 = vadd.f32 %v5455, %v5508
      %v5511 = vadd.f32 %v5456, %v5508
      %v5512 = vadd.f32 %v5457, %v5508
      %v5513 = vadd.f32 %v5458, %v5508
      %v5514 = vadd.f32 %v5459, %v5508
      %v5515 = vadd.f32 %v5460, %v5508
      %v5516 = vadd.f32 %v5461, %v5508
      %v5517 = vadd.f32 %v5462, %v5508
      %v5518 = vadd.f32 %v5463, %v5508
      %v5519 = vadd.f32 %v5464, %v5508
      %v5520 = vadd.f32 %v5465, %v5508
      %v5521 = vadd.f32 %v5466, %v5508
      %v5522 = vadd.f32 %v5467, %v5508
      %v5523 = vadd.f32 %v5468, %v5508
      %v5524 = vadd.f32 %v5469, %v5508
      %v5525 = vadd.f32 %v5470, %v5508
      %v5526 = vadd.f32 %v5471, %v5508
      %v5527 = vadd.f32 %v5472, %v5508
      %v5528 = vadd.f32 %v5473, %v5508
      %v5529 = vadd.f32 %v5474, %v5508
      %v5530 = vadd.f32 %v5475, %v5508
      %v5531 = vadd.f32 %v5476, %v5508
      %v5532 = vadd.f32 %v5477, %v5508
      %v5533 = vadd.f32 %v5478, %v5508
      %v5534 = vadd.f32 %v5479, %v5508
      %v5535 = vadd.f32 %v5480, %v5508
      %v5536 = vadd.f32 %v5481, %v5508
      %v5537 = vadd.f32 %v5482, %v5508
      %v5538 = vadd.f32 %v5483, %v5508
      %v5539 = vadd.f32 %v5484, %v5508
      %v5540 = vadd.f32 %v5485, %v5508
      %v5541 = vadd.f32 %v5486, %v5508
      %v5542 = vadd.f32 %v5487, %v5508
      %v5543 = vadd.f32 %v5488, %v5508
      %v5544 = vadd.f32 %v5489, %v5508
      %v5545 = vadd.f32 %v5490, %v5508
      %v5546 = vadd.f32 %v5491, %v5508
      %v5547 = vadd.f32 %v5492, %v5508
      %v5548 = vadd.f32 %v5493, %v5508
      %v5549 = vadd.f32 %v5494, %v5508
      %v5550 = vadd.f32 %v5495, %v5508
      %v5551 = vadd.f32 %v5496, %v5508
      %v5552 = vadd.f32 %v5497, %v5508
      %v5553 = vadd.f32 %v5498, %v5508
      %v5554 = vadd.f32 %v5499, %v5508
      %v5555 = vadd.f32 %v5500, %v5508
      %v5556 = vadd.f32 %v5501, %v5508
      %v5557 = vadd.f32 %v5502, %v5508
      %5558 = vst [vmem:[%s370] sm:$0xff] %v5510
      %5559 = vst [vmem:[%s370 + $0x8] sm:$0xff] %v5511
      %5560 = vst [vmem:[%s370 + $0x10] sm:$0xff] %v5512
      %5561 = vst [vmem:[%s370 + $0x18] sm:$0xff] %v5513
      %5562 = vst [vmem:[%s370 + $0x20] sm:$0xff] %v5514
      %5563 = vst [vmem:[%s370 + $0x28] sm:$0xff] %v5515
      %5564 = vst [vmem:[%s370 + $0x30] sm:$0xff] %v5516
      %5565 = vst [vmem:[%s370 + $0x38] sm:$0xff] %v5517
      %5566 = vst [vmem:[%s370 + $0x40] sm:$0xff] %v5518
      %5567 = vst [vmem:[%s370 + $0x48] sm:$0xff] %v5519
      %5568 = vst [vmem:[%s370 + $0x50] sm:$0xff] %v5520
      %5569 = vst [vmem:[%s370 + $0x58] sm:$0xff] %v5521
      %5570 = vst [vmem:[%s370 + $0x60] sm:$0xff] %v5522
      %5571 = vst [vmem:[%s370 + $0x68] sm:$0xff] %v5523
      %5572 = vst [vmem:[%s370 + $0x70] sm:$0xff] %v5524
      %5573 = vst [vmem:[%s370 + $0x78] sm:$0xff] %v5525
      %5574 = vst [vmem:[%s370 + $0x80] sm:$0xff] %v5526
      %5575 = vst [vmem:[%s370 + $0x88] sm:$0xff] %v5527
      %5576 = vst [vmem:[%s370 + $0x90] sm:$0xff] %v5528
      %5577 = vst [vmem:[%s370 + $0x98] sm:$0xff] %v5529
      %5578 = vst [vmem:[%s370 + $0xa0] sm:$0xff] %v5530
      %5579 = vst [vmem:[%s370 + $0xa8] sm:$0xff] %v5531
      %5580 = vst [vmem:[%s370 + $0xb0] sm:$0xff] %v5532
      %5581 = vst [vmem:[%s370 + $0xb8] sm:$0xff] %v5533
      %5582 = vst [vmem:[%s370 + $0xc0] sm:$0xff] %v5534
      %5583 = vst [vmem:[%s370 + $0xc8] sm:$0xff] %v5535
      %5584 = vst [vmem:[%s370 + $0xd0] sm:$0xff] %v5536
      %5585 = vst [vmem:[%s370 + $0xd8] sm:$0xff] %v5537
      %5586 = vst [vmem:[%s370 + $0xe0] sm:$0xff] %v5538
      %5587 = vst [vmem:[%s370 + $0xe8] sm:$0xff] %v5539
      %5588 = vst [vmem:[%s370 + $0xf0] sm:$0xff] %v5540
      %5589 = vst [vmem:[%s370 + $0xf8] sm:$0xff] %v5541
      %5590 = vst [vmem:[%s370 + $0x100] sm:$0xff] %v5542
      %5591 = vst [vmem:[%s370 + $0x108] sm:$0xff] %v5543
      %5592 = vst [vmem:[%s370 + $0x110] sm:$0xff] %v5544
      %5593 = vst [vmem:[%s370 + $0x118] sm:$0xff] %v5545
      %5594 = vst [vmem:[%s370 + $0x120] sm:$0xff] %v5546
      %5595 = vst [vmem:[%s370 + $0x128] sm:$0xff] %v5547
      %5596 = vst [vmem:[%s370 + $0x130] sm:$0xff] %v5548
      %5597 = vst [vmem:[%s370 + $0x138] sm:$0xff] %v5549
      %5598 = vst [vmem:[%s370 + $0x140] sm:$0xff] %v5550
      %5599 = vst [vmem:[%s370 + $0x148] sm:$0xff] %v5551
      %5600 = vst [vmem:[%s370 + $0x150] sm:$0xff] %v5552
      %5601 = vst [vmem:[%s370 + $0x158] sm:$0xff] %v5553
      %5602 = vst [vmem:[%s370 + $0x160] sm:$0xff] %v5554
      %5603 = vst [vmem:[%s370 + $0x168] sm:$0xff] %v5555
      %5604 = vst [vmem:[%s370 + $0x170] sm:$0xff] %v5556
      %5605 = vst [vmem:[%s370 + $0x178] sm:$0xff] %v5557
      %p5606 = scmp.lt.s32.totalorder %s23, 1
      %s5607 = scalar_select %p5606, %s23, 1
      %p5608 = scmp.lt.s32.totalorder %s24, 0
      %s5609 = scalar_select %p5608, %s24, 0
      %s5610 = smul.addr %s5607, 48
      %s5611 = sadd.s32 %s5609, %s5610
      %s5612 = smul.addr %s5611, 8
      %s5613 = scalar_lea.vmem %s8, %s5612
      // Predicated region
      $region53: #{encoder2d_forward.1} parent=51 // pred_check
        %p5614 = pneg %p239
      $region54: #{encoder2d_forward.1} parent=51 // pred_check_branch
        %5616 = sbr.rel (%p5614) target = $region56
      $region55: #{encoder2d_forward.1} parent=51 // pred_region
        _
      $region56: #{encoder2d_forward.1} parent=51 // pred_fallthru
        _
    $region52: #{encoder2d_forward.1} parent=5 // pred_fallthru
      _
    %p5617 = scmp.le.s32.totalorder 2, %s14
    // Predicated region
    $region57: #{encoder2d_forward.1} parent=5 // pred_check
      %p5618 = pneg %p5617
    $region58: #{encoder2d_forward.1} parent=5 // pred_check_branch
      %5620 = sbr.rel (%p5618) target = $region60
    $region59: #{encoder2d_forward.1} parent=5 // pred_region
      %s5621 = ssub.s32 %s14, 2
      // Predicated region
      $region61: #{encoder2d_forward.1} parent=59 // pred_check
        %p5622 = pneg %p245
      $region62: #{encoder2d_forward.1} parent=59 // pred_check_branch
        %5624 = sbr.rel (%p5622) target = $region64
      $region63: #{encoder2d_forward.1} parent=59 // pred_region
        %p5625 = scmp.lt.s32.totalorder %s25, 1
        %s5626 = scalar_select %p5625, %s25, 1
        %p5627 = scmp.lt.s32.totalorder %s26, 0
        %s5628 = scalar_select %p5627, %s26, 0
        %s5629 = smul.addr %s5626, 48
        %s5630 = sadd.s32 %s5628, %s5629
        %s5631 = smul.addr %s5630, 8
        %s5632 = scalar_lea.vmem %s8, %s5631
      $region64: #{encoder2d_forward.1} parent=59 // pred_fallthru
        _
    $region60: #{encoder2d_forward.1} parent=5 // pred_fallthru
      _
  $region6: #{encoder2d_forward.1} parent=0 // loop_footer
    %s18 = sadd.s32 1, %s14
  $region7: #{encoder2d_forward.1} parent=0 // loop_footer_branch
    %13 = sbr.rel target = $region3
  $region8: #{encoder2d_forward.1} parent=0 // loop_exit
    _

</llo_original>
